<compile_context>
chip_gen: v7x
topology: tpu7x:2x2x1
jax: 0.10.0
libtpu: 0.0.40
codegen_flags: <defaults>
</compile_context>

<pallas_src>
import functools

import jax
import jax.numpy as jnp
from jax.experimental import pallas as pl
from jax.experimental.pallas import tpu as pltpu

_HIGHEST = jax.lax.Precision.HIGHEST
_VMEM_BUDGET = 20 * 1024 * 1024      # estimated working set per grid step
_VMEM_LIMIT = 48 * 1024 * 1024       # scoped VMEM limit (< v7x 64 MiB/core)
_TARGET_IN_BYTES = 4 * 1024 * 1024   # per-step input slab (step overhead <~10%)


def _round_up(v, m):
    return -(-v // m) * m


def _cdiv(a, b):
    return -(-a // b)


def _choose_bn(n, per_row_vmem, per_row_in):
    """Rows of N per grid step, using the (8,128)-padded VMEM footprint."""
    if n <= 8:
        return 8
    bn = min(_VMEM_BUDGET // per_row_vmem, _TARGET_IN_BYTES // per_row_in)
    bn = max(8, (int(bn) // 8) * 8)
    bn = min(bn, _round_up(n, 8))
    steps = _cdiv(n, bn)
    if steps == 1 and n >= 16:
        # >= 2 grid steps so both v7x TensorCores get work.
        bn = max(8, _round_up(_cdiv(n, 2), 8))
        steps = _cdiv(n, bn)
    if steps > 2 and steps % 2 == 1:
        # Keep the step count even for a balanced 2-TensorCore split.
        bn = max(8, _round_up(_cdiv(n, steps + 1), 8))
    return bn


def _caw_kernel_flat(x_ref, s_ref, r_ref, w1t_ref, w2t_ref, out_ref, attn_ref,
                     *, inv_t):
    # x_ref: (BN, F) lane-dense with F = L*T; s_ref: (F, L) segment-sum matrix;
    # r_ref: (L, F) replication matrix; w1t: (L, H); w2t: (H, L).
    x = x_ref[...].astype(jnp.float32)                                    # (BN, F)

    # Two-pass variance statistic per length-T segment, via MXU matmuls.
    mean = inv_t * jnp.dot(x, s_ref[...], precision=_HIGHEST,
                           preferred_element_type=jnp.float32)            # (BN, L)
    d = x - jnp.dot(mean, r_ref[...], precision=_HIGHEST,
                    preferred_element_type=jnp.float32)                   # (BN, F)
    ssq = jnp.dot(d * d, s_ref[...], precision=_HIGHEST,
                  preferred_element_type=jnp.float32)                     # (BN, L)

    # F.normalize(p=2, dim=-1, eps=1e-12) across L, per N row.
    nrm = jnp.sqrt(jnp.sum(ssq * ssq, axis=-1, keepdims=True))            # (BN, 1)
    v = ssq / jnp.maximum(nrm, 1e-12)

    # fc: Linear(L->H, no bias) -> ELU -> Linear(H->L, no bias) -> Sigmoid.
    h = jnp.dot(v, w1t_ref[...], precision=_HIGHEST,
                preferred_element_type=jnp.float32)                       # (BN, H)
    h = jnp.where(h > 0, h, jnp.exp(jnp.minimum(h, 0.0)) - 1.0)           # ELU(1)
    a = jax.nn.sigmoid(jnp.dot(h, w2t_ref[...], precision=_HIGHEST,
                               preferred_element_type=jnp.float32))       # (BN, L)
    attn_ref[...] = a.astype(attn_ref.dtype)

    # Expand attn over T (replication matmul) and apply; x is re-read in its
    # native dtype so the f32 stats copy is not live through the epilogue.
    a_full = jnp.dot(a, r_ref[...], precision=_HIGHEST,
                     preferred_element_type=jnp.float32)                  # (BN, F)
    xn = x_ref[...]
    out_ref[...] = (xn * a_full.astype(xn.dtype)).astype(out_ref.dtype)


def _caw_kernel_3d(x_ref, w1t_ref, w2t_ref, out_ref, attn_ref, *, inv_t):
    # Fallback path for T >= 128 (lane axis already dense).  x_ref: (BN, L, T).
    x = x_ref[...].astype(jnp.float32)
    mean = jnp.sum(x, axis=-1, keepdims=True) * inv_t                     # (BN, L, 1)
    d = x - mean
    ssq = jnp.sum(d * d, axis=-1)                                         # (BN, L)
    nrm = jnp.sqrt(jnp.sum(ssq * ssq, axis=-1, keepdims=True))
    v = ssq / jnp.maximum(nrm, 1e-12)
    h = jnp.dot(v, w1t_ref[...], precision=_HIGHEST,
                preferred_element_type=jnp.float32)
    h = jnp.where(h > 0, h, jnp.exp(jnp.minimum(h, 0.0)) - 1.0)
    a = jax.nn.sigmoid(jnp.dot(h, w2t_ref[...], precision=_HIGHEST,
                               preferred_element_type=jnp.float32))
    attn_ref[...] = a.astype(attn_ref.dtype)
    xn = x_ref[...]
    out_ref[...] = (xn * a[:, :, None].astype(xn.dtype)).astype(out_ref.dtype)


def caw_pallas(x, w1, w2):
    """CAW forward.  x: (B, C, T) or (B, C, S, T); w1: (H, L); w2: (L, H) with
    L == C (3-D input) or L == S (4-D input).  Returns (out, attn)."""
    orig_shape = x.shape
    if x.ndim == 3:
        b, c, t = x.shape
        n, l = b, c
        attn_shape = (b, c, 1)
    elif x.ndim == 4:
        b, c, s, t = x.shape
        n, l = b * c, s
        attn_shape = (b, c, s, 1)
    else:
        raise ValueError("CAW expects a 3-D or 4-D input")

    hid = w1.shape[0]
    assert w1.shape == (hid, l) and w2.shape == (l, hid), "fc channel mismatch"

    isz = jnp.dtype(x.dtype).itemsize
    w1t = w1.T.astype(jnp.float32)   # (L, H)
    w2t = w2.T.astype(jnp.float32)   # (H, L)
    inv_t = float(1.0 / t)

    f = l * t
    # Flat, lane-dense path when T would under-fill the 128 lanes and the
    # constant (F, L) segment-sum matrix stays small.
    use_flat = (t < 128) and (
        _round_up(f, 128) * _round_up(l, 128) * 4 <= 4 * 1024 * 1024)

    # Tiny-N inputs: pad to one full 8-row block (negligible cost).
    n_rows = n if n >= 8 else 8

    params = pltpu.CompilerParams(
        dimension_semantics=("parallel",),
        vmem_limit_bytes=_VMEM_LIMIT,
    )

    if use_flat:
        xr = x.reshape(n, f)                         # contiguous reshape, no copy
        if n_rows != n:
            xr = jnp.pad(xr, ((0, n_rows - n), (0, 0)))
        fp = _round_up(f, 128)
        lp = _round_up(l, 128)
        per_row_in = fp * isz
        # x in + out (double-buffered), attn out, plus f32 compute temporaries.
        per_row_vmem = 4 * per_row_in + 2 * lp * isz + 3 * fp * 4
        bn = _choose_bn(n_rows, per_row_vmem, per_row_in)
        grid = (_cdiv(n_rows, bn),)

        seg = jnp.arange(f, dtype=jnp.int32) // t
        smat = (seg[:, None] == jnp.arange(l, dtype=jnp.int32)[None, :]
                ).astype(jnp.float32)                # (F, L) segment-sum
        rmat = smat.T                                # (L, F) replication

        out, attn = pl.pallas_call(
            functools.partial(_caw_kernel_flat, inv_t=inv_t),
            out_shape=(
                jax.ShapeDtypeStruct((n_rows, f), x.dtype),
                jax.ShapeDtypeStruct((n_rows, l), x.dtype),
            ),
            grid_spec=pltpu.PrefetchScalarGridSpec(
                num_scalar_prefetch=0,
                grid=grid,
                in_specs=[
                    pl.BlockSpec((bn, f), lambda i: (i, 0)),
                    pl.BlockSpec((f, l), lambda i: (0, 0)),
                    pl.BlockSpec((l, f), lambda i: (0, 0)),
                    pl.BlockSpec((l, hid), lambda i: (0, 0)),
                    pl.BlockSpec((hid, l), lambda i: (0, 0)),
                ],
                out_specs=[
                    pl.BlockSpec((bn, f), lambda i: (i, 0)),
                    pl.BlockSpec((bn, l), lambda i: (i, 0)),
                ],
            ),
            compiler_params=params,
        )(xr, smat, rmat, w1t, w2t)
    else:
        xr = x.reshape(n, l, t)
        if n_rows != n:
            xr = jnp.pad(xr, ((0, n_rows - n), (0, 0), (0, 0)))
        per_row_in = _round_up(l, 8) * _round_up(t, 128) * isz
        per_row_vmem = (4 * per_row_in + 2 * _round_up(l, 128) * isz
                        + 3 * _round_up(l, 8) * _round_up(t, 128) * 4)
        bn = _choose_bn(n_rows, per_row_vmem, per_row_in)
        grid = (_cdiv(n_rows, bn),)

        out, attn = pl.pallas_call(
            functools.partial(_caw_kernel_3d, inv_t=inv_t),
            out_shape=(
                jax.ShapeDtypeStruct((n_rows, l, t), x.dtype),
                jax.ShapeDtypeStruct((n_rows, l), x.dtype),
            ),
            grid_spec=pltpu.PrefetchScalarGridSpec(
                num_scalar_prefetch=0,
                grid=grid,
                in_specs=[
                    pl.BlockSpec((bn, l, t), lambda i: (i, 0, 0)),
                    pl.BlockSpec((l, hid), lambda i: (0, 0)),
                    pl.BlockSpec((hid, l), lambda i: (0, 0)),
                ],
                out_specs=[
                    pl.BlockSpec((bn, l, t), lambda i: (i, 0, 0)),
                    pl.BlockSpec((bn, l), lambda i: (i, 0)),
                ],
            ),
            compiler_params=params,
        )(xr, w1t, w2t)

    if n_rows != n:
        out = out[:n]
        attn = attn[:n]
    out = out.reshape(orig_shape)
    attn = attn.reshape(attn_shape)
    return out, attn


def caw_ref(x, w1, w2):
    """Pure-JAX reference mirroring the PyTorch forward (full-f32 matmuls)."""
    mean = x.mean(-1, keepdims=True)
    ssq = ((x - mean) ** 2).sum(-1)
    nrm = jnp.sqrt((ssq ** 2).sum(-1, keepdims=True))
    v = ssq / jnp.maximum(nrm, 1e-12)
    h = jnp.matmul(v, w1.T, precision=_HIGHEST)
    h = jnp.where(h > 0, h, jnp.exp(jnp.minimum(h, 0.0)) - 1.0)
    a = jax.nn.sigmoid(jnp.matmul(h, w2.T, precision=_HIGHEST))
    attn = a[..., None]
    return x * attn, attn


if __name__ == "__main__":
    key = jax.random.PRNGKey(0)
    kx, k1, k2, kx3 = jax.random.split(key, 4)

    # 4-D case: x is (b, c, s, t); the fc feature size (`channel`) equals s.
    b, c, s, t = 2, 4, 16, 16
    channel, reduction = s, 2
    hidden = channel // reduction

    x = jax.random.normal(kx, (b, c, s, t), dtype=jnp.float32)
    lim1 = 1.0 / (channel ** 0.5)
    w1 = jax.random.uniform(k1, (hidden, channel), dtype=jnp.float32,
                            minval=-lim1, maxval=lim1)
    lim2 = 1.0 / (hidden ** 0.5)
    w2 = jax.random.uniform(k2, (channel, hidden), dtype=jnp.float32,
                            minval=-lim2, maxval=lim2)

    out, attn = caw_pallas(x, w1, w2)
    out = jax.block_until_ready(out)
    attn = jax.block_until_ready(attn)

    out_r, attn_r = caw_ref(x, w1, w2)
    assert out.shape == x.shape and attn.shape == (b, c, s, 1)
    assert jnp.allclose(out, out_r, atol=2e-5, rtol=2e-5)
    assert jnp.allclose(attn, attn_r, atol=2e-5, rtol=2e-5)

    # 3-D case: x is (b, c, t); the fc feature size equals c (== channel).
    x3 = jax.random.normal(kx3, (b, channel, 32), dtype=jnp.float32)
    out3, attn3 = caw_pallas(x3, w1, w2)
    out3 = jax.block_until_ready(out3)
    attn3 = jax.block_until_ready(attn3)

    out3_r, attn3_r = caw_ref(x3, w1, w2)
    assert out3.shape == x3.shape and attn3.shape == (b, channel, 1)
    assert jnp.allclose(out3, out3_r, atol=2e-5, rtol=2e-5)
    assert jnp.allclose(attn3, attn3_r, atol=2e-5, rtol=2e-5)

    print("KERNEL_OK")
</pallas_src>

<mosaic_0001>
module attributes {stable_mosaic.version = 11 : i64} {
  func.func @_caw_kernel_flat(%arg0: i32, %arg1: memref<8x256xf32, #tpu.memory_space<vmem>>, %arg2: memref<256x16xf32, #tpu.memory_space<vmem>>, %arg3: memref<16x256xf32, #tpu.memory_space<vmem>>, %arg4: memref<16x8xf32, #tpu.memory_space<vmem>>, %arg5: memref<8x16xf32, #tpu.memory_space<vmem>>, %arg6: memref<8x256xf32, #tpu.memory_space<vmem>>, %arg7: memref<8x16xf32, #tpu.memory_space<vmem>>) attributes {dimension_semantics = [#tpu.dimension_semantics<parallel>], iteration_bounds = array<i64: 1>, scalar_prefetch = 0 : i64, scratch_operands = 0 : i64, tpu.core_type = #tpu.core_type<tc>, window_params = [{transform_indices = @transform_0, window_bounds = array<i64: 8, 256>}, {pipeline_mode = #tpu.pipeline_mode<synchronous>, transform_indices = @transform_1, window_bounds = array<i64: 256, 16>}, {pipeline_mode = #tpu.pipeline_mode<synchronous>, transform_indices = @transform_2, window_bounds = array<i64: 16, 256>}, {pipeline_mode = #tpu.pipeline_mode<synchronous>, transform_indices = @transform_3, window_bounds = array<i64: 16, 8>}, {pipeline_mode = #tpu.pipeline_mode<synchronous>, transform_indices = @transform_4, window_bounds = array<i64: 8, 16>}, {transform_indices = @transform_5, window_bounds = array<i64: 8, 256>}, {transform_indices = @transform_6, window_bounds = array<i64: 8, 16>}]} {
    %c0 = arith.constant 0 : index
    %c0_0 = arith.constant 0 : index
    %0 = vector.load %arg1[%c0, %c0_0] : memref<8x256xf32, #tpu.memory_space<vmem>>, vector<8x256xf32>
    %c0_1 = arith.constant 0 : index
    %c0_2 = arith.constant 0 : index
    %1 = vector.load %arg2[%c0_1, %c0_2] : memref<256x16xf32, #tpu.memory_space<vmem>>, vector<256x16xf32>
    %cst = arith.constant dense<0.000000e+00> : vector<8x16xf32>
    %2 = tpu.matmul %0, %1, %cst {dimension_numbers = #tpu.dot_dimension_numbers<[1], [0], [0], [1], [0, 0, 1, 1], [], []>, precision = #tpu.contract_precision<fp32>} : vector<8x256xf32>, vector<256x16xf32>, vector<8x16xf32> -> vector<8x16xf32>
    %cst_3 = arith.constant 6.250000e-02 : f32
    %3 = vector.broadcast %cst_3 : f32 to vector<8x16xf32>
    %4 = arith.mulf %3, %2 : vector<8x16xf32>
    %c0_4 = arith.constant 0 : index
    %c0_5 = arith.constant 0 : index
    %5 = vector.load %arg3[%c0_4, %c0_5] : memref<16x256xf32, #tpu.memory_space<vmem>>, vector<16x256xf32>
    %cst_6 = arith.constant dense<0.000000e+00> : vector<8x256xf32>
    %6 = tpu.matmul %4, %5, %cst_6 {dimension_numbers = #tpu.dot_dimension_numbers<[1], [0], [0], [1], [0, 0, 1, 1], [], []>, precision = #tpu.contract_precision<fp32>} : vector<8x16xf32>, vector<16x256xf32>, vector<8x256xf32> -> vector<8x256xf32>
    %7 = arith.subf %0, %6 : vector<8x256xf32>
    %8 = arith.mulf %7, %7 : vector<8x256xf32>
    %c0_7 = arith.constant 0 : index
    %c0_8 = arith.constant 0 : index
    %9 = vector.load %arg2[%c0_7, %c0_8] : memref<256x16xf32, #tpu.memory_space<vmem>>, vector<256x16xf32>
    %cst_9 = arith.constant dense<0.000000e+00> : vector<8x16xf32>
    %10 = tpu.matmul %8, %9, %cst_9 {dimension_numbers = #tpu.dot_dimension_numbers<[1], [0], [0], [1], [0, 0, 1, 1], [], []>, precision = #tpu.contract_precision<fp32>} : vector<8x256xf32>, vector<256x16xf32>, vector<8x16xf32> -> vector<8x16xf32>
    %11 = arith.mulf %10, %10 : vector<8x16xf32>
    %cst_10 = arith.constant dense<0.000000e+00> : vector<8xf32>
    %12 = vector.multi_reduction <add>, %11, %cst_10 [1] : vector<8x16xf32> to vector<8xf32>
    %13 = vector.shape_cast %12 : vector<8xf32> to vector<8x1xf32>
    %14 = math.sqrt %13 : vector<8x1xf32>
    %cst_11 = arith.constant 9.99999996E-13 : f32
    %15 = vector.broadcast %cst_11 : f32 to vector<8x1xf32>
    %16 = arith.maximumf %14, %15 : vector<8x1xf32>
    %17 = vector.broadcast %16 : vector<8x1xf32> to vector<8x16xf32>
    %18 = arith.divf %10, %17 : vector<8x16xf32>
    %c0_12 = arith.constant 0 : index
    %c0_13 = arith.constant 0 : index
    %19 = vector.load %arg4[%c0_12, %c0_13] : memref<16x8xf32, #tpu.memory_space<vmem>>, vector<16x8xf32>
    %cst_14 = arith.constant dense<0.000000e+00> : vector<8x8xf32>
    %20 = tpu.matmul %18, %19, %cst_14 {dimension_numbers = #tpu.dot_dimension_numbers<[1], [0], [0], [1], [0, 0, 1, 1], [], []>, precision = #tpu.contract_precision<fp32>} : vector<8x16xf32>, vector<16x8xf32>, vector<8x8xf32> -> vector<8x8xf32>
    %cst_15 = arith.constant 0.000000e+00 : f32
    %21 = vector.broadcast %cst_15 : f32 to vector<8x8xf32>
    %22 = arith.cmpf ogt, %20, %21 : vector<8x8xf32>
    %cst_16 = arith.constant 0.000000e+00 : f32
    %23 = vector.broadcast %cst_16 : f32 to vector<8x8xf32>
    %24 = arith.minimumf %20, %23 : vector<8x8xf32>
    %25 = math.exp %24 : vector<8x8xf32>
    %cst_17 = arith.constant 1.000000e+00 : f32
    %26 = vector.broadcast %cst_17 : f32 to vector<8x8xf32>
    %27 = arith.subf %25, %26 : vector<8x8xf32>
    %28 = arith.select %22, %20, %27 : vector<8x8xi1>, vector<8x8xf32>
    %c0_18 = arith.constant 0 : index
    %c0_19 = arith.constant 0 : index
    %29 = vector.load %arg5[%c0_18, %c0_19] : memref<8x16xf32, #tpu.memory_space<vmem>>, vector<8x16xf32>
    %cst_20 = arith.constant dense<0.000000e+00> : vector<8x16xf32>
    %30 = tpu.matmul %28, %29, %cst_20 {dimension_numbers = #tpu.dot_dimension_numbers<[1], [0], [0], [1], [0, 0, 1, 1], [], []>, precision = #tpu.contract_precision<fp32>} : vector<8x8xf32>, vector<8x16xf32>, vector<8x16xf32> -> vector<8x16xf32>
    %31 = arith.negf %30 : vector<8x16xf32>
    %32 = math.exp %31 : vector<8x16xf32>
    %cst_21 = arith.constant 1.000000e+00 : f32
    %33 = vector.broadcast %cst_21 : f32 to vector<8x16xf32>
    %34 = arith.addf %33, %32 : vector<8x16xf32>
    %35 = arith.divf %33, %34 : vector<8x16xf32>
    %c0_22 = arith.constant 0 : index
    %c0_23 = arith.constant 0 : index
    %36 = vector.load %arg7[%c0_22, %c0_23] : memref<8x16xf32, #tpu.memory_space<vmem>>, vector<8x16xf32>
    tpu.vector_store %arg7[%c0_22, %c0_23], %35 {strides = array<i32>} : memref<8x16xf32, #tpu.memory_space<vmem>>, vector<8x16xf32>,
    %c0_24 = arith.constant 0 : index
    %c0_25 = arith.constant 0 : index
    %37 = vector.load %arg3[%c0_24, %c0_25] : memref<16x256xf32, #tpu.memory_space<vmem>>, vector<16x256xf32>
    %cst_26 = arith.constant dense<0.000000e+00> : vector<8x256xf32>
    %38 = tpu.matmul %35, %37, %cst_26 {dimension_numbers = #tpu.dot_dimension_numbers<[1], [0], [0], [1], [0, 0, 1, 1], [], []>, precision = #tpu.contract_precision<fp32>} : vector<8x16xf32>, vector<16x256xf32>, vector<8x256xf32> -> vector<8x256xf32>
    %c0_27 = arith.constant 0 : index
    %c0_28 = arith.constant 0 : index
    %39 = vector.load %arg1[%c0_27, %c0_28] : memref<8x256xf32, #tpu.memory_space<vmem>>, vector<8x256xf32>
    %40 = arith.mulf %39, %38 : vector<8x256xf32>
    %c0_29 = arith.constant 0 : index
    %c0_30 = arith.constant 0 : index
    %41 = vector.load %arg6[%c0_29, %c0_30] : memref<8x256xf32, #tpu.memory_space<vmem>>, vector<8x256xf32>
    tpu.vector_store %arg6[%c0_29, %c0_30], %40 {strides = array<i32>} : memref<8x256xf32, #tpu.memory_space<vmem>>, vector<8x256xf32>,
    return
  }
  func.func @transform_0(%arg0: i32) -> (i32, i32) {
    %c0_i32 = arith.constant 0 : i32
    %c0_i32_0 = arith.constant 0 : i32
    return %arg0, %c0_i32 : i32, i32
  }
  func.func @transform_1(%arg0: i32) -> (i32, i32) {
    %c0_i32 = arith.constant 0 : i32
    %c0_i32_0 = arith.constant 0 : i32
    %c0_i32_1 = arith.constant 0 : i32
    return %c0_i32, %c0_i32_0 : i32, i32
  }
  func.func @transform_2(%arg0: i32) -> (i32, i32) {
    %c0_i32 = arith.constant 0 : i32
    %c0_i32_0 = arith.constant 0 : i32
    %c0_i32_1 = arith.constant 0 : i32
    return %c0_i32, %c0_i32_0 : i32, i32
  }
  func.func @transform_3(%arg0: i32) -> (i32, i32) {
    %c0_i32 = arith.constant 0 : i32
    %c0_i32_0 = arith.constant 0 : i32
    %c0_i32_1 = arith.constant 0 : i32
    return %c0_i32, %c0_i32_0 : i32, i32
  }
  func.func @transform_4(%arg0: i32) -> (i32, i32) {
    %c0_i32 = arith.constant 0 : i32
    %c0_i32_0 = arith.constant 0 : i32
    %c0_i32_1 = arith.constant 0 : i32
    return %c0_i32, %c0_i32_0 : i32, i32
  }
  func.func @transform_5(%arg0: i32) -> (i32, i32) {
    %c0_i32 = arith.constant 0 : i32
    %c0_i32_0 = arith.constant 0 : i32
    return %arg0, %c0_i32 : i32, i32
  }
  func.func @transform_6(%arg0: i32) -> (i32, i32) {
    %c0_i32 = arith.constant 0 : i32
    %c0_i32_0 = arith.constant 0 : i32
    return %arg0, %c0_i32 : i32, i32
  }
}

</mosaic_0001>

<llo_original>
// kernel: tpu_custom_call.1
$region0: #{tpu_custom_call.1}
  #allocation0 [shape = 'u32[]', space=smem, size = 0x4, offset = 0x4, fixed_abs, tag = 'smem constant byte address 0x4 - core index']
  #allocation1 [shape = 'u32[144,128]{1,0:T(1,128)}', space=vmem, size = 0x12000, scoped, tag = 'internal scratch']
  %s0 = inlined_call_operand.vmem [shape: f32[8,256], index: 0, kind: input, shape index: {}]
  %s1 = inlined_call_operand.vmem [shape: f32[256,16], index: 1, kind: input, shape index: {}]
  %s2 = inlined_call_operand.vmem [shape: f32[16,256], index: 2, kind: input, shape index: {}]
  %s3 = inlined_call_operand.vmem [shape: f32[16,8], index: 3, kind: input, shape index: {}]
  %s4 = inlined_call_operand.vmem [shape: f32[8,16], index: 4, kind: input, shape index: {}]
  %s5 = inlined_call_operand.hbm [shape: f32[8,256], index: 5, kind: output, shape index: {0}]
  %s6 = inlined_call_operand.hbm [shape: f32[8,16], index: 6, kind: output, shape index: {1}]
  %7 = xla_tuple %s5, %s6
  %s8 = sld [smem:[#allocation0]]
  $region38: #{tpu_custom_call.1} parent=0
    _
  %s10 = ssub.s32 1, %s8
  %s11 = scalar_select 0, %s10, %s8
  $region1: #{tpu_custom_call.1} parent=0
    #allocation2 [shape = 'u8[8192]{0}', space=vmem, size = 0x2000, scoped, tag = 'output window, operand 0, single buffered']
    #allocation3 [shape = 's32[1]{0}', space=sflag, size = 0x4, scoped, tag = 'scoped memory for tpu_custom_call.1']
    #allocation4 [shape = 'u8[4096]{0}', space=vmem, size = 0x1000, scoped, tag = 'output window, operand 1, single buffered']
    #allocation5 [shape = 's32[1]{0}', space=sflag, size = 0x4, scoped, tag = 'scoped memory for tpu_custom_call.1']
    %12 = vsyncpa [#allocation3], 0
    %13 = vsyncpa [#allocation5], 0
    // Predicated region
    $region2: #{tpu_custom_call.1} parent=1 // pred_check
      _
    $region3: #{tpu_custom_call.1} parent=1 // pred_check_branch
      %15 = sbr.rel (0) target = $region5
    $region4: #{tpu_custom_call.1} parent=1 // pred_region
      _
    $region5: #{tpu_custom_call.1} parent=1 // pred_fallthru
      _
    // Predicated region
    $region6: #{tpu_custom_call.1} parent=1 // pred_check
      _
    $region7: #{tpu_custom_call.1} parent=1 // pred_check_branch
      %17 = sbr.rel (0) target = $region9
    $region8: #{tpu_custom_call.1} parent=1 // pred_region
      _
    $region9: #{tpu_custom_call.1} parent=1 // pred_fallthru
      _
    // Predicated region
    $region10: #{tpu_custom_call.1} parent=1 // pred_check
      _
    $region11: #{tpu_custom_call.1} parent=1 // pred_check_branch
      %19 = sbr.rel (0) target = $region13
    $region12: #{tpu_custom_call.1} parent=1 // pred_region
      _
    $region13: #{tpu_custom_call.1} parent=1 // pred_fallthru
      _
    // Predicated region
    $region14: #{tpu_custom_call.1} parent=1 // pred_check
      _
    $region15: #{tpu_custom_call.1} parent=1 // pred_check_branch
      %21 = sbr.rel (0) target = $region17
    $region16: #{tpu_custom_call.1} parent=1 // pred_region
      _
    $region17: #{tpu_custom_call.1} parent=1 // pred_fallthru
      _
    // Predicated region
    $region18: #{tpu_custom_call.1} parent=1 // pred_check
      _
    $region19: #{tpu_custom_call.1} parent=1 // pred_check_branch
      %23 = sbr.rel (0) target = $region21
    $region20: #{tpu_custom_call.1} parent=1 // pred_region
      _
    $region21: #{tpu_custom_call.1} parent=1 // pred_fallthru
      _
    %v24 = vld [vmem:[%s0] sm:$0xff]
    %v25 = vld [vmem:[%s0 + $0x8] sm:$0xff]
    %v26 = vld [vmem:[%s1] sm:$0xff]
    %v27 = vld [vmem:[%s1 + $0x8] sm:$0xff]
    %v28 = vld [vmem:[%s1 + $0x10] sm:$0xff]
    %v29 = vld [vmem:[%s1 + $0x18] sm:$0xff]
    %v30 = vld [vmem:[%s1 + $0x20] sm:$0xff]
    %v31 = vld [vmem:[%s1 + $0x28] sm:$0xff]
    %v32 = vld [vmem:[%s1 + $0x30] sm:$0xff]
    %v33 = vld [vmem:[%s1 + $0x38] sm:$0xff]
    %v34 = vld [vmem:[%s1 + $0x40] sm:$0xff]
    %v35 = vld [vmem:[%s1 + $0x48] sm:$0xff]
    %v36 = vld [vmem:[%s1 + $0x50] sm:$0xff]
    %v37 = vld [vmem:[%s1 + $0x58] sm:$0xff]
    %v38 = vld [vmem:[%s1 + $0x60] sm:$0xff]
    %v39 = vld [vmem:[%s1 + $0x68] sm:$0xff]
    %v40 = vld [vmem:[%s1 + $0x70] sm:$0xff]
    %v41 = vld [vmem:[%s1 + $0x78] sm:$0xff]
    %v42 = vld [vmem:[%s1 + $0x80] sm:$0xff]
    %v43 = vld [vmem:[%s1 + $0x88] sm:$0xff]
    %v44 = vld [vmem:[%s1 + $0x90] sm:$0xff]
    %v45 = vld [vmem:[%s1 + $0x98] sm:$0xff]
    %v46 = vld [vmem:[%s1 + $0xa0] sm:$0xff]
    %v47 = vld [vmem:[%s1 + $0xa8] sm:$0xff]
    %v48 = vld [vmem:[%s1 + $0xb0] sm:$0xff]
    %v49 = vld [vmem:[%s1 + $0xb8] sm:$0xff]
    %v50 = vld [vmem:[%s1 + $0xc0] sm:$0xff]
    %v51 = vld [vmem:[%s1 + $0xc8] sm:$0xff]
    %v52 = vld [vmem:[%s1 + $0xd0] sm:$0xff]
    %v53 = vld [vmem:[%s1 + $0xd8] sm:$0xff]
    %v54 = vld [vmem:[%s1 + $0xe0] sm:$0xff]
    %v55 = vld [vmem:[%s1 + $0xe8] sm:$0xff]
    %v56 = vld [vmem:[%s1 + $0xf0] sm:$0xff]
    %v57 = vld [vmem:[%s1 + $0xf8] sm:$0xff]
    %58 = vmatprep.subr.mxu0 0.0
    %v59 = vand.u32 %v26, 4294901760
    %60 = vmatpush1.msra.mxu0 %v59
    %61 = vmatprep.subr.mxu0 0.0
    %v62 = vand.u32 %v27, 4294901760
    %63 = vmatpush1.msra.mxu0 %v62
    %64 = vmatprep.subr.mxu0 0.0
    %v65 = vand.u32 %v28, 4294901760
    %66 = vmatpush1.msra.mxu0 %v65
    %67 = vmatprep.subr.mxu0 0.0
    %v68 = vand.u32 %v29, 4294901760
    %69 = vmatpush1.msra.mxu0 %v68
    %70 = vmatprep.subr.mxu0 0.0
    %v71 = vand.u32 %v30, 4294901760
    %72 = vmatpush1.msra.mxu0 %v71
    %73 = vmatprep.subr.mxu0 0.0
    %v74 = vand.u32 %v31, 4294901760
    %75 = vmatpush1.msra.mxu0 %v74
    %76 = vmatprep.subr.mxu0 0.0
    %v77 = vand.u32 %v32, 4294901760
    %78 = vmatpush1.msra.mxu0 %v77
    %79 = vmatprep.subr.mxu0 0.0
    %v80 = vand.u32 %v33, 4294901760
    %81 = vmatpush1.msra.mxu0 %v80
    %82 = vmatprep.subr.mxu0 0.0
    %v83 = vand.u32 %v34, 4294901760
    %84 = vmatpush1.msra.mxu0 %v83
    %85 = vmatprep.subr.mxu0 0.0
    %v86 = vand.u32 %v35, 4294901760
    %87 = vmatpush1.msra.mxu0 %v86
    %88 = vmatprep.subr.mxu0 0.0
    %v89 = vand.u32 %v36, 4294901760
    %90 = vmatpush1.msra.mxu0 %v89
    %91 = vmatprep.subr.mxu0 0.0
    %v92 = vand.u32 %v37, 4294901760
    %93 = vmatpush1.msra.mxu0 %v92
    %94 = vmatprep.subr.mxu0 0.0
    %v95 = vand.u32 %v38, 4294901760
    %96 = vmatpush1.msra.mxu0 %v95
    %97 = vmatprep.subr.mxu0 0.0
    %v98 = vand.u32 %v39, 4294901760
    %99 = vmatpush1.msra.mxu0 %v98
    %100 = vmatprep.subr.mxu0 0.0
    %v101 = vand.u32 %v40, 4294901760
    %102 = vmatpush1.msra.mxu0 %v101
    %103 = vmatprep.subr.mxu0 0.0
    %v104 = vand.u32 %v41, 4294901760
    %105 = vmatpush1.msra.mxu0 %v104
    %106 = vmatprep.subr.mxu0 0.0
    %v107 = vand.u32 %v42, 4294901760
    %108 = vmatpush1.msra.mxu0 %v107
    %109 = vmatprep.subr.mxu0 0.0
    %v110 = vand.u32 %v43, 4294901760
    %111 = vmatpush1.msra.mxu0 %v110
    %112 = vmatprep.subr.mxu0 0.0
    %v113 = vand.u32 %v44, 4294901760
    %114 = vmatpush1.msra.mxu0 %v113
    %115 = vmatprep.subr.mxu0 0.0
    %v116 = vand.u32 %v45, 4294901760
    %117 = vmatpush1.msra.mxu0 %v116
    %118 = vmatprep.subr.mxu0 0.0
    %v119 = vand.u32 %v46, 4294901760
    %120 = vmatpush1.msra.mxu0 %v119
    %121 = vmatprep.subr.mxu0 0.0
    %v122 = vand.u32 %v47, 4294901760
    %123 = vmatpush1.msra.mxu0 %v122
    %124 = vmatprep.subr.mxu0 0.0
    %v125 = vand.u32 %v48, 4294901760
    %126 = vmatpush1.msra.mxu0 %v125
    %127 = vmatprep.subr.mxu0 0.0
    %v128 = vand.u32 %v49, 4294901760
    %129 = vmatpush1.msra.mxu0 %v128
    %130 = vmatprep.subr.mxu0 0.0
    %v131 = vand.u32 %v50, 4294901760
    %132 = vmatpush1.msra.mxu0 %v131
    %133 = vmatprep.subr.mxu0 0.0
    %v134 = vand.u32 %v51, 4294901760
    %135 = vmatpush1.msra.mxu0 %v134
    %136 = vmatprep.subr.mxu0 0.0
    %v137 = vand.u32 %v52, 4294901760
    %138 = vmatpush1.msra.mxu0 %v137
    %139 = vmatprep.subr.mxu0 0.0
    %v140 = vand.u32 %v53, 4294901760
    %141 = vmatpush1.msra.mxu0 %v140
    %142 = vmatprep.subr.mxu0 0.0
    %v143 = vand.u32 %v54, 4294901760
    %144 = vmatpush1.msra.mxu0 %v143
    %145 = vmatprep.subr.mxu0 0.0
    %v146 = vand.u32 %v55, 4294901760
    %147 = vmatpush1.msra.mxu0 %v146
    %148 = vmatprep.subr.mxu0 0.0
    %v149 = vand.u32 %v56, 4294901760
    %150 = vmatpush1.msra.mxu0 %v149
    %151 = vmatprep.subr.mxu0 0.0
    %v152 = vand.u32 %v57, 4294901760
    %153 = vmatpush1.msra.mxu0 %v152
    %v154 = vand.u32 %v25, 4294901760
    %v155 = vsub.f32 %v25, %v154
    %v156 = vand.u32 %v155, 4294901760
    %v157 = vsub.f32 %v155, %v156
    %v158 = vand.u32 %v157, 4294901760
    %159 = vmatprep.mubr.f32.mxu0 %v158
    %v160 = vand.u32 %v24, 4294901760
    %v161 = vsub.f32 %v24, %v160
    %v162 = vand.u32 %v161, 4294901760
    %v163 = vsub.f32 %v161, %v162
    %v164 = vand.u32 %v163, 4294901760
    %165 = vmatmul.mubr.f32.gmra.mrb[0].mxu0 %v164
    %v166 = vpop.f32.mrb[0].mxu0
    %v167 = vadd.f32 0.0, %v166
    %v168 = vpop.f32.mrb[0].mxu0
    %169 = vdwg.mxu0
    %170 = vmatprep.subr.mxu0 0.0
    %v171 = vand.u32 %v26, 4294901760
    %v172 = vsub.f32 %v26, %v171
    %v173 = vand.u32 %v172, 4294901760
    %v174 = vsub.f32 %v172, %v173
    %v175 = vand.u32 %v174, 4294901760
    %176 = vmatpush1.msra.mxu0 %v175
    %177 = vmatprep.subr.mxu0 0.0
    %v178 = vand.u32 %v27, 4294901760
    %v179 = vsub.f32 %v27, %v178
    %v180 = vand.u32 %v179, 4294901760
    %v181 = vsub.f32 %v179, %v180
    %v182 = vand.u32 %v181, 4294901760
    %183 = vmatpush1.msra.mxu0 %v182
    %184 = vmatprep.subr.mxu0 0.0
    %v185 = vand.u32 %v28, 4294901760
    %v186 = vsub.f32 %v28, %v185
    %v187 = vand.u32 %v186, 4294901760
    %v188 = vsub.f32 %v186, %v187
    %v189 = vand.u32 %v188, 4294901760
    %190 = vmatpush1.msra.mxu0 %v189
    %191 = vmatprep.subr.mxu0 0.0
    %v192 = vand.u32 %v29, 4294901760
    %v193 = vsub.f32 %v29, %v192
    %v194 = vand.u32 %v193, 4294901760
    %v195 = vsub.f32 %v193, %v194
    %v196 = vand.u32 %v195, 4294901760
    %197 = vmatpush1.msra.mxu0 %v196
    %198 = vmatprep.subr.mxu0 0.0
    %v199 = vand.u32 %v30, 4294901760
    %v200 = vsub.f32 %v30, %v199
    %v201 = vand.u32 %v200, 4294901760
    %v202 = vsub.f32 %v200, %v201
    %v203 = vand.u32 %v202, 4294901760
    %204 = vmatpush1.msra.mxu0 %v203
    %205 = vmatprep.subr.mxu0 0.0
    %v206 = vand.u32 %v31, 4294901760
    %v207 = vsub.f32 %v31, %v206
    %v208 = vand.u32 %v207, 4294901760
    %v209 = vsub.f32 %v207, %v208
    %v210 = vand.u32 %v209, 4294901760
    %211 = vmatpush1.msra.mxu0 %v210
    %212 = vmatprep.subr.mxu0 0.0
    %v213 = vand.u32 %v32, 4294901760
    %v214 = vsub.f32 %v32, %v213
    %v215 = vand.u32 %v214, 4294901760
    %v216 = vsub.f32 %v214, %v215
    %v217 = vand.u32 %v216, 4294901760
    %218 = vmatpush1.msra.mxu0 %v217
    %219 = vmatprep.subr.mxu0 0.0
    %v220 = vand.u32 %v33, 4294901760
    %v221 = vsub.f32 %v33, %v220
    %v222 = vand.u32 %v221, 4294901760
    %v223 = vsub.f32 %v221, %v222
    %v224 = vand.u32 %v223, 4294901760
    %225 = vmatpush1.msra.mxu0 %v224
    %226 = vmatprep.subr.mxu0 0.0
    %v227 = vand.u32 %v34, 4294901760
    %v228 = vsub.f32 %v34, %v227
    %v229 = vand.u32 %v228, 4294901760
    %v230 = vsub.f32 %v228, %v229
    %v231 = vand.u32 %v230, 4294901760
    %232 = vmatpush1.msra.mxu0 %v231
    %233 = vmatprep.subr.mxu0 0.0
    %v234 = vand.u32 %v35, 4294901760
    %v235 = vsub.f32 %v35, %v234
    %v236 = vand.u32 %v235, 4294901760
    %v237 = vsub.f32 %v235, %v236
    %v238 = vand.u32 %v237, 4294901760
    %239 = vmatpush1.msra.mxu0 %v238
    %240 = vmatprep.subr.mxu0 0.0
    %v241 = vand.u32 %v36, 4294901760
    %v242 = vsub.f32 %v36, %v241
    %v243 = vand.u32 %v242, 4294901760
    %v244 = vsub.f32 %v242, %v243
    %v245 = vand.u32 %v244, 4294901760
    %246 = vmatpush1.msra.mxu0 %v245
    %247 = vmatprep.subr.mxu0 0.0
    %v248 = vand.u32 %v37, 4294901760
    %v249 = vsub.f32 %v37, %v248
    %v250 = vand.u32 %v249, 4294901760
    %v251 = vsub.f32 %v249, %v250
    %v252 = vand.u32 %v251, 4294901760
    %253 = vmatpush1.msra.mxu0 %v252
    %254 = vmatprep.subr.mxu0 0.0
    %v255 = vand.u32 %v38, 4294901760
    %v256 = vsub.f32 %v38, %v255
    %v257 = vand.u32 %v256, 4294901760
    %v258 = vsub.f32 %v256, %v257
    %v259 = vand.u32 %v258, 4294901760
    %260 = vmatpush1.msra.mxu0 %v259
    %261 = vmatprep.subr.mxu0 0.0
    %v262 = vand.u32 %v39, 4294901760
    %v263 = vsub.f32 %v39, %v262
    %v264 = vand.u32 %v263, 4294901760
    %v265 = vsub.f32 %v263, %v264
    %v266 = vand.u32 %v265, 4294901760
    %267 = vmatpush1.msra.mxu0 %v266
    %268 = vmatprep.subr.mxu0 0.0
    %v269 = vand.u32 %v40, 4294901760
    %v270 = vsub.f32 %v40, %v269
    %v271 = vand.u32 %v270, 4294901760
    %v272 = vsub.f32 %v270, %v271
    %v273 = vand.u32 %v272, 4294901760
    %274 = vmatpush1.msra.mxu0 %v273
    %275 = vmatprep.subr.mxu0 0.0
    %v276 = vand.u32 %v41, 4294901760
    %v277 = vsub.f32 %v41, %v276
    %v278 = vand.u32 %v277, 4294901760
    %v279 = vsub.f32 %v277, %v278
    %v280 = vand.u32 %v279, 4294901760
    %281 = vmatpush1.msra.mxu0 %v280
    %282 = vmatprep.subr.mxu0 0.0
    %v283 = vand.u32 %v42, 4294901760
    %v284 = vsub.f32 %v42, %v283
    %v285 = vand.u32 %v284, 4294901760
    %v286 = vsub.f32 %v284, %v285
    %v287 = vand.u32 %v286, 4294901760
    %288 = vmatpush1.msra.mxu0 %v287
    %289 = vmatprep.subr.mxu0 0.0
    %v290 = vand.u32 %v43, 4294901760
    %v291 = vsub.f32 %v43, %v290
    %v292 = vand.u32 %v291, 4294901760
    %v293 = vsub.f32 %v291, %v292
    %v294 = vand.u32 %v293, 4294901760
    %295 = vmatpush1.msra.mxu0 %v294
    %296 = vmatprep.subr.mxu0 0.0
    %v297 = vand.u32 %v44, 4294901760
    %v298 = vsub.f32 %v44, %v297
    %v299 = vand.u32 %v298, 4294901760
    %v300 = vsub.f32 %v298, %v299
    %v301 = vand.u32 %v300, 4294901760
    %302 = vmatpush1.msra.mxu0 %v301
    %303 = vmatprep.subr.mxu0 0.0
    %v304 = vand.u32 %v45, 4294901760
    %v305 = vsub.f32 %v45, %v304
    %v306 = vand.u32 %v305, 4294901760
    %v307 = vsub.f32 %v305, %v306
    %v308 = vand.u32 %v307, 4294901760
    %309 = vmatpush1.msra.mxu0 %v308
    %310 = vmatprep.subr.mxu0 0.0
    %v311 = vand.u32 %v46, 4294901760
    %v312 = vsub.f32 %v46, %v311
    %v313 = vand.u32 %v312, 4294901760
    %v314 = vsub.f32 %v312, %v313
    %v315 = vand.u32 %v314, 4294901760
    %316 = vmatpush1.msra.mxu0 %v315
    %317 = vmatprep.subr.mxu0 0.0
    %v318 = vand.u32 %v47, 4294901760
    %v319 = vsub.f32 %v47, %v318
    %v320 = vand.u32 %v319, 4294901760
    %v321 = vsub.f32 %v319, %v320
    %v322 = vand.u32 %v321, 4294901760
    %323 = vmatpush1.msra.mxu0 %v322
    %324 = vmatprep.subr.mxu0 0.0
    %v325 = vand.u32 %v48, 4294901760
    %v326 = vsub.f32 %v48, %v325
    %v327 = vand.u32 %v326, 4294901760
    %v328 = vsub.f32 %v326, %v327
    %v329 = vand.u32 %v328, 4294901760
    %330 = vmatpush1.msra.mxu0 %v329
    %331 = vmatprep.subr.mxu0 0.0
    %v332 = vand.u32 %v49, 4294901760
    %v333 = vsub.f32 %v49, %v332
    %v334 = vand.u32 %v333, 4294901760
    %v335 = vsub.f32 %v333, %v334
    %v336 = vand.u32 %v335, 4294901760
    %337 = vmatpush1.msra.mxu0 %v336
    %338 = vmatprep.subr.mxu0 0.0
    %v339 = vand.u32 %v50, 4294901760
    %v340 = vsub.f32 %v50, %v339
    %v341 = vand.u32 %v340, 4294901760
    %v342 = vsub.f32 %v340, %v341
    %v343 = vand.u32 %v342, 4294901760
    %344 = vmatpush1.msra.mxu0 %v343
    %345 = vmatprep.subr.mxu0 0.0
    %v346 = vand.u32 %v51, 4294901760
    %v347 = vsub.f32 %v51, %v346
    %v348 = vand.u32 %v347, 4294901760
    %v349 = vsub.f32 %v347, %v348
    %v350 = vand.u32 %v349, 4294901760
    %351 = vmatpush1.msra.mxu0 %v350
    %352 = vmatprep.subr.mxu0 0.0
    %v353 = vand.u32 %v52, 4294901760
    %v354 = vsub.f32 %v52, %v353
    %v355 = vand.u32 %v354, 4294901760
    %v356 = vsub.f32 %v354, %v355
    %v357 = vand.u32 %v356, 4294901760
    %358 = vmatpush1.msra.mxu0 %v357
    %359 = vmatprep.subr.mxu0 0.0
    %v360 = vand.u32 %v53, 4294901760
    %v361 = vsub.f32 %v53, %v360
    %v362 = vand.u32 %v361, 4294901760
    %v363 = vsub.f32 %v361, %v362
    %v364 = vand.u32 %v363, 4294901760
    %365 = vmatpush1.msra.mxu0 %v364
    %366 = vmatprep.subr.mxu0 0.0
    %v367 = vand.u32 %v54, 4294901760
    %v368 = vsub.f32 %v54, %v367
    %v369 = vand.u32 %v368, 4294901760
    %v370 = vsub.f32 %v368, %v369
    %v371 = vand.u32 %v370, 4294901760
    %372 = vmatpush1.msra.mxu0 %v371
    %373 = vmatprep.subr.mxu0 0.0
    %v374 = vand.u32 %v55, 4294901760
    %v375 = vsub.f32 %v55, %v374
    %v376 = vand.u32 %v375, 4294901760
    %v377 = vsub.f32 %v375, %v376
    %v378 = vand.u32 %v377, 4294901760
    %379 = vmatpush1.msra.mxu0 %v378
    %380 = vmatprep.subr.mxu0 0.0
    %v381 = vand.u32 %v56, 4294901760
    %v382 = vsub.f32 %v56, %v381
    %v383 = vand.u32 %v382, 4294901760
    %v384 = vsub.f32 %v382, %v383
    %v385 = vand.u32 %v384, 4294901760
    %386 = vmatpush1.msra.mxu0 %v385
    %387 = vmatprep.subr.mxu0 0.0
    %v388 = vand.u32 %v57, 4294901760
    %v389 = vsub.f32 %v57, %v388
    %v390 = vand.u32 %v389, 4294901760
    %v391 = vsub.f32 %v389, %v390
    %v392 = vand.u32 %v391, 4294901760
    %393 = vmatpush1.msra.mxu0 %v392
    %v394 = vand.u32 %v25, 4294901760
    %395 = vmatprep.mubr.f32.mxu0 %v394
    %v396 = vand.u32 %v24, 4294901760
    %397 = vmatmul.mubr.f32.gmra.mrb[0].mxu0 %v396
    %v398 = vpop.f32.mrb[0].mxu0
    %v399 = vadd.f32 %v167, %v398
    %v400 = vpop.f32.mrb[0].mxu0
    %401 = vdwg.mxu0
    %402 = vmatprep.subr.mxu0 0.0
    %v403 = vand.u32 %v26, 4294901760
    %v404 = vsub.f32 %v26, %v403
    %405 = vmatpush1.msra.mxu0 %v404
    %406 = vmatprep.subr.mxu0 0.0
    %v407 = vand.u32 %v27, 4294901760
    %v408 = vsub.f32 %v27, %v407
    %409 = vmatpush1.msra.mxu0 %v408
    %410 = vmatprep.subr.mxu0 0.0
    %v411 = vand.u32 %v28, 4294901760
    %v412 = vsub.f32 %v28, %v411
    %413 = vmatpush1.msra.mxu0 %v412
    %414 = vmatprep.subr.mxu0 0.0
    %v415 = vand.u32 %v29, 4294901760
    %v416 = vsub.f32 %v29, %v415
    %417 = vmatpush1.msra.mxu0 %v416
    %418 = vmatprep.subr.mxu0 0.0
    %v419 = vand.u32 %v30, 4294901760
    %v420 = vsub.f32 %v30, %v419
    %421 = vmatpush1.msra.mxu0 %v420
    %422 = vmatprep.subr.mxu0 0.0
    %v423 = vand.u32 %v31, 4294901760
    %v424 = vsub.f32 %v31, %v423
    %425 = vmatpush1.msra.mxu0 %v424
    %426 = vmatprep.subr.mxu0 0.0
    %v427 = vand.u32 %v32, 4294901760
    %v428 = vsub.f32 %v32, %v427
    %429 = vmatpush1.msra.mxu0 %v428
    %430 = vmatprep.subr.mxu0 0.0
    %v431 = vand.u32 %v33, 4294901760
    %v432 = vsub.f32 %v33, %v431
    %433 = vmatpush1.msra.mxu0 %v432
    %434 = vmatprep.subr.mxu0 0.0
    %v435 = vand.u32 %v34, 4294901760
    %v436 = vsub.f32 %v34, %v435
    %437 = vmatpush1.msra.mxu0 %v436
    %438 = vmatprep.subr.mxu0 0.0
    %v439 = vand.u32 %v35, 4294901760
    %v440 = vsub.f32 %v35, %v439
    %441 = vmatpush1.msra.mxu0 %v440
    %442 = vmatprep.subr.mxu0 0.0
    %v443 = vand.u32 %v36, 4294901760
    %v444 = vsub.f32 %v36, %v443
    %445 = vmatpush1.msra.mxu0 %v444
    %446 = vmatprep.subr.mxu0 0.0
    %v447 = vand.u32 %v37, 4294901760
    %v448 = vsub.f32 %v37, %v447
    %449 = vmatpush1.msra.mxu0 %v448
    %450 = vmatprep.subr.mxu0 0.0
    %v451 = vand.u32 %v38, 4294901760
    %v452 = vsub.f32 %v38, %v451
    %453 = vmatpush1.msra.mxu0 %v452
    %454 = vmatprep.subr.mxu0 0.0
    %v455 = vand.u32 %v39, 4294901760
    %v456 = vsub.f32 %v39, %v455
    %457 = vmatpush1.msra.mxu0 %v456
    %458 = vmatprep.subr.mxu0 0.0
    %v459 = vand.u32 %v40, 4294901760
    %v460 = vsub.f32 %v40, %v459
    %461 = vmatpush1.msra.mxu0 %v460
    %462 = vmatprep.subr.mxu0 0.0
    %v463 = vand.u32 %v41, 4294901760
    %v464 = vsub.f32 %v41, %v463
    %465 = vmatpush1.msra.mxu0 %v464
    %466 = vmatprep.subr.mxu0 0.0
    %v467 = vand.u32 %v42, 4294901760
    %v468 = vsub.f32 %v42, %v467
    %469 = vmatpush1.msra.mxu0 %v468
    %470 = vmatprep.subr.mxu0 0.0
    %v471 = vand.u32 %v43, 4294901760
    %v472 = vsub.f32 %v43, %v471
    %473 = vmatpush1.msra.mxu0 %v472
    %474 = vmatprep.subr.mxu0 0.0
    %v475 = vand.u32 %v44, 4294901760
    %v476 = vsub.f32 %v44, %v475
    %477 = vmatpush1.msra.mxu0 %v476
    %478 = vmatprep.subr.mxu0 0.0
    %v479 = vand.u32 %v45, 4294901760
    %v480 = vsub.f32 %v45, %v479
    %481 = vmatpush1.msra.mxu0 %v480
    %482 = vmatprep.subr.mxu0 0.0
    %v483 = vand.u32 %v46, 4294901760
    %v484 = vsub.f32 %v46, %v483
    %485 = vmatpush1.msra.mxu0 %v484
    %486 = vmatprep.subr.mxu0 0.0
    %v487 = vand.u32 %v47, 4294901760
    %v488 = vsub.f32 %v47, %v487
    %489 = vmatpush1.msra.mxu0 %v488
    %490 = vmatprep.subr.mxu0 0.0
    %v491 = vand.u32 %v48, 4294901760
    %v492 = vsub.f32 %v48, %v491
    %493 = vmatpush1.msra.mxu0 %v492
    %494 = vmatprep.subr.mxu0 0.0
    %v495 = vand.u32 %v49, 4294901760
    %v496 = vsub.f32 %v49, %v495
    %497 = vmatpush1.msra.mxu0 %v496
    %498 = vmatprep.subr.mxu0 0.0
    %v499 = vand.u32 %v50, 4294901760
    %v500 = vsub.f32 %v50, %v499
    %501 = vmatpush1.msra.mxu0 %v500
    %502 = vmatprep.subr.mxu0 0.0
    %v503 = vand.u32 %v51, 4294901760
    %v504 = vsub.f32 %v51, %v503
    %505 = vmatpush1.msra.mxu0 %v504
    %506 = vmatprep.subr.mxu0 0.0
    %v507 = vand.u32 %v52, 4294901760
    %v508 = vsub.f32 %v52, %v507
    %509 = vmatpush1.msra.mxu0 %v508
    %510 = vmatprep.subr.mxu0 0.0
    %v511 = vand.u32 %v53, 4294901760
    %v512 = vsub.f32 %v53, %v511
    %513 = vmatpush1.msra.mxu0 %v512
    %514 = vmatprep.subr.mxu0 0.0
    %v515 = vand.u32 %v54, 4294901760
    %v516 = vsub.f32 %v54, %v515
    %517 = vmatpush1.msra.mxu0 %v516
    %518 = vmatprep.subr.mxu0 0.0
    %v519 = vand.u32 %v55, 4294901760
    %v520 = vsub.f32 %v55, %v519
    %521 = vmatpush1.msra.mxu0 %v520
    %522 = vmatprep.subr.mxu0 0.0
    %v523 = vand.u32 %v56, 4294901760
    %v524 = vsub.f32 %v56, %v523
    %525 = vmatpush1.msra.mxu0 %v524
    %526 = vmatprep.subr.mxu0 0.0
    %v527 = vand.u32 %v57, 4294901760
    %v528 = vsub.f32 %v57, %v527
    %529 = vmatpush1.msra.mxu0 %v528
    %v530 = vand.u32 %v25, 4294901760
    %v531 = vsub.f32 %v25, %v530
    %532 = vmatprep.mubr.f32.mxu0 %v531
    %v533 = vand.u32 %v24, 4294901760
    %v534 = vsub.f32 %v24, %v533
    %535 = vmatmul.mubr.f32.gmra.mrb[0].mxu0 %v534
    %v536 = vpop.f32.mrb[0].mxu0
    %v537 = vadd.f32 %v399, %v536
    %v538 = vpop.f32.mrb[0].mxu0
    %539 = vdwg.mxu0
    %540 = vmatprep.subr.mxu0 0.0
    %v541 = vand.u32 %v26, 4294901760
    %542 = vmatpush1.msra.mxu0 %v541
    %543 = vmatprep.subr.mxu0 0.0
    %v544 = vand.u32 %v27, 4294901760
    %545 = vmatpush1.msra.mxu0 %v544
    %546 = vmatprep.subr.mxu0 0.0
    %v547 = vand.u32 %v28, 4294901760
    %548 = vmatpush1.msra.mxu0 %v547
    %549 = vmatprep.subr.mxu0 0.0
    %v550 = vand.u32 %v29, 4294901760
    %551 = vmatpush1.msra.mxu0 %v550
    %552 = vmatprep.subr.mxu0 0.0
    %v553 = vand.u32 %v30, 4294901760
    %554 = vmatpush1.msra.mxu0 %v553
    %555 = vmatprep.subr.mxu0 0.0
    %v556 = vand.u32 %v31, 4294901760
    %557 = vmatpush1.msra.mxu0 %v556
    %558 = vmatprep.subr.mxu0 0.0
    %v559 = vand.u32 %v32, 4294901760
    %560 = vmatpush1.msra.mxu0 %v559
    %561 = vmatprep.subr.mxu0 0.0
    %v562 = vand.u32 %v33, 4294901760
    %563 = vmatpush1.msra.mxu0 %v562
    %564 = vmatprep.subr.mxu0 0.0
    %v565 = vand.u32 %v34, 4294901760
    %566 = vmatpush1.msra.mxu0 %v565
    %567 = vmatprep.subr.mxu0 0.0
    %v568 = vand.u32 %v35, 4294901760
    %569 = vmatpush1.msra.mxu0 %v568
    %570 = vmatprep.subr.mxu0 0.0
    %v571 = vand.u32 %v36, 4294901760
    %572 = vmatpush1.msra.mxu0 %v571
    %573 = vmatprep.subr.mxu0 0.0
    %v574 = vand.u32 %v37, 4294901760
    %575 = vmatpush1.msra.mxu0 %v574
    %576 = vmatprep.subr.mxu0 0.0
    %v577 = vand.u32 %v38, 4294901760
    %578 = vmatpush1.msra.mxu0 %v577
    %579 = vmatprep.subr.mxu0 0.0
    %v580 = vand.u32 %v39, 4294901760
    %581 = vmatpush1.msra.mxu0 %v580
    %582 = vmatprep.subr.mxu0 0.0
    %v583 = vand.u32 %v40, 4294901760
    %584 = vmatpush1.msra.mxu0 %v583
    %585 = vmatprep.subr.mxu0 0.0
    %v586 = vand.u32 %v41, 4294901760
    %587 = vmatpush1.msra.mxu0 %v586
    %588 = vmatprep.subr.mxu0 0.0
    %v589 = vand.u32 %v42, 4294901760
    %590 = vmatpush1.msra.mxu0 %v589
    %591 = vmatprep.subr.mxu0 0.0
    %v592 = vand.u32 %v43, 4294901760
    %593 = vmatpush1.msra.mxu0 %v592
    %594 = vmatprep.subr.mxu0 0.0
    %v595 = vand.u32 %v44, 4294901760
    %596 = vmatpush1.msra.mxu0 %v595
    %597 = vmatprep.subr.mxu0 0.0
    %v598 = vand.u32 %v45, 4294901760
    %599 = vmatpush1.msra.mxu0 %v598
    %600 = vmatprep.subr.mxu0 0.0
    %v601 = vand.u32 %v46, 4294901760
    %602 = vmatpush1.msra.mxu0 %v601
    %603 = vmatprep.subr.mxu0 0.0
    %v604 = vand.u32 %v47, 4294901760
    %605 = vmatpush1.msra.mxu0 %v604
    %606 = vmatprep.subr.mxu0 0.0
    %v607 = vand.u32 %v48, 4294901760
    %608 = vmatpush1.msra.mxu0 %v607
    %609 = vmatprep.subr.mxu0 0.0
    %v610 = vand.u32 %v49, 4294901760
    %611 = vmatpush1.msra.mxu0 %v610
    %612 = vmatprep.subr.mxu0 0.0
    %v613 = vand.u32 %v50, 4294901760
    %614 = vmatpush1.msra.mxu0 %v613
    %615 = vmatprep.subr.mxu0 0.0
    %v616 = vand.u32 %v51, 4294901760
    %617 = vmatpush1.msra.mxu0 %v616
    %618 = vmatprep.subr.mxu0 0.0
    %v619 = vand.u32 %v52, 4294901760
    %620 = vmatpush1.msra.mxu0 %v619
    %621 = vmatprep.subr.mxu0 0.0
    %v622 = vand.u32 %v53, 4294901760
    %623 = vmatpush1.msra.mxu0 %v622
    %624 = vmatprep.subr.mxu0 0.0
    %v625 = vand.u32 %v54, 4294901760
    %626 = vmatpush1.msra.mxu0 %v625
    %627 = vmatprep.subr.mxu0 0.0
    %v628 = vand.u32 %v55, 4294901760
    %629 = vmatpush1.msra.mxu0 %v628
    %630 = vmatprep.subr.mxu0 0.0
    %v631 = vand.u32 %v56, 4294901760
    %632 = vmatpush1.msra.mxu0 %v631
    %633 = vmatprep.subr.mxu0 0.0
    %v634 = vand.u32 %v57, 4294901760
    %635 = vmatpush1.msra.mxu0 %v634
    %v636 = vand.u32 %v25, 4294901760
    %v637 = vsub.f32 %v25, %v636
    %v638 = vand.u32 %v637, 4294901760
    %639 = vmatprep.mubr.f32.mxu0 %v638
    %v640 = vand.u32 %v24, 4294901760
    %v641 = vsub.f32 %v24, %v640
    %v642 = vand.u32 %v641, 4294901760
    %643 = vmatmul.mubr.f32.gmra.mrb[0].mxu0 %v642
    %v644 = vpop.f32.mrb[0].mxu0
    %v645 = vadd.f32 %v537, %v644
    %v646 = vpop.f32.mrb[0].mxu0
    %647 = vdwg.mxu0
    %648 = vmatprep.subr.mxu0 0.0
    %v649 = vand.u32 %v26, 4294901760
    %v650 = vsub.f32 %v26, %v649
    %v651 = vand.u32 %v650, 4294901760
    %652 = vmatpush1.msra.mxu0 %v651
    %653 = vmatprep.subr.mxu0 0.0
    %v654 = vand.u32 %v27, 4294901760
    %v655 = vsub.f32 %v27, %v654
    %v656 = vand.u32 %v655, 4294901760
    %657 = vmatpush1.msra.mxu0 %v656
    %658 = vmatprep.subr.mxu0 0.0
    %v659 = vand.u32 %v28, 4294901760
    %v660 = vsub.f32 %v28, %v659
    %v661 = vand.u32 %v660, 4294901760
    %662 = vmatpush1.msra.mxu0 %v661
    %663 = vmatprep.subr.mxu0 0.0
    %v664 = vand.u32 %v29, 4294901760
    %v665 = vsub.f32 %v29, %v664
    %v666 = vand.u32 %v665, 4294901760
    %667 = vmatpush1.msra.mxu0 %v666
    %668 = vmatprep.subr.mxu0 0.0
    %v669 = vand.u32 %v30, 4294901760
    %v670 = vsub.f32 %v30, %v669
    %v671 = vand.u32 %v670, 4294901760
    %672 = vmatpush1.msra.mxu0 %v671
    %673 = vmatprep.subr.mxu0 0.0
    %v674 = vand.u32 %v31, 4294901760
    %v675 = vsub.f32 %v31, %v674
    %v676 = vand.u32 %v675, 4294901760
    %677 = vmatpush1.msra.mxu0 %v676
    %678 = vmatprep.subr.mxu0 0.0
    %v679 = vand.u32 %v32, 4294901760
    %v680 = vsub.f32 %v32, %v679
    %v681 = vand.u32 %v680, 4294901760
    %682 = vmatpush1.msra.mxu0 %v681
    %683 = vmatprep.subr.mxu0 0.0
    %v684 = vand.u32 %v33, 4294901760
    %v685 = vsub.f32 %v33, %v684
    %v686 = vand.u32 %v685, 4294901760
    %687 = vmatpush1.msra.mxu0 %v686
    %688 = vmatprep.subr.mxu0 0.0
    %v689 = vand.u32 %v34, 4294901760
    %v690 = vsub.f32 %v34, %v689
    %v691 = vand.u32 %v690, 4294901760
    %692 = vmatpush1.msra.mxu0 %v691
    %693 = vmatprep.subr.mxu0 0.0
    %v694 = vand.u32 %v35, 4294901760
    %v695 = vsub.f32 %v35, %v694
    %v696 = vand.u32 %v695, 4294901760
    %697 = vmatpush1.msra.mxu0 %v696
    %698 = vmatprep.subr.mxu0 0.0
    %v699 = vand.u32 %v36, 4294901760
    %v700 = vsub.f32 %v36, %v699
    %v701 = vand.u32 %v700, 4294901760
    %702 = vmatpush1.msra.mxu0 %v701
    %703 = vmatprep.subr.mxu0 0.0
    %v704 = vand.u32 %v37, 4294901760
    %v705 = vsub.f32 %v37, %v704
    %v706 = vand.u32 %v705, 4294901760
    %707 = vmatpush1.msra.mxu0 %v706
    %708 = vmatprep.subr.mxu0 0.0
    %v709 = vand.u32 %v38, 4294901760
    %v710 = vsub.f32 %v38, %v709
    %v711 = vand.u32 %v710, 4294901760
    %712 = vmatpush1.msra.mxu0 %v711
    %713 = vmatprep.subr.mxu0 0.0
    %v714 = vand.u32 %v39, 4294901760
    %v715 = vsub.f32 %v39, %v714
    %v716 = vand.u32 %v715, 4294901760
    %717 = vmatpush1.msra.mxu0 %v716
    %718 = vmatprep.subr.mxu0 0.0
    %v719 = vand.u32 %v40, 4294901760
    %v720 = vsub.f32 %v40, %v719
    %v721 = vand.u32 %v720, 4294901760
    %722 = vmatpush1.msra.mxu0 %v721
    %723 = vmatprep.subr.mxu0 0.0
    %v724 = vand.u32 %v41, 4294901760
    %v725 = vsub.f32 %v41, %v724
    %v726 = vand.u32 %v725, 4294901760
    %727 = vmatpush1.msra.mxu0 %v726
    %728 = vmatprep.subr.mxu0 0.0
    %v729 = vand.u32 %v42, 4294901760
    %v730 = vsub.f32 %v42, %v729
    %v731 = vand.u32 %v730, 4294901760
    %732 = vmatpush1.msra.mxu0 %v731
    %733 = vmatprep.subr.mxu0 0.0
    %v734 = vand.u32 %v43, 4294901760
    %v735 = vsub.f32 %v43, %v734
    %v736 = vand.u32 %v735, 4294901760
    %737 = vmatpush1.msra.mxu0 %v736
    %738 = vmatprep.subr.mxu0 0.0
    %v739 = vand.u32 %v44, 4294901760
    %v740 = vsub.f32 %v44, %v739
    %v741 = vand.u32 %v740, 4294901760
    %742 = vmatpush1.msra.mxu0 %v741
    %743 = vmatprep.subr.mxu0 0.0
    %v744 = vand.u32 %v45, 4294901760
    %v745 = vsub.f32 %v45, %v744
    %v746 = vand.u32 %v745, 4294901760
    %747 = vmatpush1.msra.mxu0 %v746
    %748 = vmatprep.subr.mxu0 0.0
    %v749 = vand.u32 %v46, 4294901760
    %v750 = vsub.f32 %v46, %v749
    %v751 = vand.u32 %v750, 4294901760
    %752 = vmatpush1.msra.mxu0 %v751
    %753 = vmatprep.subr.mxu0 0.0
    %v754 = vand.u32 %v47, 4294901760
    %v755 = vsub.f32 %v47, %v754
    %v756 = vand.u32 %v755, 4294901760
    %757 = vmatpush1.msra.mxu0 %v756
    %758 = vmatprep.subr.mxu0 0.0
    %v759 = vand.u32 %v48, 4294901760
    %v760 = vsub.f32 %v48, %v759
    %v761 = vand.u32 %v760, 4294901760
    %762 = vmatpush1.msra.mxu0 %v761
    %763 = vmatprep.subr.mxu0 0.0
    %v764 = vand.u32 %v49, 4294901760
    %v765 = vsub.f32 %v49, %v764
    %v766 = vand.u32 %v765, 4294901760
    %767 = vmatpush1.msra.mxu0 %v766
    %768 = vmatprep.subr.mxu0 0.0
    %v769 = vand.u32 %v50, 4294901760
    %v770 = vsub.f32 %v50, %v769
    %v771 = vand.u32 %v770, 4294901760
    %772 = vmatpush1.msra.mxu0 %v771
    %773 = vmatprep.subr.mxu0 0.0
    %v774 = vand.u32 %v51, 4294901760
    %v775 = vsub.f32 %v51, %v774
    %v776 = vand.u32 %v775, 4294901760
    %777 = vmatpush1.msra.mxu0 %v776
    %778 = vmatprep.subr.mxu0 0.0
    %v779 = vand.u32 %v52, 4294901760
    %v780 = vsub.f32 %v52, %v779
    %v781 = vand.u32 %v780, 4294901760
    %782 = vmatpush1.msra.mxu0 %v781
    %783 = vmatprep.subr.mxu0 0.0
    %v784 = vand.u32 %v53, 4294901760
    %v785 = vsub.f32 %v53, %v784
    %v786 = vand.u32 %v785, 4294901760
    %787 = vmatpush1.msra.mxu0 %v786
    %788 = vmatprep.subr.mxu0 0.0
    %v789 = vand.u32 %v54, 4294901760
    %v790 = vsub.f32 %v54, %v789
    %v791 = vand.u32 %v790, 4294901760
    %792 = vmatpush1.msra.mxu0 %v791
    %793 = vmatprep.subr.mxu0 0.0
    %v794 = vand.u32 %v55, 4294901760
    %v795 = vsub.f32 %v55, %v794
    %v796 = vand.u32 %v795, 4294901760
    %797 = vmatpush1.msra.mxu0 %v796
    %798 = vmatprep.subr.mxu0 0.0
    %v799 = vand.u32 %v56, 4294901760
    %v800 = vsub.f32 %v56, %v799
    %v801 = vand.u32 %v800, 4294901760
    %802 = vmatpush1.msra.mxu0 %v801
    %803 = vmatprep.subr.mxu0 0.0
    %v804 = vand.u32 %v57, 4294901760
    %v805 = vsub.f32 %v57, %v804
    %v806 = vand.u32 %v805, 4294901760
    %807 = vmatpush1.msra.mxu0 %v806
    %v808 = vand.u32 %v25, 4294901760
    %809 = vmatprep.mubr.f32.mxu0 %v808
    %v810 = vand.u32 %v24, 4294901760
    %811 = vmatmul.mubr.f32.gmra.mrb[0].mxu0 %v810
    %v812 = vpop.f32.mrb[0].mxu0
    %v813 = vadd.f32 %v645, %v812
    %v814 = vpop.f32.mrb[0].mxu0
    %815 = vdwg.mxu0
    %816 = vmatprep.subr.mxu0 0.0
    %v817 = vand.u32 %v26, 4294901760
    %818 = vmatpush1.msra.mxu0 %v817
    %819 = vmatprep.subr.mxu0 0.0
    %v820 = vand.u32 %v27, 4294901760
    %821 = vmatpush1.msra.mxu0 %v820
    %822 = vmatprep.subr.mxu0 0.0
    %v823 = vand.u32 %v28, 4294901760
    %824 = vmatpush1.msra.mxu0 %v823
    %825 = vmatprep.subr.mxu0 0.0
    %v826 = vand.u32 %v29, 4294901760
    %827 = vmatpush1.msra.mxu0 %v826
    %828 = vmatprep.subr.mxu0 0.0
    %v829 = vand.u32 %v30, 4294901760
    %830 = vmatpush1.msra.mxu0 %v829
    %831 = vmatprep.subr.mxu0 0.0
    %v832 = vand.u32 %v31, 4294901760
    %833 = vmatpush1.msra.mxu0 %v832
    %834 = vmatprep.subr.mxu0 0.0
    %v835 = vand.u32 %v32, 4294901760
    %836 = vmatpush1.msra.mxu0 %v835
    %837 = vmatprep.subr.mxu0 0.0
    %v838 = vand.u32 %v33, 4294901760
    %839 = vmatpush1.msra.mxu0 %v838
    %840 = vmatprep.subr.mxu0 0.0
    %v841 = vand.u32 %v34, 4294901760
    %842 = vmatpush1.msra.mxu0 %v841
    %843 = vmatprep.subr.mxu0 0.0
    %v844 = vand.u32 %v35, 4294901760
    %845 = vmatpush1.msra.mxu0 %v844
    %846 = vmatprep.subr.mxu0 0.0
    %v847 = vand.u32 %v36, 4294901760
    %848 = vmatpush1.msra.mxu0 %v847
    %849 = vmatprep.subr.mxu0 0.0
    %v850 = vand.u32 %v37, 4294901760
    %851 = vmatpush1.msra.mxu0 %v850
    %852 = vmatprep.subr.mxu0 0.0
    %v853 = vand.u32 %v38, 4294901760
    %854 = vmatpush1.msra.mxu0 %v853
    %855 = vmatprep.subr.mxu0 0.0
    %v856 = vand.u32 %v39, 4294901760
    %857 = vmatpush1.msra.mxu0 %v856
    %858 = vmatprep.subr.mxu0 0.0
    %v859 = vand.u32 %v40, 4294901760
    %860 = vmatpush1.msra.mxu0 %v859
    %861 = vmatprep.subr.mxu0 0.0
    %v862 = vand.u32 %v41, 4294901760
    %863 = vmatpush1.msra.mxu0 %v862
    %864 = vmatprep.subr.mxu0 0.0
    %v865 = vand.u32 %v42, 4294901760
    %866 = vmatpush1.msra.mxu0 %v865
    %867 = vmatprep.subr.mxu0 0.0
    %v868 = vand.u32 %v43, 4294901760
    %869 = vmatpush1.msra.mxu0 %v868
    %870 = vmatprep.subr.mxu0 0.0
    %v871 = vand.u32 %v44, 4294901760
    %872 = vmatpush1.msra.mxu0 %v871
    %873 = vmatprep.subr.mxu0 0.0
    %v874 = vand.u32 %v45, 4294901760
    %875 = vmatpush1.msra.mxu0 %v874
    %876 = vmatprep.subr.mxu0 0.0
    %v877 = vand.u32 %v46, 4294901760
    %878 = vmatpush1.msra.mxu0 %v877
    %879 = vmatprep.subr.mxu0 0.0
    %v880 = vand.u32 %v47, 4294901760
    %881 = vmatpush1.msra.mxu0 %v880
    %882 = vmatprep.subr.mxu0 0.0
    %v883 = vand.u32 %v48, 4294901760
    %884 = vmatpush1.msra.mxu0 %v883
    %885 = vmatprep.subr.mxu0 0.0
    %v886 = vand.u32 %v49, 4294901760
    %887 = vmatpush1.msra.mxu0 %v886
    %888 = vmatprep.subr.mxu0 0.0
    %v889 = vand.u32 %v50, 4294901760
    %890 = vmatpush1.msra.mxu0 %v889
    %891 = vmatprep.subr.mxu0 0.0
    %v892 = vand.u32 %v51, 4294901760
    %893 = vmatpush1.msra.mxu0 %v892
    %894 = vmatprep.subr.mxu0 0.0
    %v895 = vand.u32 %v52, 4294901760
    %896 = vmatpush1.msra.mxu0 %v895
    %897 = vmatprep.subr.mxu0 0.0
    %v898 = vand.u32 %v53, 4294901760
    %899 = vmatpush1.msra.mxu0 %v898
    %900 = vmatprep.subr.mxu0 0.0
    %v901 = vand.u32 %v54, 4294901760
    %902 = vmatpush1.msra.mxu0 %v901
    %903 = vmatprep.subr.mxu0 0.0
    %v904 = vand.u32 %v55, 4294901760
    %905 = vmatpush1.msra.mxu0 %v904
    %906 = vmatprep.subr.mxu0 0.0
    %v907 = vand.u32 %v56, 4294901760
    %908 = vmatpush1.msra.mxu0 %v907
    %909 = vmatprep.subr.mxu0 0.0
    %v910 = vand.u32 %v57, 4294901760
    %911 = vmatpush1.msra.mxu0 %v910
    %v912 = vand.u32 %v25, 4294901760
    %913 = vmatprep.mubr.f32.mxu0 %v912
    %v914 = vand.u32 %v24, 4294901760
    %915 = vmatmul.mubr.f32.gmra.mrb[0].mxu0 %v914
    %v916 = vpop.f32.mrb[0].mxu0
    %v917 = vadd.f32 %v813, %v916
    %v918 = vpop.f32.mrb[0].mxu0
    %919 = vdwg.mxu0
    %v920 = vmul.f32 %v917, 0.0625
    %v921 = vld [vmem:[%s2] sm:$0xff]
    %v922 = vld [vmem:[%s2 + $0x8] sm:$0xff]
    %v923 = vld [vmem:[%s2 + $0x10] sm:$0xff]
    %v924 = vld [vmem:[%s2 + $0x18] sm:$0xff]
    %vm925 = vcmask 130048
    %v927 = vsel %vm925, %v920, 0
    %v929 = vand.u32 %v922, 4294901760
    %930 = vmatprep.subr.mxu0 %v929
    %v931 = vand.u32 %v921, 4294901760
    %932 = vmatpush1.msra.mxu0 %v931
    %v933 = vand.u32 %v924, 4294901760
    %934 = vmatprep.subr.mxu0 %v933
    %v935 = vand.u32 %v923, 4294901760
    %936 = vmatpush1.msra.mxu0 %v935
    %937 = vmatprep.subr.mxu0 0.0
    %938 = vmatpush1.msra.mxu0 0.0
    %939 = vmatprep.subr.mxu0 0.0
    %940 = vmatpush1.msra.mxu0 0.0
    %941 = vmatprep.subr.mxu0 0.0
    %942 = vmatpush1.msra.mxu0 0.0
    %943 = vmatprep.subr.mxu0 0.0
    %944 = vmatpush1.msra.mxu0 0.0
    %945 = vmatprep.subr.mxu0 0.0
    %946 = vmatpush1.msra.mxu0 0.0
    %947 = vmatprep.subr.mxu0 0.0
    %948 = vmatpush1.msra.mxu0 0.0
    %949 = vmatprep.subr.mxu0 0.0
    %950 = vmatpush1.msra.mxu0 0.0
    %951 = vmatprep.subr.mxu0 0.0
    %952 = vmatpush1.msra.mxu0 0.0
    %953 = vmatprep.subr.mxu0 0.0
    %954 = vmatpush1.msra.mxu0 0.0
    %955 = vmatprep.subr.mxu0 0.0
    %956 = vmatpush1.msra.mxu0 0.0
    %957 = vmatprep.subr.mxu0 0.0
    %958 = vmatpush1.msra.mxu0 0.0
    %959 = vmatprep.subr.mxu0 0.0
    %960 = vmatpush1.msra.mxu0 0.0
    %961 = vmatprep.subr.mxu0 0.0
    %962 = vmatpush1.msra.mxu0 0.0
    %963 = vmatprep.subr.mxu0 0.0
    %964 = vmatpush1.msra.mxu0 0.0
    %965 = vmatprep.subr.mxu0 0.0
    %966 = vmatpush1.msra.mxu0 0.0
    %967 = vmatprep.subr.mxu0 0.0
    %968 = vmatpush1.msra.mxu0 0.0
    %969 = vmatprep.subr.mxu0 0.0
    %970 = vmatpush1.msra.mxu0 0.0
    %971 = vmatprep.subr.mxu0 0.0
    %972 = vmatpush1.msra.mxu0 0.0
    %973 = vmatprep.subr.mxu0 0.0
    %974 = vmatpush1.msra.mxu0 0.0
    %975 = vmatprep.subr.mxu0 0.0
    %976 = vmatpush1.msra.mxu0 0.0
    %977 = vmatprep.subr.mxu0 0.0
    %978 = vmatpush1.msra.mxu0 0.0
    %979 = vmatprep.subr.mxu0 0.0
    %980 = vmatpush1.msra.mxu0 0.0
    %981 = vmatprep.subr.mxu0 0.0
    %982 = vmatpush1.msra.mxu0 0.0
    %983 = vmatprep.subr.mxu0 0.0
    %984 = vmatpush1.msra.mxu0 0.0
    %985 = vmatprep.subr.mxu0 0.0
    %986 = vmatpush1.msra.mxu0 0.0
    %987 = vmatprep.subr.mxu0 0.0
    %988 = vmatpush1.msra.mxu0 0.0
    %989 = vmatprep.subr.mxu0 0.0
    %990 = vmatpush1.msra.mxu0 0.0
    %991 = vmatprep.subr.mxu0 0.0
    %992 = vmatpush1.msra.mxu0 0.0
    %993 = vmatprep.subr.mxu0 0.0
    %994 = vmatpush1.msra.mxu0 0.0
    %995 = vmatprep.subr.mxu0 0.0
    %996 = vmatpush1.msra.mxu0 0.0
    %997 = vmatprep.mubr.f32.mxu0 0.0
    %v998 = vand.u32 %v927, 4294901760
    %v999 = vsub.f32 %v927, %v998
    %v1000 = vand.u32 %v999, 4294901760
    %v1001 = vsub.f32 %v999, %v1000
    %v1002 = vand.u32 %v1001, 4294901760
    %1003 = vmatmul.mubr.f32.gmra.mrb[0].mxu0 %v1002
    %v1004 = vpop.f32.mrb[0].mxu0
    %v1005 = vadd.f32 0.0, %v1004
    %v1006 = vpop.f32.mrb[0].mxu0
    %v1007 = vadd.f32 0.0, %v1006
    %1008 = vdwg.mxu0
    %v1009 = vand.u32 %v922, 4294901760
    %v1010 = vsub.f32 %v922, %v1009
    %v1011 = vand.u32 %v1010, 4294901760
    %v1012 = vsub.f32 %v1010, %v1011
    %v1013 = vand.u32 %v1012, 4294901760
    %1014 = vmatprep.subr.mxu0 %v1013
    %v1015 = vand.u32 %v921, 4294901760
    %v1016 = vsub.f32 %v921, %v1015
    %v1017 = vand.u32 %v1016, 4294901760
    %v1018 = vsub.f32 %v1016, %v1017
    %v1019 = vand.u32 %v1018, 4294901760
    %1020 = vmatpush1.msra.mxu0 %v1019
    %v1021 = vand.u32 %v924, 4294901760
    %v1022 = vsub.f32 %v924, %v1021
    %v1023 = vand.u32 %v1022, 4294901760
    %v1024 = vsub.f32 %v1022, %v1023
    %v1025 = vand.u32 %v1024, 4294901760
    %1026 = vmatprep.subr.mxu0 %v1025
    %v1027 = vand.u32 %v923, 4294901760
    %v1028 = vsub.f32 %v923, %v1027
    %v1029 = vand.u32 %v1028, 4294901760
    %v1030 = vsub.f32 %v1028, %v1029
    %v1031 = vand.u32 %v1030, 4294901760
    %1032 = vmatpush1.msra.mxu0 %v1031
    %1033 = vmatprep.subr.mxu0 0.0
    %1034 = vmatpush1.msra.mxu0 0.0
    %1035 = vmatprep.subr.mxu0 0.0
    %1036 = vmatpush1.msra.mxu0 0.0
    %1037 = vmatprep.subr.mxu0 0.0
    %1038 = vmatpush1.msra.mxu0 0.0
    %1039 = vmatprep.subr.mxu0 0.0
    %1040 = vmatpush1.msra.mxu0 0.0
    %1041 = vmatprep.subr.mxu0 0.0
    %1042 = vmatpush1.msra.mxu0 0.0
    %1043 = vmatprep.subr.mxu0 0.0
    %1044 = vmatpush1.msra.mxu0 0.0
    %1045 = vmatprep.subr.mxu0 0.0
    %1046 = vmatpush1.msra.mxu0 0.0
    %1047 = vmatprep.subr.mxu0 0.0
    %1048 = vmatpush1.msra.mxu0 0.0
    %1049 = vmatprep.subr.mxu0 0.0
    %1050 = vmatpush1.msra.mxu0 0.0
    %1051 = vmatprep.subr.mxu0 0.0
    %1052 = vmatpush1.msra.mxu0 0.0
    %1053 = vmatprep.subr.mxu0 0.0
    %1054 = vmatpush1.msra.mxu0 0.0
    %1055 = vmatprep.subr.mxu0 0.0
    %1056 = vmatpush1.msra.mxu0 0.0
    %1057 = vmatprep.subr.mxu0 0.0
    %1058 = vmatpush1.msra.mxu0 0.0
    %1059 = vmatprep.subr.mxu0 0.0
    %1060 = vmatpush1.msra.mxu0 0.0
    %1061 = vmatprep.subr.mxu0 0.0
    %1062 = vmatpush1.msra.mxu0 0.0
    %1063 = vmatprep.subr.mxu0 0.0
    %1064 = vmatpush1.msra.mxu0 0.0
    %1065 = vmatprep.subr.mxu0 0.0
    %1066 = vmatpush1.msra.mxu0 0.0
    %1067 = vmatprep.subr.mxu0 0.0
    %1068 = vmatpush1.msra.mxu0 0.0
    %1069 = vmatprep.subr.mxu0 0.0
    %1070 = vmatpush1.msra.mxu0 0.0
    %1071 = vmatprep.subr.mxu0 0.0
    %1072 = vmatpush1.msra.mxu0 0.0
    %1073 = vmatprep.subr.mxu0 0.0
    %1074 = vmatpush1.msra.mxu0 0.0
    %1075 = vmatprep.subr.mxu0 0.0
    %1076 = vmatpush1.msra.mxu0 0.0
    %1077 = vmatprep.subr.mxu0 0.0
    %1078 = vmatpush1.msra.mxu0 0.0
    %1079 = vmatprep.subr.mxu0 0.0
    %1080 = vmatpush1.msra.mxu0 0.0
    %1081 = vmatprep.subr.mxu0 0.0
    %1082 = vmatpush1.msra.mxu0 0.0
    %1083 = vmatprep.subr.mxu0 0.0
    %1084 = vmatpush1.msra.mxu0 0.0
    %1085 = vmatprep.subr.mxu0 0.0
    %1086 = vmatpush1.msra.mxu0 0.0
    %1087 = vmatprep.subr.mxu0 0.0
    %1088 = vmatpush1.msra.mxu0 0.0
    %1089 = vmatprep.subr.mxu0 0.0
    %1090 = vmatpush1.msra.mxu0 0.0
    %1091 = vmatprep.subr.mxu0 0.0
    %1092 = vmatpush1.msra.mxu0 0.0
    %1093 = vmatprep.mubr.f32.mxu0 0.0
    %v1094 = vand.u32 %v927, 4294901760
    %1095 = vmatmul.mubr.f32.gmra.mrb[0].mxu0 %v1094
    %v1096 = vpop.f32.mrb[0].mxu0
    %v1097 = vadd.f32 %v1005, %v1096
    %v1098 = vpop.f32.mrb[0].mxu0
    %v1099 = vadd.f32 %v1007, %v1098
    %1100 = vdwg.mxu0
    %v1101 = vand.u32 %v922, 4294901760
    %v1102 = vsub.f32 %v922, %v1101
    %1103 = vmatprep.subr.mxu0 %v1102
    %v1104 = vand.u32 %v921, 4294901760
    %v1105 = vsub.f32 %v921, %v1104
    %1106 = vmatpush1.msra.mxu0 %v1105
    %v1107 = vand.u32 %v924, 4294901760
    %v1108 = vsub.f32 %v924, %v1107
    %1109 = vmatprep.subr.mxu0 %v1108
    %v1110 = vand.u32 %v923, 4294901760
    %v1111 = vsub.f32 %v923, %v1110
    %1112 = vmatpush1.msra.mxu0 %v1111
    %1113 = vmatprep.subr.mxu0 0.0
    %1114 = vmatpush1.msra.mxu0 0.0
    %1115 = vmatprep.subr.mxu0 0.0
    %1116 = vmatpush1.msra.mxu0 0.0
    %1117 = vmatprep.subr.mxu0 0.0
    %1118 = vmatpush1.msra.mxu0 0.0
    %1119 = vmatprep.subr.mxu0 0.0
    %1120 = vmatpush1.msra.mxu0 0.0
    %1121 = vmatprep.subr.mxu0 0.0
    %1122 = vmatpush1.msra.mxu0 0.0
    %1123 = vmatprep.subr.mxu0 0.0
    %1124 = vmatpush1.msra.mxu0 0.0
    %1125 = vmatprep.subr.mxu0 0.0
    %1126 = vmatpush1.msra.mxu0 0.0
    %1127 = vmatprep.subr.mxu0 0.0
    %1128 = vmatpush1.msra.mxu0 0.0
    %1129 = vmatprep.subr.mxu0 0.0
    %1130 = vmatpush1.msra.mxu0 0.0
    %1131 = vmatprep.subr.mxu0 0.0
    %1132 = vmatpush1.msra.mxu0 0.0
    %1133 = vmatprep.subr.mxu0 0.0
    %1134 = vmatpush1.msra.mxu0 0.0
    %1135 = vmatprep.subr.mxu0 0.0
    %1136 = vmatpush1.msra.mxu0 0.0
    %1137 = vmatprep.subr.mxu0 0.0
    %1138 = vmatpush1.msra.mxu0 0.0
    %1139 = vmatprep.subr.mxu0 0.0
    %1140 = vmatpush1.msra.mxu0 0.0
    %1141 = vmatprep.subr.mxu0 0.0
    %1142 = vmatpush1.msra.mxu0 0.0
    %1143 = vmatprep.subr.mxu0 0.0
    %1144 = vmatpush1.msra.mxu0 0.0
    %1145 = vmatprep.subr.mxu0 0.0
    %1146 = vmatpush1.msra.mxu0 0.0
    %1147 = vmatprep.subr.mxu0 0.0
    %1148 = vmatpush1.msra.mxu0 0.0
    %1149 = vmatprep.subr.mxu0 0.0
    %1150 = vmatpush1.msra.mxu0 0.0
    %1151 = vmatprep.subr.mxu0 0.0
    %1152 = vmatpush1.msra.mxu0 0.0
    %1153 = vmatprep.subr.mxu0 0.0
    %1154 = vmatpush1.msra.mxu0 0.0
    %1155 = vmatprep.subr.mxu0 0.0
    %1156 = vmatpush1.msra.mxu0 0.0
    %1157 = vmatprep.subr.mxu0 0.0
    %1158 = vmatpush1.msra.mxu0 0.0
    %1159 = vmatprep.subr.mxu0 0.0
    %1160 = vmatpush1.msra.mxu0 0.0
    %1161 = vmatprep.subr.mxu0 0.0
    %1162 = vmatpush1.msra.mxu0 0.0
    %1163 = vmatprep.subr.mxu0 0.0
    %1164 = vmatpush1.msra.mxu0 0.0
    %1165 = vmatprep.subr.mxu0 0.0
    %1166 = vmatpush1.msra.mxu0 0.0
    %1167 = vmatprep.subr.mxu0 0.0
    %1168 = vmatpush1.msra.mxu0 0.0
    %1169 = vmatprep.subr.mxu0 0.0
    %1170 = vmatpush1.msra.mxu0 0.0
    %1171 = vmatprep.subr.mxu0 0.0
    %1172 = vmatpush1.msra.mxu0 0.0
    %1173 = vmatprep.mubr.f32.mxu0 0.0
    %v1174 = vand.u32 %v927, 4294901760
    %v1175 = vsub.f32 %v927, %v1174
    %1176 = vmatmul.mubr.f32.gmra.mrb[0].mxu0 %v1175
    %v1177 = vpop.f32.mrb[0].mxu0
    %v1178 = vadd.f32 %v1097, %v1177
    %v1179 = vpop.f32.mrb[0].mxu0
    %v1180 = vadd.f32 %v1099, %v1179
    %1181 = vdwg.mxu0
    %v1182 = vand.u32 %v922, 4294901760
    %1183 = vmatprep.subr.mxu0 %v1182
    %v1184 = vand.u32 %v921, 4294901760
    %1185 = vmatpush1.msra.mxu0 %v1184
    %v1186 = vand.u32 %v924, 4294901760
    %1187 = vmatprep.subr.mxu0 %v1186
    %v1188 = vand.u32 %v923, 4294901760
    %1189 = vmatpush1.msra.mxu0 %v1188
    %1190 = vmatprep.subr.mxu0 0.0
    %1191 = vmatpush1.msra.mxu0 0.0
    %1192 = vmatprep.subr.mxu0 0.0
    %1193 = vmatpush1.msra.mxu0 0.0
    %1194 = vmatprep.subr.mxu0 0.0
    %1195 = vmatpush1.msra.mxu0 0.0
    %1196 = vmatprep.subr.mxu0 0.0
    %1197 = vmatpush1.msra.mxu0 0.0
    %1198 = vmatprep.subr.mxu0 0.0
    %1199 = vmatpush1.msra.mxu0 0.0
    %1200 = vmatprep.subr.mxu0 0.0
    %1201 = vmatpush1.msra.mxu0 0.0
    %1202 = vmatprep.subr.mxu0 0.0
    %1203 = vmatpush1.msra.mxu0 0.0
    %1204 = vmatprep.subr.mxu0 0.0
    %1205 = vmatpush1.msra.mxu0 0.0
    %1206 = vmatprep.subr.mxu0 0.0
    %1207 = vmatpush1.msra.mxu0 0.0
    %1208 = vmatprep.subr.mxu0 0.0
    %1209 = vmatpush1.msra.mxu0 0.0
    %1210 = vmatprep.subr.mxu0 0.0
    %1211 = vmatpush1.msra.mxu0 0.0
    %1212 = vmatprep.subr.mxu0 0.0
    %1213 = vmatpush1.msra.mxu0 0.0
    %1214 = vmatprep.subr.mxu0 0.0
    %1215 = vmatpush1.msra.mxu0 0.0
    %1216 = vmatprep.subr.mxu0 0.0
    %1217 = vmatpush1.msra.mxu0 0.0
    %1218 = vmatprep.subr.mxu0 0.0
    %1219 = vmatpush1.msra.mxu0 0.0
    %1220 = vmatprep.subr.mxu0 0.0
    %1221 = vmatpush1.msra.mxu0 0.0
    %1222 = vmatprep.subr.mxu0 0.0
    %1223 = vmatpush1.msra.mxu0 0.0
    %1224 = vmatprep.subr.mxu0 0.0
    %1225 = vmatpush1.msra.mxu0 0.0
    %1226 = vmatprep.subr.mxu0 0.0
    %1227 = vmatpush1.msra.mxu0 0.0
    %1228 = vmatprep.subr.mxu0 0.0
    %1229 = vmatpush1.msra.mxu0 0.0
    %1230 = vmatprep.subr.mxu0 0.0
    %1231 = vmatpush1.msra.mxu0 0.0
    %1232 = vmatprep.subr.mxu0 0.0
    %1233 = vmatpush1.msra.mxu0 0.0
    %1234 = vmatprep.subr.mxu0 0.0
    %1235 = vmatpush1.msra.mxu0 0.0
    %1236 = vmatprep.subr.mxu0 0.0
    %1237 = vmatpush1.msra.mxu0 0.0
    %1238 = vmatprep.subr.mxu0 0.0
    %1239 = vmatpush1.msra.mxu0 0.0
    %1240 = vmatprep.subr.mxu0 0.0
    %1241 = vmatpush1.msra.mxu0 0.0
    %1242 = vmatprep.subr.mxu0 0.0
    %1243 = vmatpush1.msra.mxu0 0.0
    %1244 = vmatprep.subr.mxu0 0.0
    %1245 = vmatpush1.msra.mxu0 0.0
    %1246 = vmatprep.subr.mxu0 0.0
    %1247 = vmatpush1.msra.mxu0 0.0
    %1248 = vmatprep.subr.mxu0 0.0
    %1249 = vmatpush1.msra.mxu0 0.0
    %1250 = vmatprep.mubr.f32.mxu0 0.0
    %v1251 = vand.u32 %v927, 4294901760
    %v1252 = vsub.f32 %v927, %v1251
    %v1253 = vand.u32 %v1252, 4294901760
    %1254 = vmatmul.mubr.f32.gmra.mrb[0].mxu0 %v1253
    %v1255 = vpop.f32.mrb[0].mxu0
    %v1256 = vadd.f32 %v1178, %v1255
    %v1257 = vpop.f32.mrb[0].mxu0
    %v1258 = vadd.f32 %v1180, %v1257
    %1259 = vdwg.mxu0
    %v1260 = vand.u32 %v922, 4294901760
    %v1261 = vsub.f32 %v922, %v1260
    %v1262 = vand.u32 %v1261, 4294901760
    %1263 = vmatprep.subr.mxu0 %v1262
    %v1264 = vand.u32 %v921, 4294901760
    %v1265 = vsub.f32 %v921, %v1264
    %v1266 = vand.u32 %v1265, 4294901760
    %1267 = vmatpush1.msra.mxu0 %v1266
    %v1268 = vand.u32 %v924, 4294901760
    %v1269 = vsub.f32 %v924, %v1268
    %v1270 = vand.u32 %v1269, 4294901760
    %1271 = vmatprep.subr.mxu0 %v1270
    %v1272 = vand.u32 %v923, 4294901760
    %v1273 = vsub.f32 %v923, %v1272
    %v1274 = vand.u32 %v1273, 4294901760
    %1275 = vmatpush1.msra.mxu0 %v1274
    %1276 = vmatprep.subr.mxu0 0.0
    %1277 = vmatpush1.msra.mxu0 0.0
    %1278 = vmatprep.subr.mxu0 0.0
    %1279 = vmatpush1.msra.mxu0 0.0
    %1280 = vmatprep.subr.mxu0 0.0
    %1281 = vmatpush1.msra.mxu0 0.0
    %1282 = vmatprep.subr.mxu0 0.0
    %1283 = vmatpush1.msra.mxu0 0.0
    %1284 = vmatprep.subr.mxu0 0.0
    %1285 = vmatpush1.msra.mxu0 0.0
    %1286 = vmatprep.subr.mxu0 0.0
    %1287 = vmatpush1.msra.mxu0 0.0
    %1288 = vmatprep.subr.mxu0 0.0
    %1289 = vmatpush1.msra.mxu0 0.0
    %1290 = vmatprep.subr.mxu0 0.0
    %1291 = vmatpush1.msra.mxu0 0.0
    %1292 = vmatprep.subr.mxu0 0.0
    %1293 = vmatpush1.msra.mxu0 0.0
    %1294 = vmatprep.subr.mxu0 0.0
    %1295 = vmatpush1.msra.mxu0 0.0
    %1296 = vmatprep.subr.mxu0 0.0
    %1297 = vmatpush1.msra.mxu0 0.0
    %1298 = vmatprep.subr.mxu0 0.0
    %1299 = vmatpush1.msra.mxu0 0.0
    %1300 = vmatprep.subr.mxu0 0.0
    %1301 = vmatpush1.msra.mxu0 0.0
    %1302 = vmatprep.subr.mxu0 0.0
    %1303 = vmatpush1.msra.mxu0 0.0
    %1304 = vmatprep.subr.mxu0 0.0
    %1305 = vmatpush1.msra.mxu0 0.0
    %1306 = vmatprep.subr.mxu0 0.0
    %1307 = vmatpush1.msra.mxu0 0.0
    %1308 = vmatprep.subr.mxu0 0.0
    %1309 = vmatpush1.msra.mxu0 0.0
    %1310 = vmatprep.subr.mxu0 0.0
    %1311 = vmatpush1.msra.mxu0 0.0
    %1312 = vmatprep.subr.mxu0 0.0
    %1313 = vmatpush1.msra.mxu0 0.0
    %1314 = vmatprep.subr.mxu0 0.0
    %1315 = vmatpush1.msra.mxu0 0.0
    %1316 = vmatprep.subr.mxu0 0.0
    %1317 = vmatpush1.msra.mxu0 0.0
    %1318 = vmatprep.subr.mxu0 0.0
    %1319 = vmatpush1.msra.mxu0 0.0
    %1320 = vmatprep.subr.mxu0 0.0
    %1321 = vmatpush1.msra.mxu0 0.0
    %1322 = vmatprep.subr.mxu0 0.0
    %1323 = vmatpush1.msra.mxu0 0.0
    %1324 = vmatprep.subr.mxu0 0.0
    %1325 = vmatpush1.msra.mxu0 0.0
    %1326 = vmatprep.subr.mxu0 0.0
    %1327 = vmatpush1.msra.mxu0 0.0
    %1328 = vmatprep.subr.mxu0 0.0
    %1329 = vmatpush1.msra.mxu0 0.0
    %1330 = vmatprep.subr.mxu0 0.0
    %1331 = vmatpush1.msra.mxu0 0.0
    %1332 = vmatprep.subr.mxu0 0.0
    %1333 = vmatpush1.msra.mxu0 0.0
    %1334 = vmatprep.subr.mxu0 0.0
    %1335 = vmatpush1.msra.mxu0 0.0
    %1336 = vmatprep.mubr.f32.mxu0 0.0
    %v1337 = vand.u32 %v927, 4294901760
    %1338 = vmatmul.mubr.f32.gmra.mrb[0].mxu0 %v1337
    %v1339 = vpop.f32.mrb[0].mxu0
    %v1340 = vadd.f32 %v1256, %v1339
    %v1341 = vpop.f32.mrb[0].mxu0
    %v1342 = vadd.f32 %v1258, %v1341
    %1343 = vdwg.mxu0
    %v1344 = vand.u32 %v922, 4294901760
    %1345 = vmatprep.subr.mxu0 %v1344
    %v1346 = vand.u32 %v921, 4294901760
    %1347 = vmatpush1.msra.mxu0 %v1346
    %v1348 = vand.u32 %v924, 4294901760
    %1349 = vmatprep.subr.mxu0 %v1348
    %v1350 = vand.u32 %v923, 4294901760
    %1351 = vmatpush1.msra.mxu0 %v1350
    %1352 = vmatprep.subr.mxu0 0.0
    %1353 = vmatpush1.msra.mxu0 0.0
    %1354 = vmatprep.subr.mxu0 0.0
    %1355 = vmatpush1.msra.mxu0 0.0
    %1356 = vmatprep.subr.mxu0 0.0
    %1357 = vmatpush1.msra.mxu0 0.0
    %1358 = vmatprep.subr.mxu0 0.0
    %1359 = vmatpush1.msra.mxu0 0.0
    %1360 = vmatprep.subr.mxu0 0.0
    %1361 = vmatpush1.msra.mxu0 0.0
    %1362 = vmatprep.subr.mxu0 0.0
    %1363 = vmatpush1.msra.mxu0 0.0
    %1364 = vmatprep.subr.mxu0 0.0
    %1365 = vmatpush1.msra.mxu0 0.0
    %1366 = vmatprep.subr.mxu0 0.0
    %1367 = vmatpush1.msra.mxu0 0.0
    %1368 = vmatprep.subr.mxu0 0.0
    %1369 = vmatpush1.msra.mxu0 0.0
    %1370 = vmatprep.subr.mxu0 0.0
    %1371 = vmatpush1.msra.mxu0 0.0
    %1372 = vmatprep.subr.mxu0 0.0
    %1373 = vmatpush1.msra.mxu0 0.0
    %1374 = vmatprep.subr.mxu0 0.0
    %1375 = vmatpush1.msra.mxu0 0.0
    %1376 = vmatprep.subr.mxu0 0.0
    %1377 = vmatpush1.msra.mxu0 0.0
    %1378 = vmatprep.subr.mxu0 0.0
    %1379 = vmatpush1.msra.mxu0 0.0
    %1380 = vmatprep.subr.mxu0 0.0
    %1381 = vmatpush1.msra.mxu0 0.0
    %1382 = vmatprep.subr.mxu0 0.0
    %1383 = vmatpush1.msra.mxu0 0.0
    %1384 = vmatprep.subr.mxu0 0.0
    %1385 = vmatpush1.msra.mxu0 0.0
    %1386 = vmatprep.subr.mxu0 0.0
    %1387 = vmatpush1.msra.mxu0 0.0
    %1388 = vmatprep.subr.mxu0 0.0
    %1389 = vmatpush1.msra.mxu0 0.0
    %1390 = vmatprep.subr.mxu0 0.0
    %1391 = vmatpush1.msra.mxu0 0.0
    %1392 = vmatprep.subr.mxu0 0.0
    %1393 = vmatpush1.msra.mxu0 0.0
    %1394 = vmatprep.subr.mxu0 0.0
    %1395 = vmatpush1.msra.mxu0 0.0
    %1396 = vmatprep.subr.mxu0 0.0
    %1397 = vmatpush1.msra.mxu0 0.0
    %1398 = vmatprep.subr.mxu0 0.0
    %1399 = vmatpush1.msra.mxu0 0.0
    %1400 = vmatprep.subr.mxu0 0.0
    %1401 = vmatpush1.msra.mxu0 0.0
    %1402 = vmatprep.subr.mxu0 0.0
    %1403 = vmatpush1.msra.mxu0 0.0
    %1404 = vmatprep.subr.mxu0 0.0
    %1405 = vmatpush1.msra.mxu0 0.0
    %1406 = vmatprep.subr.mxu0 0.0
    %1407 = vmatpush1.msra.mxu0 0.0
    %1408 = vmatprep.subr.mxu0 0.0
    %1409 = vmatpush1.msra.mxu0 0.0
    %1410 = vmatprep.subr.mxu0 0.0
    %1411 = vmatpush1.msra.mxu0 0.0
    %1412 = vmatprep.mubr.f32.mxu0 0.0
    %v1413 = vand.u32 %v927, 4294901760
    %1414 = vmatmul.mubr.f32.gmra.mrb[0].mxu0 %v1413
    %v1415 = vpop.f32.mrb[0].mxu0
    %v1416 = vadd.f32 %v1340, %v1415
    %v1417 = vpop.f32.mrb[0].mxu0
    %v1418 = vadd.f32 %v1342, %v1417
    %1419 = vdwg.mxu0
    %v1420 = vsub.f32 %v24, %v1416
    %v1421 = vsub.f32 %v25, %v1418
    %v1422 = vmul.f32 %v1420, %v1420
    %v1423 = vmul.f32 %v1421, %v1421
    %1424 = vmatprep.subr.mxu0 0.0
    %v1425 = vand.u32 %v26, 4294901760
    %1426 = vmatpush1.msra.mxu0 %v1425
    %1427 = vmatprep.subr.mxu0 0.0
    %v1428 = vand.u32 %v27, 4294901760
    %1429 = vmatpush1.msra.mxu0 %v1428
    %1430 = vmatprep.subr.mxu0 0.0
    %v1431 = vand.u32 %v28, 4294901760
    %1432 = vmatpush1.msra.mxu0 %v1431
    %1433 = vmatprep.subr.mxu0 0.0
    %v1434 = vand.u32 %v29, 4294901760
    %1435 = vmatpush1.msra.mxu0 %v1434
    %1436 = vmatprep.subr.mxu0 0.0
    %v1437 = vand.u32 %v30, 4294901760
    %1438 = vmatpush1.msra.mxu0 %v1437
    %1439 = vmatprep.subr.mxu0 0.0
    %v1440 = vand.u32 %v31, 4294901760
    %1441 = vmatpush1.msra.mxu0 %v1440
    %1442 = vmatprep.subr.mxu0 0.0
    %v1443 = vand.u32 %v32, 4294901760
    %1444 = vmatpush1.msra.mxu0 %v1443
    %1445 = vmatprep.subr.mxu0 0.0
    %v1446 = vand.u32 %v33, 4294901760
    %1447 = vmatpush1.msra.mxu0 %v1446
    %1448 = vmatprep.subr.mxu0 0.0
    %v1449 = vand.u32 %v34, 4294901760
    %1450 = vmatpush1.msra.mxu0 %v1449
    %1451 = vmatprep.subr.mxu0 0.0
    %v1452 = vand.u32 %v35, 4294901760
    %1453 = vmatpush1.msra.mxu0 %v1452
    %1454 = vmatprep.subr.mxu0 0.0
    %v1455 = vand.u32 %v36, 4294901760
    %1456 = vmatpush1.msra.mxu0 %v1455
    %1457 = vmatprep.subr.mxu0 0.0
    %v1458 = vand.u32 %v37, 4294901760
    %1459 = vmatpush1.msra.mxu0 %v1458
    %1460 = vmatprep.subr.mxu0 0.0
    %v1461 = vand.u32 %v38, 4294901760
    %1462 = vmatpush1.msra.mxu0 %v1461
    %1463 = vmatprep.subr.mxu0 0.0
    %v1464 = vand.u32 %v39, 4294901760
    %1465 = vmatpush1.msra.mxu0 %v1464
    %1466 = vmatprep.subr.mxu0 0.0
    %v1467 = vand.u32 %v40, 4294901760
    %1468 = vmatpush1.msra.mxu0 %v1467
    %1469 = vmatprep.subr.mxu0 0.0
    %v1470 = vand.u32 %v41, 4294901760
    %1471 = vmatpush1.msra.mxu0 %v1470
    %1472 = vmatprep.subr.mxu0 0.0
    %v1473 = vand.u32 %v42, 4294901760
    %1474 = vmatpush1.msra.mxu0 %v1473
    %1475 = vmatprep.subr.mxu0 0.0
    %v1476 = vand.u32 %v43, 4294901760
    %1477 = vmatpush1.msra.mxu0 %v1476
    %1478 = vmatprep.subr.mxu0 0.0
    %v1479 = vand.u32 %v44, 4294901760
    %1480 = vmatpush1.msra.mxu0 %v1479
    %1481 = vmatprep.subr.mxu0 0.0
    %v1482 = vand.u32 %v45, 4294901760
    %1483 = vmatpush1.msra.mxu0 %v1482
    %1484 = vmatprep.subr.mxu0 0.0
    %v1485 = vand.u32 %v46, 4294901760
    %1486 = vmatpush1.msra.mxu0 %v1485
    %1487 = vmatprep.subr.mxu0 0.0
    %v1488 = vand.u32 %v47, 4294901760
    %1489 = vmatpush1.msra.mxu0 %v1488
    %1490 = vmatprep.subr.mxu0 0.0
    %v1491 = vand.u32 %v48, 4294901760
    %1492 = vmatpush1.msra.mxu0 %v1491
    %1493 = vmatprep.subr.mxu0 0.0
    %v1494 = vand.u32 %v49, 4294901760
    %1495 = vmatpush1.msra.mxu0 %v1494
    %1496 = vmatprep.subr.mxu0 0.0
    %v1497 = vand.u32 %v50, 4294901760
    %1498 = vmatpush1.msra.mxu0 %v1497
    %1499 = vmatprep.subr.mxu0 0.0
    %v1500 = vand.u32 %v51, 4294901760
    %1501 = vmatpush1.msra.mxu0 %v1500
    %1502 = vmatprep.subr.mxu0 0.0
    %v1503 = vand.u32 %v52, 4294901760
    %1504 = vmatpush1.msra.mxu0 %v1503
    %1505 = vmatprep.subr.mxu0 0.0
    %v1506 = vand.u32 %v53, 4294901760
    %1507 = vmatpush1.msra.mxu0 %v1506
    %1508 = vmatprep.subr.mxu0 0.0
    %v1509 = vand.u32 %v54, 4294901760
    %1510 = vmatpush1.msra.mxu0 %v1509
    %1511 = vmatprep.subr.mxu0 0.0
    %v1512 = vand.u32 %v55, 4294901760
    %1513 = vmatpush1.msra.mxu0 %v1512
    %1514 = vmatprep.subr.mxu0 0.0
    %v1515 = vand.u32 %v56, 4294901760
    %1516 = vmatpush1.msra.mxu0 %v1515
    %1517 = vmatprep.subr.mxu0 0.0
    %v1518 = vand.u32 %v57, 4294901760
    %1519 = vmatpush1.msra.mxu0 %v1518
    %v1520 = vand.u32 %v1423, 4294901760
    %v1521 = vsub.f32 %v1423, %v1520
    %v1522 = vand.u32 %v1521, 4294901760
    %v1523 = vsub.f32 %v1521, %v1522
    %v1524 = vand.u32 %v1523, 4294901760
    %1525 = vmatprep.mubr.f32.mxu0 %v1524
    %v1526 = vand.u32 %v1422, 4294901760
    %v1527 = vsub.f32 %v1422, %v1526
    %v1528 = vand.u32 %v1527, 4294901760
    %v1529 = vsub.f32 %v1527, %v1528
    %v1530 = vand.u32 %v1529, 4294901760
    %1531 = vmatmul.mubr.f32.gmra.mrb[0].mxu0 %v1530
    %v1532 = vpop.f32.mrb[0].mxu0
    %v1533 = vadd.f32 0.0, %v1532
    %v1534 = vpop.f32.mrb[0].mxu0
    %1535 = vdwg.mxu0
    %1536 = vmatprep.subr.mxu0 0.0
    %v1537 = vand.u32 %v26, 4294901760
    %v1538 = vsub.f32 %v26, %v1537
    %v1539 = vand.u32 %v1538, 4294901760
    %v1540 = vsub.f32 %v1538, %v1539
    %v1541 = vand.u32 %v1540, 4294901760
    %1542 = vmatpush1.msra.mxu0 %v1541
    %1543 = vmatprep.subr.mxu0 0.0
    %v1544 = vand.u32 %v27, 4294901760
    %v1545 = vsub.f32 %v27, %v1544
    %v1546 = vand.u32 %v1545, 4294901760
    %v1547 = vsub.f32 %v1545, %v1546
    %v1548 = vand.u32 %v1547, 4294901760
    %1549 = vmatpush1.msra.mxu0 %v1548
    %1550 = vmatprep.subr.mxu0 0.0
    %v1551 = vand.u32 %v28, 4294901760
    %v1552 = vsub.f32 %v28, %v1551
    %v1553 = vand.u32 %v1552, 4294901760
    %v1554 = vsub.f32 %v1552, %v1553
    %v1555 = vand.u32 %v1554, 4294901760
    %1556 = vmatpush1.msra.mxu0 %v1555
    %1557 = vmatprep.subr.mxu0 0.0
    %v1558 = vand.u32 %v29, 4294901760
    %v1559 = vsub.f32 %v29, %v1558
    %v1560 = vand.u32 %v1559, 4294901760
    %v1561 = vsub.f32 %v1559, %v1560
    %v1562 = vand.u32 %v1561, 4294901760
    %1563 = vmatpush1.msra.mxu0 %v1562
    %1564 = vmatprep.subr.mxu0 0.0
    %v1565 = vand.u32 %v30, 4294901760
    %v1566 = vsub.f32 %v30, %v1565
    %v1567 = vand.u32 %v1566, 4294901760
    %v1568 = vsub.f32 %v1566, %v1567
    %v1569 = vand.u32 %v1568, 4294901760
    %1570 = vmatpush1.msra.mxu0 %v1569
    %1571 = vmatprep.subr.mxu0 0.0
    %v1572 = vand.u32 %v31, 4294901760
    %v1573 = vsub.f32 %v31, %v1572
    %v1574 = vand.u32 %v1573, 4294901760
    %v1575 = vsub.f32 %v1573, %v1574
    %v1576 = vand.u32 %v1575, 4294901760
    %1577 = vmatpush1.msra.mxu0 %v1576
    %1578 = vmatprep.subr.mxu0 0.0
    %v1579 = vand.u32 %v32, 4294901760
    %v1580 = vsub.f32 %v32, %v1579
    %v1581 = vand.u32 %v1580, 4294901760
    %v1582 = vsub.f32 %v1580, %v1581
    %v1583 = vand.u32 %v1582, 4294901760
    %1584 = vmatpush1.msra.mxu0 %v1583
    %1585 = vmatprep.subr.mxu0 0.0
    %v1586 = vand.u32 %v33, 4294901760
    %v1587 = vsub.f32 %v33, %v1586
    %v1588 = vand.u32 %v1587, 4294901760
    %v1589 = vsub.f32 %v1587, %v1588
    %v1590 = vand.u32 %v1589, 4294901760
    %1591 = vmatpush1.msra.mxu0 %v1590
    %1592 = vmatprep.subr.mxu0 0.0
    %v1593 = vand.u32 %v34, 4294901760
    %v1594 = vsub.f32 %v34, %v1593
    %v1595 = vand.u32 %v1594, 4294901760
    %v1596 = vsub.f32 %v1594, %v1595
    %v1597 = vand.u32 %v1596, 4294901760
    %1598 = vmatpush1.msra.mxu0 %v1597
    %1599 = vmatprep.subr.mxu0 0.0
    %v1600 = vand.u32 %v35, 4294901760
    %v1601 = vsub.f32 %v35, %v1600
    %v1602 = vand.u32 %v1601, 4294901760
    %v1603 = vsub.f32 %v1601, %v1602
    %v1604 = vand.u32 %v1603, 4294901760
    %1605 = vmatpush1.msra.mxu0 %v1604
    %1606 = vmatprep.subr.mxu0 0.0
    %v1607 = vand.u32 %v36, 4294901760
    %v1608 = vsub.f32 %v36, %v1607
    %v1609 = vand.u32 %v1608, 4294901760
    %v1610 = vsub.f32 %v1608, %v1609
    %v1611 = vand.u32 %v1610, 4294901760
    %1612 = vmatpush1.msra.mxu0 %v1611
    %1613 = vmatprep.subr.mxu0 0.0
    %v1614 = vand.u32 %v37, 4294901760
    %v1615 = vsub.f32 %v37, %v1614
    %v1616 = vand.u32 %v1615, 4294901760
    %v1617 = vsub.f32 %v1615, %v1616
    %v1618 = vand.u32 %v1617, 4294901760
    %1619 = vmatpush1.msra.mxu0 %v1618
    %1620 = vmatprep.subr.mxu0 0.0
    %v1621 = vand.u32 %v38, 4294901760
    %v1622 = vsub.f32 %v38, %v1621
    %v1623 = vand.u32 %v1622, 4294901760
    %v1624 = vsub.f32 %v1622, %v1623
    %v1625 = vand.u32 %v1624, 4294901760
    %1626 = vmatpush1.msra.mxu0 %v1625
    %1627 = vmatprep.subr.mxu0 0.0
    %v1628 = vand.u32 %v39, 4294901760
    %v1629 = vsub.f32 %v39, %v1628
    %v1630 = vand.u32 %v1629, 4294901760
    %v1631 = vsub.f32 %v1629, %v1630
    %v1632 = vand.u32 %v1631, 4294901760
    %1633 = vmatpush1.msra.mxu0 %v1632
    %1634 = vmatprep.subr.mxu0 0.0
    %v1635 = vand.u32 %v40, 4294901760
    %v1636 = vsub.f32 %v40, %v1635
    %v1637 = vand.u32 %v1636, 4294901760
    %v1638 = vsub.f32 %v1636, %v1637
    %v1639 = vand.u32 %v1638, 4294901760
    %1640 = vmatpush1.msra.mxu0 %v1639
    %1641 = vmatprep.subr.mxu0 0.0
    %v1642 = vand.u32 %v41, 4294901760
    %v1643 = vsub.f32 %v41, %v1642
    %v1644 = vand.u32 %v1643, 4294901760
    %v1645 = vsub.f32 %v1643, %v1644
    %v1646 = vand.u32 %v1645, 4294901760
    %1647 = vmatpush1.msra.mxu0 %v1646
    %1648 = vmatprep.subr.mxu0 0.0
    %v1649 = vand.u32 %v42, 4294901760
    %v1650 = vsub.f32 %v42, %v1649
    %v1651 = vand.u32 %v1650, 4294901760
    %v1652 = vsub.f32 %v1650, %v1651
    %v1653 = vand.u32 %v1652, 4294901760
    %1654 = vmatpush1.msra.mxu0 %v1653
    %1655 = vmatprep.subr.mxu0 0.0
    %v1656 = vand.u32 %v43, 4294901760
    %v1657 = vsub.f32 %v43, %v1656
    %v1658 = vand.u32 %v1657, 4294901760
    %v1659 = vsub.f32 %v1657, %v1658
    %v1660 = vand.u32 %v1659, 4294901760
    %1661 = vmatpush1.msra.mxu0 %v1660
    %1662 = vmatprep.subr.mxu0 0.0
    %v1663 = vand.u32 %v44, 4294901760
    %v1664 = vsub.f32 %v44, %v1663
    %v1665 = vand.u32 %v1664, 4294901760
    %v1666 = vsub.f32 %v1664, %v1665
    %v1667 = vand.u32 %v1666, 4294901760
    %1668 = vmatpush1.msra.mxu0 %v1667
    %1669 = vmatprep.subr.mxu0 0.0
    %v1670 = vand.u32 %v45, 4294901760
    %v1671 = vsub.f32 %v45, %v1670
    %v1672 = vand.u32 %v1671, 4294901760
    %v1673 = vsub.f32 %v1671, %v1672
    %v1674 = vand.u32 %v1673, 4294901760
    %1675 = vmatpush1.msra.mxu0 %v1674
    %1676 = vmatprep.subr.mxu0 0.0
    %v1677 = vand.u32 %v46, 4294901760
    %v1678 = vsub.f32 %v46, %v1677
    %v1679 = vand.u32 %v1678, 4294901760
    %v1680 = vsub.f32 %v1678, %v1679
    %v1681 = vand.u32 %v1680, 4294901760
    %1682 = vmatpush1.msra.mxu0 %v1681
    %1683 = vmatprep.subr.mxu0 0.0
    %v1684 = vand.u32 %v47, 4294901760
    %v1685 = vsub.f32 %v47, %v1684
    %v1686 = vand.u32 %v1685, 4294901760
    %v1687 = vsub.f32 %v1685, %v1686
    %v1688 = vand.u32 %v1687, 4294901760
    %1689 = vmatpush1.msra.mxu0 %v1688
    %1690 = vmatprep.subr.mxu0 0.0
    %v1691 = vand.u32 %v48, 4294901760
    %v1692 = vsub.f32 %v48, %v1691
    %v1693 = vand.u32 %v1692, 4294901760
    %v1694 = vsub.f32 %v1692, %v1693
    %v1695 = vand.u32 %v1694, 4294901760
    %1696 = vmatpush1.msra.mxu0 %v1695
    %1697 = vmatprep.subr.mxu0 0.0
    %v1698 = vand.u32 %v49, 4294901760
    %v1699 = vsub.f32 %v49, %v1698
    %v1700 = vand.u32 %v1699, 4294901760
    %v1701 = vsub.f32 %v1699, %v1700
    %v1702 = vand.u32 %v1701, 4294901760
    %1703 = vmatpush1.msra.mxu0 %v1702
    %1704 = vmatprep.subr.mxu0 0.0
    %v1705 = vand.u32 %v50, 4294901760
    %v1706 = vsub.f32 %v50, %v1705
    %v1707 = vand.u32 %v1706, 4294901760
    %v1708 = vsub.f32 %v1706, %v1707
    %v1709 = vand.u32 %v1708, 4294901760
    %1710 = vmatpush1.msra.mxu0 %v1709
    %1711 = vmatprep.subr.mxu0 0.0
    %v1712 = vand.u32 %v51, 4294901760
    %v1713 = vsub.f32 %v51, %v1712
    %v1714 = vand.u32 %v1713, 4294901760
    %v1715 = vsub.f32 %v1713, %v1714
    %v1716 = vand.u32 %v1715, 4294901760
    %1717 = vmatpush1.msra.mxu0 %v1716
    %1718 = vmatprep.subr.mxu0 0.0
    %v1719 = vand.u32 %v52, 4294901760
    %v1720 = vsub.f32 %v52, %v1719
    %v1721 = vand.u32 %v1720, 4294901760
    %v1722 = vsub.f32 %v1720, %v1721
    %v1723 = vand.u32 %v1722, 4294901760
    %1724 = vmatpush1.msra.mxu0 %v1723
    %1725 = vmatprep.subr.mxu0 0.0
    %v1726 = vand.u32 %v53, 4294901760
    %v1727 = vsub.f32 %v53, %v1726
    %v1728 = vand.u32 %v1727, 4294901760
    %v1729 = vsub.f32 %v1727, %v1728
    %v1730 = vand.u32 %v1729, 4294901760
    %1731 = vmatpush1.msra.mxu0 %v1730
    %1732 = vmatprep.subr.mxu0 0.0
    %v1733 = vand.u32 %v54, 4294901760
    %v1734 = vsub.f32 %v54, %v1733
    %v1735 = vand.u32 %v1734, 4294901760
    %v1736 = vsub.f32 %v1734, %v1735
    %v1737 = vand.u32 %v1736, 4294901760
    %1738 = vmatpush1.msra.mxu0 %v1737
    %1739 = vmatprep.subr.mxu0 0.0
    %v1740 = vand.u32 %v55, 4294901760
    %v1741 = vsub.f32 %v55, %v1740
    %v1742 = vand.u32 %v1741, 4294901760
    %v1743 = vsub.f32 %v1741, %v1742
    %v1744 = vand.u32 %v1743, 4294901760
    %1745 = vmatpush1.msra.mxu0 %v1744
    %1746 = vmatprep.subr.mxu0 0.0
    %v1747 = vand.u32 %v56, 4294901760
    %v1748 = vsub.f32 %v56, %v1747
    %v1749 = vand.u32 %v1748, 4294901760
    %v1750 = vsub.f32 %v1748, %v1749
    %v1751 = vand.u32 %v1750, 4294901760
    %1752 = vmatpush1.msra.mxu0 %v1751
    %1753 = vmatprep.subr.mxu0 0.0
    %v1754 = vand.u32 %v57, 4294901760
    %v1755 = vsub.f32 %v57, %v1754
    %v1756 = vand.u32 %v1755, 4294901760
    %v1757 = vsub.f32 %v1755, %v1756
    %v1758 = vand.u32 %v1757, 4294901760
    %1759 = vmatpush1.msra.mxu0 %v1758
    %v1760 = vand.u32 %v1423, 4294901760
    %1761 = vmatprep.mubr.f32.mxu0 %v1760
    %v1762 = vand.u32 %v1422, 4294901760
    %1763 = vmatmul.mubr.f32.gmra.mrb[0].mxu0 %v1762
    %v1764 = vpop.f32.mrb[0].mxu0
    %v1765 = vadd.f32 %v1533, %v1764
    %v1766 = vpop.f32.mrb[0].mxu0
    %1767 = vdwg.mxu0
    %1768 = vmatprep.subr.mxu0 0.0
    %v1769 = vand.u32 %v26, 4294901760
    %v1770 = vsub.f32 %v26, %v1769
    %1771 = vmatpush1.msra.mxu0 %v1770
    %1772 = vmatprep.subr.mxu0 0.0
    %v1773 = vand.u32 %v27, 4294901760
    %v1774 = vsub.f32 %v27, %v1773
    %1775 = vmatpush1.msra.mxu0 %v1774
    %1776 = vmatprep.subr.mxu0 0.0
    %v1777 = vand.u32 %v28, 4294901760
    %v1778 = vsub.f32 %v28, %v1777
    %1779 = vmatpush1.msra.mxu0 %v1778
    %1780 = vmatprep.subr.mxu0 0.0
    %v1781 = vand.u32 %v29, 4294901760
    %v1782 = vsub.f32 %v29, %v1781
    %1783 = vmatpush1.msra.mxu0 %v1782
    %1784 = vmatprep.subr.mxu0 0.0
    %v1785 = vand.u32 %v30, 4294901760
    %v1786 = vsub.f32 %v30, %v1785
    %1787 = vmatpush1.msra.mxu0 %v1786
    %1788 = vmatprep.subr.mxu0 0.0
    %v1789 = vand.u32 %v31, 4294901760
    %v1790 = vsub.f32 %v31, %v1789
    %1791 = vmatpush1.msra.mxu0 %v1790
    %1792 = vmatprep.subr.mxu0 0.0
    %v1793 = vand.u32 %v32, 4294901760
    %v1794 = vsub.f32 %v32, %v1793
    %1795 = vmatpush1.msra.mxu0 %v1794
    %1796 = vmatprep.subr.mxu0 0.0
    %v1797 = vand.u32 %v33, 4294901760
    %v1798 = vsub.f32 %v33, %v1797
    %1799 = vmatpush1.msra.mxu0 %v1798
    %1800 = vmatprep.subr.mxu0 0.0
    %v1801 = vand.u32 %v34, 4294901760
    %v1802 = vsub.f32 %v34, %v1801
    %1803 = vmatpush1.msra.mxu0 %v1802
    %1804 = vmatprep.subr.mxu0 0.0
    %v1805 = vand.u32 %v35, 4294901760
    %v1806 = vsub.f32 %v35, %v1805
    %1807 = vmatpush1.msra.mxu0 %v1806
    %1808 = vmatprep.subr.mxu0 0.0
    %v1809 = vand.u32 %v36, 4294901760
    %v1810 = vsub.f32 %v36, %v1809
    %1811 = vmatpush1.msra.mxu0 %v1810
    %1812 = vmatprep.subr.mxu0 0.0
    %v1813 = vand.u32 %v37, 4294901760
    %v1814 = vsub.f32 %v37, %v1813
    %1815 = vmatpush1.msra.mxu0 %v1814
    %1816 = vmatprep.subr.mxu0 0.0
    %v1817 = vand.u32 %v38, 4294901760
    %v1818 = vsub.f32 %v38, %v1817
    %1819 = vmatpush1.msra.mxu0 %v1818
    %1820 = vmatprep.subr.mxu0 0.0
    %v1821 = vand.u32 %v39, 4294901760
    %v1822 = vsub.f32 %v39, %v1821
    %1823 = vmatpush1.msra.mxu0 %v1822
    %1824 = vmatprep.subr.mxu0 0.0
    %v1825 = vand.u32 %v40, 4294901760
    %v1826 = vsub.f32 %v40, %v1825
    %1827 = vmatpush1.msra.mxu0 %v1826
    %1828 = vmatprep.subr.mxu0 0.0
    %v1829 = vand.u32 %v41, 4294901760
    %v1830 = vsub.f32 %v41, %v1829
    %1831 = vmatpush1.msra.mxu0 %v1830
    %1832 = vmatprep.subr.mxu0 0.0
    %v1833 = vand.u32 %v42, 4294901760
    %v1834 = vsub.f32 %v42, %v1833
    %1835 = vmatpush1.msra.mxu0 %v1834
    %1836 = vmatprep.subr.mxu0 0.0
    %v1837 = vand.u32 %v43, 4294901760
    %v1838 = vsub.f32 %v43, %v1837
    %1839 = vmatpush1.msra.mxu0 %v1838
    %1840 = vmatprep.subr.mxu0 0.0
    %v1841 = vand.u32 %v44, 4294901760
    %v1842 = vsub.f32 %v44, %v1841
    %1843 = vmatpush1.msra.mxu0 %v1842
    %1844 = vmatprep.subr.mxu0 0.0
    %v1845 = vand.u32 %v45, 4294901760
    %v1846 = vsub.f32 %v45, %v1845
    %1847 = vmatpush1.msra.mxu0 %v1846
    %1848 = vmatprep.subr.mxu0 0.0
    %v1849 = vand.u32 %v46, 4294901760
    %v1850 = vsub.f32 %v46, %v1849
    %1851 = vmatpush1.msra.mxu0 %v1850
    %1852 = vmatprep.subr.mxu0 0.0
    %v1853 = vand.u32 %v47, 4294901760
    %v1854 = vsub.f32 %v47, %v1853
    %1855 = vmatpush1.msra.mxu0 %v1854
    %1856 = vmatprep.subr.mxu0 0.0
    %v1857 = vand.u32 %v48, 4294901760
    %v1858 = vsub.f32 %v48, %v1857
    %1859 = vmatpush1.msra.mxu0 %v1858
    %1860 = vmatprep.subr.mxu0 0.0
    %v1861 = vand.u32 %v49, 4294901760
    %v1862 = vsub.f32 %v49, %v1861
    %1863 = vmatpush1.msra.mxu0 %v1862
    %1864 = vmatprep.subr.mxu0 0.0
    %v1865 = vand.u32 %v50, 4294901760
    %v1866 = vsub.f32 %v50, %v1865
    %1867 = vmatpush1.msra.mxu0 %v1866
    %1868 = vmatprep.subr.mxu0 0.0
    %v1869 = vand.u32 %v51, 4294901760
    %v1870 = vsub.f32 %v51, %v1869
    %1871 = vmatpush1.msra.mxu0 %v1870
    %1872 = vmatprep.subr.mxu0 0.0
    %v1873 = vand.u32 %v52, 4294901760
    %v1874 = vsub.f32 %v52, %v1873
    %1875 = vmatpush1.msra.mxu0 %v1874
    %1876 = vmatprep.subr.mxu0 0.0
    %v1877 = vand.u32 %v53, 4294901760
    %v1878 = vsub.f32 %v53, %v1877
    %1879 = vmatpush1.msra.mxu0 %v1878
    %1880 = vmatprep.subr.mxu0 0.0
    %v1881 = vand.u32 %v54, 4294901760
    %v1882 = vsub.f32 %v54, %v1881
    %1883 = vmatpush1.msra.mxu0 %v1882
    %1884 = vmatprep.subr.mxu0 0.0
    %v1885 = vand.u32 %v55, 4294901760
    %v1886 = vsub.f32 %v55, %v1885
    %1887 = vmatpush1.msra.mxu0 %v1886
    %1888 = vmatprep.subr.mxu0 0.0
    %v1889 = vand.u32 %v56, 4294901760
    %v1890 = vsub.f32 %v56, %v1889
    %1891 = vmatpush1.msra.mxu0 %v1890
    %1892 = vmatprep.subr.mxu0 0.0
    %v1893 = vand.u32 %v57, 4294901760
    %v1894 = vsub.f32 %v57, %v1893
    %1895 = vmatpush1.msra.mxu0 %v1894
    %v1896 = vand.u32 %v1423, 4294901760
    %v1897 = vsub.f32 %v1423, %v1896
    %1898 = vmatprep.mubr.f32.mxu0 %v1897
    %v1899 = vand.u32 %v1422, 4294901760
    %v1900 = vsub.f32 %v1422, %v1899
    %1901 = vmatmul.mubr.f32.gmra.mrb[0].mxu0 %v1900
    %v1902 = vpop.f32.mrb[0].mxu0
    %v1903 = vadd.f32 %v1765, %v1902
    %v1904 = vpop.f32.mrb[0].mxu0
    %1905 = vdwg.mxu0
    %1906 = vmatprep.subr.mxu0 0.0
    %v1907 = vand.u32 %v26, 4294901760
    %1908 = vmatpush1.msra.mxu0 %v1907
    %1909 = vmatprep.subr.mxu0 0.0
    %v1910 = vand.u32 %v27, 4294901760
    %1911 = vmatpush1.msra.mxu0 %v1910
    %1912 = vmatprep.subr.mxu0 0.0
    %v1913 = vand.u32 %v28, 4294901760
    %1914 = vmatpush1.msra.mxu0 %v1913
    %1915 = vmatprep.subr.mxu0 0.0
    %v1916 = vand.u32 %v29, 4294901760
    %1917 = vmatpush1.msra.mxu0 %v1916
    %1918 = vmatprep.subr.mxu0 0.0
    %v1919 = vand.u32 %v30, 4294901760
    %1920 = vmatpush1.msra.mxu0 %v1919
    %1921 = vmatprep.subr.mxu0 0.0
    %v1922 = vand.u32 %v31, 4294901760
    %1923 = vmatpush1.msra.mxu0 %v1922
    %1924 = vmatprep.subr.mxu0 0.0
    %v1925 = vand.u32 %v32, 4294901760
    %1926 = vmatpush1.msra.mxu0 %v1925
    %1927 = vmatprep.subr.mxu0 0.0
    %v1928 = vand.u32 %v33, 4294901760
    %1929 = vmatpush1.msra.mxu0 %v1928
    %1930 = vmatprep.subr.mxu0 0.0
    %v1931 = vand.u32 %v34, 4294901760
    %1932 = vmatpush1.msra.mxu0 %v1931
    %1933 = vmatprep.subr.mxu0 0.0
    %v1934 = vand.u32 %v35, 4294901760
    %1935 = vmatpush1.msra.mxu0 %v1934
    %1936 = vmatprep.subr.mxu0 0.0
    %v1937 = vand.u32 %v36, 4294901760
    %1938 = vmatpush1.msra.mxu0 %v1937
    %1939 = vmatprep.subr.mxu0 0.0
    %v1940 = vand.u32 %v37, 4294901760
    %1941 = vmatpush1.msra.mxu0 %v1940
    %1942 = vmatprep.subr.mxu0 0.0
    %v1943 = vand.u32 %v38, 4294901760
    %1944 = vmatpush1.msra.mxu0 %v1943
    %1945 = vmatprep.subr.mxu0 0.0
    %v1946 = vand.u32 %v39, 4294901760
    %1947 = vmatpush1.msra.mxu0 %v1946
    %1948 = vmatprep.subr.mxu0 0.0
    %v1949 = vand.u32 %v40, 4294901760
    %1950 = vmatpush1.msra.mxu0 %v1949
    %1951 = vmatprep.subr.mxu0 0.0
    %v1952 = vand.u32 %v41, 4294901760
    %1953 = vmatpush1.msra.mxu0 %v1952
    %1954 = vmatprep.subr.mxu0 0.0
    %v1955 = vand.u32 %v42, 4294901760
    %1956 = vmatpush1.msra.mxu0 %v1955
    %1957 = vmatprep.subr.mxu0 0.0
    %v1958 = vand.u32 %v43, 4294901760
    %1959 = vmatpush1.msra.mxu0 %v1958
    %1960 = vmatprep.subr.mxu0 0.0
    %v1961 = vand.u32 %v44, 4294901760
    %1962 = vmatpush1.msra.mxu0 %v1961
    %1963 = vmatprep.subr.mxu0 0.0
    %v1964 = vand.u32 %v45, 4294901760
    %1965 = vmatpush1.msra.mxu0 %v1964
    %1966 = vmatprep.subr.mxu0 0.0
    %v1967 = vand.u32 %v46, 4294901760
    %1968 = vmatpush1.msra.mxu0 %v1967
    %1969 = vmatprep.subr.mxu0 0.0
    %v1970 = vand.u32 %v47, 4294901760
    %1971 = vmatpush1.msra.mxu0 %v1970
    %1972 = vmatprep.subr.mxu0 0.0
    %v1973 = vand.u32 %v48, 4294901760
    %1974 = vmatpush1.msra.mxu0 %v1973
    %1975 = vmatprep.subr.mxu0 0.0
    %v1976 = vand.u32 %v49, 4294901760
    %1977 = vmatpush1.msra.mxu0 %v1976
    %1978 = vmatprep.subr.mxu0 0.0
    %v1979 = vand.u32 %v50, 4294901760
    %1980 = vmatpush1.msra.mxu0 %v1979
    %1981 = vmatprep.subr.mxu0 0.0
    %v1982 = vand.u32 %v51, 4294901760
    %1983 = vmatpush1.msra.mxu0 %v1982
    %1984 = vmatprep.subr.mxu0 0.0
    %v1985 = vand.u32 %v52, 4294901760
    %1986 = vmatpush1.msra.mxu0 %v1985
    %1987 = vmatprep.subr.mxu0 0.0
    %v1988 = vand.u32 %v53, 4294901760
    %1989 = vmatpush1.msra.mxu0 %v1988
    %1990 = vmatprep.subr.mxu0 0.0
    %v1991 = vand.u32 %v54, 4294901760
    %1992 = vmatpush1.msra.mxu0 %v1991
    %1993 = vmatprep.subr.mxu0 0.0
    %v1994 = vand.u32 %v55, 4294901760
    %1995 = vmatpush1.msra.mxu0 %v1994
    %1996 = vmatprep.subr.mxu0 0.0
    %v1997 = vand.u32 %v56, 4294901760
    %1998 = vmatpush1.msra.mxu0 %v1997
    %1999 = vmatprep.subr.mxu0 0.0
    %v2000 = vand.u32 %v57, 4294901760
    %2001 = vmatpush1.msra.mxu0 %v2000
    %v2002 = vand.u32 %v1423, 4294901760
    %v2003 = vsub.f32 %v1423, %v2002
    %v2004 = vand.u32 %v2003, 4294901760
    %2005 = vmatprep.mubr.f32.mxu0 %v2004
    %v2006 = vand.u32 %v1422, 4294901760
    %v2007 = vsub.f32 %v1422, %v2006
    %v2008 = vand.u32 %v2007, 4294901760
    %2009 = vmatmul.mubr.f32.gmra.mrb[0].mxu0 %v2008
    %v2010 = vpop.f32.mrb[0].mxu0
    %v2011 = vadd.f32 %v1903, %v2010
    %v2012 = vpop.f32.mrb[0].mxu0
    %2013 = vdwg.mxu0
    %2014 = vmatprep.subr.mxu0 0.0
    %v2015 = vand.u32 %v26, 4294901760
    %v2016 = vsub.f32 %v26, %v2015
    %v2017 = vand.u32 %v2016, 4294901760
    %2018 = vmatpush1.msra.mxu0 %v2017
    %2019 = vmatprep.subr.mxu0 0.0
    %v2020 = vand.u32 %v27, 4294901760
    %v2021 = vsub.f32 %v27, %v2020
    %v2022 = vand.u32 %v2021, 4294901760
    %2023 = vmatpush1.msra.mxu0 %v2022
    %2024 = vmatprep.subr.mxu0 0.0
    %v2025 = vand.u32 %v28, 4294901760
    %v2026 = vsub.f32 %v28, %v2025
    %v2027 = vand.u32 %v2026, 4294901760
    %2028 = vmatpush1.msra.mxu0 %v2027
    %2029 = vmatprep.subr.mxu0 0.0
    %v2030 = vand.u32 %v29, 4294901760
    %v2031 = vsub.f32 %v29, %v2030
    %v2032 = vand.u32 %v2031, 4294901760
    %2033 = vmatpush1.msra.mxu0 %v2032
    %2034 = vmatprep.subr.mxu0 0.0
    %v2035 = vand.u32 %v30, 4294901760
    %v2036 = vsub.f32 %v30, %v2035
    %v2037 = vand.u32 %v2036, 4294901760
    %2038 = vmatpush1.msra.mxu0 %v2037
    %2039 = vmatprep.subr.mxu0 0.0
    %v2040 = vand.u32 %v31, 4294901760
    %v2041 = vsub.f32 %v31, %v2040
    %v2042 = vand.u32 %v2041, 4294901760
    %2043 = vmatpush1.msra.mxu0 %v2042
    %2044 = vmatprep.subr.mxu0 0.0
    %v2045 = vand.u32 %v32, 4294901760
    %v2046 = vsub.f32 %v32, %v2045
    %v2047 = vand.u32 %v2046, 4294901760
    %2048 = vmatpush1.msra.mxu0 %v2047
    %2049 = vmatprep.subr.mxu0 0.0
    %v2050 = vand.u32 %v33, 4294901760
    %v2051 = vsub.f32 %v33, %v2050
    %v2052 = vand.u32 %v2051, 4294901760
    %2053 = vmatpush1.msra.mxu0 %v2052
    %2054 = vmatprep.subr.mxu0 0.0
    %v2055 = vand.u32 %v34, 4294901760
    %v2056 = vsub.f32 %v34, %v2055
    %v2057 = vand.u32 %v2056, 4294901760
    %2058 = vmatpush1.msra.mxu0 %v2057
    %2059 = vmatprep.subr.mxu0 0.0
    %v2060 = vand.u32 %v35, 4294901760
    %v2061 = vsub.f32 %v35, %v2060
    %v2062 = vand.u32 %v2061, 4294901760
    %2063 = vmatpush1.msra.mxu0 %v2062
    %2064 = vmatprep.subr.mxu0 0.0
    %v2065 = vand.u32 %v36, 4294901760
    %v2066 = vsub.f32 %v36, %v2065
    %v2067 = vand.u32 %v2066, 4294901760
    %2068 = vmatpush1.msra.mxu0 %v2067
    %2069 = vmatprep.subr.mxu0 0.0
    %v2070 = vand.u32 %v37, 4294901760
    %v2071 = vsub.f32 %v37, %v2070
    %v2072 = vand.u32 %v2071, 4294901760
    %2073 = vmatpush1.msra.mxu0 %v2072
    %2074 = vmatprep.subr.mxu0 0.0
    %v2075 = vand.u32 %v38, 4294901760
    %v2076 = vsub.f32 %v38, %v2075
    %v2077 = vand.u32 %v2076, 4294901760
    %2078 = vmatpush1.msra.mxu0 %v2077
    %2079 = vmatprep.subr.mxu0 0.0
    %v2080 = vand.u32 %v39, 4294901760
    %v2081 = vsub.f32 %v39, %v2080
    %v2082 = vand.u32 %v2081, 4294901760
    %2083 = vmatpush1.msra.mxu0 %v2082
    %2084 = vmatprep.subr.mxu0 0.0
    %v2085 = vand.u32 %v40, 4294901760
    %v2086 = vsub.f32 %v40, %v2085
    %v2087 = vand.u32 %v2086, 4294901760
    %2088 = vmatpush1.msra.mxu0 %v2087
    %2089 = vmatprep.subr.mxu0 0.0
    %v2090 = vand.u32 %v41, 4294901760
    %v2091 = vsub.f32 %v41, %v2090
    %v2092 = vand.u32 %v2091, 4294901760
    %2093 = vmatpush1.msra.mxu0 %v2092
    %2094 = vmatprep.subr.mxu0 0.0
    %v2095 = vand.u32 %v42, 4294901760
    %v2096 = vsub.f32 %v42, %v2095
    %v2097 = vand.u32 %v2096, 4294901760
    %2098 = vmatpush1.msra.mxu0 %v2097
    %2099 = vmatprep.subr.mxu0 0.0
    %v2100 = vand.u32 %v43, 4294901760
    %v2101 = vsub.f32 %v43, %v2100
    %v2102 = vand.u32 %v2101, 4294901760
    %2103 = vmatpush1.msra.mxu0 %v2102
    %2104 = vmatprep.subr.mxu0 0.0
    %v2105 = vand.u32 %v44, 4294901760
    %v2106 = vsub.f32 %v44, %v2105
    %v2107 = vand.u32 %v2106, 4294901760
    %2108 = vmatpush1.msra.mxu0 %v2107
    %2109 = vmatprep.subr.mxu0 0.0
    %v2110 = vand.u32 %v45, 4294901760
    %v2111 = vsub.f32 %v45, %v2110
    %v2112 = vand.u32 %v2111, 4294901760
    %2113 = vmatpush1.msra.mxu0 %v2112
    %2114 = vmatprep.subr.mxu0 0.0
    %v2115 = vand.u32 %v46, 4294901760
    %v2116 = vsub.f32 %v46, %v2115
    %v2117 = vand.u32 %v2116, 4294901760
    %2118 = vmatpush1.msra.mxu0 %v2117
    %2119 = vmatprep.subr.mxu0 0.0
    %v2120 = vand.u32 %v47, 4294901760
    %v2121 = vsub.f32 %v47, %v2120
    %v2122 = vand.u32 %v2121, 4294901760
    %2123 = vmatpush1.msra.mxu0 %v2122
    %2124 = vmatprep.subr.mxu0 0.0
    %v2125 = vand.u32 %v48, 4294901760
    %v2126 = vsub.f32 %v48, %v2125
    %v2127 = vand.u32 %v2126, 4294901760
    %2128 = vmatpush1.msra.mxu0 %v2127
    %2129 = vmatprep.subr.mxu0 0.0
    %v2130 = vand.u32 %v49, 4294901760
    %v2131 = vsub.f32 %v49, %v2130
    %v2132 = vand.u32 %v2131, 4294901760
    %2133 = vmatpush1.msra.mxu0 %v2132
    %2134 = vmatprep.subr.mxu0 0.0
    %v2135 = vand.u32 %v50, 4294901760
    %v2136 = vsub.f32 %v50, %v2135
    %v2137 = vand.u32 %v2136, 4294901760
    %2138 = vmatpush1.msra.mxu0 %v2137
    %2139 = vmatprep.subr.mxu0 0.0
    %v2140 = vand.u32 %v51, 4294901760
    %v2141 = vsub.f32 %v51, %v2140
    %v2142 = vand.u32 %v2141, 4294901760
    %2143 = vmatpush1.msra.mxu0 %v2142
    %2144 = vmatprep.subr.mxu0 0.0
    %v2145 = vand.u32 %v52, 4294901760
    %v2146 = vsub.f32 %v52, %v2145
    %v2147 = vand.u32 %v2146, 4294901760
    %2148 = vmatpush1.msra.mxu0 %v2147
    %2149 = vmatprep.subr.mxu0 0.0
    %v2150 = vand.u32 %v53, 4294901760
    %v2151 = vsub.f32 %v53, %v2150
    %v2152 = vand.u32 %v2151, 4294901760
    %2153 = vmatpush1.msra.mxu0 %v2152
    %2154 = vmatprep.subr.mxu0 0.0
    %v2155 = vand.u32 %v54, 4294901760
    %v2156 = vsub.f32 %v54, %v2155
    %v2157 = vand.u32 %v2156, 4294901760
    %2158 = vmatpush1.msra.mxu0 %v2157
    %2159 = vmatprep.subr.mxu0 0.0
    %v2160 = vand.u32 %v55, 4294901760
    %v2161 = vsub.f32 %v55, %v2160
    %v2162 = vand.u32 %v2161, 4294901760
    %2163 = vmatpush1.msra.mxu0 %v2162
    %2164 = vmatprep.subr.mxu0 0.0
    %v2165 = vand.u32 %v56, 4294901760
    %v2166 = vsub.f32 %v56, %v2165
    %v2167 = vand.u32 %v2166, 4294901760
    %2168 = vmatpush1.msra.mxu0 %v2167
    %2169 = vmatprep.subr.mxu0 0.0
    %v2170 = vand.u32 %v57, 4294901760
    %v2171 = vsub.f32 %v57, %v2170
    %v2172 = vand.u32 %v2171, 4294901760
    %2173 = vmatpush1.msra.mxu0 %v2172
    %v2174 = vand.u32 %v1423, 4294901760
    %2175 = vmatprep.mubr.f32.mxu0 %v2174
    %v2176 = vand.u32 %v1422, 4294901760
    %2177 = vmatmul.mubr.f32.gmra.mrb[0].mxu0 %v2176
    %v2178 = vpop.f32.mrb[0].mxu0
    %v2179 = vadd.f32 %v2011, %v2178
    %v2180 = vpop.f32.mrb[0].mxu0
    %2181 = vdwg.mxu0
    %2182 = vmatprep.subr.mxu0 0.0
    %v2183 = vand.u32 %v26, 4294901760
    %2184 = vmatpush1.msra.mxu0 %v2183
    %2185 = vmatprep.subr.mxu0 0.0
    %v2186 = vand.u32 %v27, 4294901760
    %2187 = vmatpush1.msra.mxu0 %v2186
    %2188 = vmatprep.subr.mxu0 0.0
    %v2189 = vand.u32 %v28, 4294901760
    %2190 = vmatpush1.msra.mxu0 %v2189
    %2191 = vmatprep.subr.mxu0 0.0
    %v2192 = vand.u32 %v29, 4294901760
    %2193 = vmatpush1.msra.mxu0 %v2192
    %2194 = vmatprep.subr.mxu0 0.0
    %v2195 = vand.u32 %v30, 4294901760
    %2196 = vmatpush1.msra.mxu0 %v2195
    %2197 = vmatprep.subr.mxu0 0.0
    %v2198 = vand.u32 %v31, 4294901760
    %2199 = vmatpush1.msra.mxu0 %v2198
    %2200 = vmatprep.subr.mxu0 0.0
    %v2201 = vand.u32 %v32, 4294901760
    %2202 = vmatpush1.msra.mxu0 %v2201
    %2203 = vmatprep.subr.mxu0 0.0
    %v2204 = vand.u32 %v33, 4294901760
    %2205 = vmatpush1.msra.mxu0 %v2204
    %2206 = vmatprep.subr.mxu0 0.0
    %v2207 = vand.u32 %v34, 4294901760
    %2208 = vmatpush1.msra.mxu0 %v2207
    %2209 = vmatprep.subr.mxu0 0.0
    %v2210 = vand.u32 %v35, 4294901760
    %2211 = vmatpush1.msra.mxu0 %v2210
    %2212 = vmatprep.subr.mxu0 0.0
    %v2213 = vand.u32 %v36, 4294901760
    %2214 = vmatpush1.msra.mxu0 %v2213
    %2215 = vmatprep.subr.mxu0 0.0
    %v2216 = vand.u32 %v37, 4294901760
    %2217 = vmatpush1.msra.mxu0 %v2216
    %2218 = vmatprep.subr.mxu0 0.0
    %v2219 = vand.u32 %v38, 4294901760
    %2220 = vmatpush1.msra.mxu0 %v2219
    %2221 = vmatprep.subr.mxu0 0.0
    %v2222 = vand.u32 %v39, 4294901760
    %2223 = vmatpush1.msra.mxu0 %v2222
    %2224 = vmatprep.subr.mxu0 0.0
    %v2225 = vand.u32 %v40, 4294901760
    %2226 = vmatpush1.msra.mxu0 %v2225
    %2227 = vmatprep.subr.mxu0 0.0
    %v2228 = vand.u32 %v41, 4294901760
    %2229 = vmatpush1.msra.mxu0 %v2228
    %2230 = vmatprep.subr.mxu0 0.0
    %v2231 = vand.u32 %v42, 4294901760
    %2232 = vmatpush1.msra.mxu0 %v2231
    %2233 = vmatprep.subr.mxu0 0.0
    %v2234 = vand.u32 %v43, 4294901760
    %2235 = vmatpush1.msra.mxu0 %v2234
    %2236 = vmatprep.subr.mxu0 0.0
    %v2237 = vand.u32 %v44, 4294901760
    %2238 = vmatpush1.msra.mxu0 %v2237
    %2239 = vmatprep.subr.mxu0 0.0
    %v2240 = vand.u32 %v45, 4294901760
    %2241 = vmatpush1.msra.mxu0 %v2240
    %2242 = vmatprep.subr.mxu0 0.0
    %v2243 = vand.u32 %v46, 4294901760
    %2244 = vmatpush1.msra.mxu0 %v2243
    %2245 = vmatprep.subr.mxu0 0.0
    %v2246 = vand.u32 %v47, 4294901760
    %2247 = vmatpush1.msra.mxu0 %v2246
    %2248 = vmatprep.subr.mxu0 0.0
    %v2249 = vand.u32 %v48, 4294901760
    %2250 = vmatpush1.msra.mxu0 %v2249
    %2251 = vmatprep.subr.mxu0 0.0
    %v2252 = vand.u32 %v49, 4294901760
    %2253 = vmatpush1.msra.mxu0 %v2252
    %2254 = vmatprep.subr.mxu0 0.0
    %v2255 = vand.u32 %v50, 4294901760
    %2256 = vmatpush1.msra.mxu0 %v2255
    %2257 = vmatprep.subr.mxu0 0.0
    %v2258 = vand.u32 %v51, 4294901760
    %2259 = vmatpush1.msra.mxu0 %v2258
    %2260 = vmatprep.subr.mxu0 0.0
    %v2261 = vand.u32 %v52, 4294901760
    %2262 = vmatpush1.msra.mxu0 %v2261
    %2263 = vmatprep.subr.mxu0 0.0
    %v2264 = vand.u32 %v53, 4294901760
    %2265 = vmatpush1.msra.mxu0 %v2264
    %2266 = vmatprep.subr.mxu0 0.0
    %v2267 = vand.u32 %v54, 4294901760
    %2268 = vmatpush1.msra.mxu0 %v2267
    %2269 = vmatprep.subr.mxu0 0.0
    %v2270 = vand.u32 %v55, 4294901760
    %2271 = vmatpush1.msra.mxu0 %v2270
    %2272 = vmatprep.subr.mxu0 0.0
    %v2273 = vand.u32 %v56, 4294901760
    %2274 = vmatpush1.msra.mxu0 %v2273
    %2275 = vmatprep.subr.mxu0 0.0
    %v2276 = vand.u32 %v57, 4294901760
    %2277 = vmatpush1.msra.mxu0 %v2276
    %v2278 = vand.u32 %v1423, 4294901760
    %2279 = vmatprep.mubr.f32.mxu0 %v2278
    %v2280 = vand.u32 %v1422, 4294901760
    %2281 = vmatmul.mubr.f32.gmra.mrb[0].mxu0 %v2280
    %v2282 = vpop.f32.mrb[0].mxu0
    %v2283 = vadd.f32 %v2179, %v2282
    %v2284 = vpop.f32.mrb[0].mxu0
    %2285 = vdwg.mxu0
    %v2286 = vmul.f32 %v2283, %v2283
    %v2287 = vsel %vm925, %v2286, 0.0
    %2288 = vadd.xlane.f32.xlu0 %v2287
    %v2289 = vpop.xlane.xlu0 %2288
    %v2290 = vrsqrt.pop %v2289
    %v2291 = vmul.f32 %v2289, %v2290
    %vm2292 = vcmp.eq.f32.partialorder %v2289, inf
    %v2293 = vsel %vm2292, %v2289, %v2291
    %vm2294 = vcmp.eq.f32.partialorder %v2289, 0.0
    %v2295 = vand.u32 %v2289, 2147483648
    %v2296 = vsel %vm2294, %v2295, %v2293
    %v2297 = vmax.f32 %v2296, 1e-12
    %v2298 = vrcp.pop %v2297
    %v2299 = vmul.f32 %v2283, %v2298
    %v2300 = vld [vmem:[%s3] sm:$0xff]
    %v2301 = vld [vmem:[%s3 + $0x8] sm:$0xff]
    %v2303 = vsel %vm925, %v2299, 0
    %2305 = vmatprep.subr.mxu0 0.0
    %v2306 = vand.u32 %v2300, 4294901760
    %2307 = vmatpush1.msra.mxu0 %v2306
    %2308 = vmatprep.subr.mxu0 0.0
    %v2309 = vand.u32 %v2301, 4294901760
    %2310 = vmatpush1.msra.mxu0 %v2309
    %2311 = vmatprep.subr.mxu0 0.0
    %2312 = vmatpush1.msra.mxu0 0.0
    %2313 = vmatprep.subr.mxu0 0.0
    %2314 = vmatpush1.msra.mxu0 0.0
    %2315 = vmatprep.subr.mxu0 0.0
    %2316 = vmatpush1.msra.mxu0 0.0
    %2317 = vmatprep.subr.mxu0 0.0
    %2318 = vmatpush1.msra.mxu0 0.0
    %2319 = vmatprep.subr.mxu0 0.0
    %2320 = vmatpush1.msra.mxu0 0.0
    %2321 = vmatprep.subr.mxu0 0.0
    %2322 = vmatpush1.msra.mxu0 0.0
    %2323 = vmatprep.subr.mxu0 0.0
    %2324 = vmatpush1.msra.mxu0 0.0
    %2325 = vmatprep.subr.mxu0 0.0
    %2326 = vmatpush1.msra.mxu0 0.0
    %2327 = vmatprep.subr.mxu0 0.0
    %2328 = vmatpush1.msra.mxu0 0.0
    %2329 = vmatprep.subr.mxu0 0.0
    %2330 = vmatpush1.msra.mxu0 0.0
    %2331 = vmatprep.subr.mxu0 0.0
    %2332 = vmatpush1.msra.mxu0 0.0
    %2333 = vmatprep.subr.mxu0 0.0
    %2334 = vmatpush1.msra.mxu0 0.0
    %2335 = vmatprep.subr.mxu0 0.0
    %2336 = vmatpush1.msra.mxu0 0.0
    %2337 = vmatprep.subr.mxu0 0.0
    %2338 = vmatpush1.msra.mxu0 0.0
    %2339 = vmatprep.subr.mxu0 0.0
    %2340 = vmatpush1.msra.mxu0 0.0
    %2341 = vmatprep.subr.mxu0 0.0
    %2342 = vmatpush1.msra.mxu0 0.0
    %2343 = vmatprep.subr.mxu0 0.0
    %2344 = vmatpush1.msra.mxu0 0.0
    %2345 = vmatprep.subr.mxu0 0.0
    %2346 = vmatpush1.msra.mxu0 0.0
    %2347 = vmatprep.subr.mxu0 0.0
    %2348 = vmatpush1.msra.mxu0 0.0
    %2349 = vmatprep.subr.mxu0 0.0
    %2350 = vmatpush1.msra.mxu0 0.0
    %2351 = vmatprep.subr.mxu0 0.0
    %2352 = vmatpush1.msra.mxu0 0.0
    %2353 = vmatprep.subr.mxu0 0.0
    %2354 = vmatpush1.msra.mxu0 0.0
    %2355 = vmatprep.subr.mxu0 0.0
    %2356 = vmatpush1.msra.mxu0 0.0
    %2357 = vmatprep.subr.mxu0 0.0
    %2358 = vmatpush1.msra.mxu0 0.0
    %2359 = vmatprep.subr.mxu0 0.0
    %2360 = vmatpush1.msra.mxu0 0.0
    %2361 = vmatprep.subr.mxu0 0.0
    %2362 = vmatpush1.msra.mxu0 0.0
    %2363 = vmatprep.subr.mxu0 0.0
    %2364 = vmatpush1.msra.mxu0 0.0
    %2365 = vmatprep.subr.mxu0 0.0
    %2366 = vmatpush1.msra.mxu0 0.0
    %2367 = vmatprep.subr.mxu0 0.0
    %2368 = vmatpush1.msra.mxu0 0.0
    %2369 = vmatprep.subr.mxu0 0.0
    %2370 = vmatpush1.msra.mxu0 0.0
    %2371 = vmatprep.mubr.f32.mxu0 0.0
    %v2372 = vand.u32 %v2303, 4294901760
    %v2373 = vsub.f32 %v2303, %v2372
    %v2374 = vand.u32 %v2373, 4294901760
    %v2375 = vsub.f32 %v2373, %v2374
    %v2376 = vand.u32 %v2375, 4294901760
    %2377 = vmatmul.mubr.f32.gmra.mrb[0].mxu0 %v2376
    %v2378 = vpop.f32.mrb[0].mxu0
    %v2379 = vadd.f32 0.0, %v2378
    %v2380 = vpop.f32.mrb[0].mxu0
    %2381 = vdwg.mxu0
    %2382 = vmatprep.subr.mxu0 0.0
    %v2383 = vand.u32 %v2300, 4294901760
    %v2384 = vsub.f32 %v2300, %v2383
    %v2385 = vand.u32 %v2384, 4294901760
    %v2386 = vsub.f32 %v2384, %v2385
    %v2387 = vand.u32 %v2386, 4294901760
    %2388 = vmatpush1.msra.mxu0 %v2387
    %2389 = vmatprep.subr.mxu0 0.0
    %v2390 = vand.u32 %v2301, 4294901760
    %v2391 = vsub.f32 %v2301, %v2390
    %v2392 = vand.u32 %v2391, 4294901760
    %v2393 = vsub.f32 %v2391, %v2392
    %v2394 = vand.u32 %v2393, 4294901760
    %2395 = vmatpush1.msra.mxu0 %v2394
    %2396 = vmatprep.subr.mxu0 0.0
    %2397 = vmatpush1.msra.mxu0 0.0
    %2398 = vmatprep.subr.mxu0 0.0
    %2399 = vmatpush1.msra.mxu0 0.0
    %2400 = vmatprep.subr.mxu0 0.0
    %2401 = vmatpush1.msra.mxu0 0.0
    %2402 = vmatprep.subr.mxu0 0.0
    %2403 = vmatpush1.msra.mxu0 0.0
    %2404 = vmatprep.subr.mxu0 0.0
    %2405 = vmatpush1.msra.mxu0 0.0
    %2406 = vmatprep.subr.mxu0 0.0
    %2407 = vmatpush1.msra.mxu0 0.0
    %2408 = vmatprep.subr.mxu0 0.0
    %2409 = vmatpush1.msra.mxu0 0.0
    %2410 = vmatprep.subr.mxu0 0.0
    %2411 = vmatpush1.msra.mxu0 0.0
    %2412 = vmatprep.subr.mxu0 0.0
    %2413 = vmatpush1.msra.mxu0 0.0
    %2414 = vmatprep.subr.mxu0 0.0
    %2415 = vmatpush1.msra.mxu0 0.0
    %2416 = vmatprep.subr.mxu0 0.0
    %2417 = vmatpush1.msra.mxu0 0.0
    %2418 = vmatprep.subr.mxu0 0.0
    %2419 = vmatpush1.msra.mxu0 0.0
    %2420 = vmatprep.subr.mxu0 0.0
    %2421 = vmatpush1.msra.mxu0 0.0
    %2422 = vmatprep.subr.mxu0 0.0
    %2423 = vmatpush1.msra.mxu0 0.0
    %2424 = vmatprep.subr.mxu0 0.0
    %2425 = vmatpush1.msra.mxu0 0.0
    %2426 = vmatprep.subr.mxu0 0.0
    %2427 = vmatpush1.msra.mxu0 0.0
    %2428 = vmatprep.subr.mxu0 0.0
    %2429 = vmatpush1.msra.mxu0 0.0
    %2430 = vmatprep.subr.mxu0 0.0
    %2431 = vmatpush1.msra.mxu0 0.0
    %2432 = vmatprep.subr.mxu0 0.0
    %2433 = vmatpush1.msra.mxu0 0.0
    %2434 = vmatprep.subr.mxu0 0.0
    %2435 = vmatpush1.msra.mxu0 0.0
    %2436 = vmatprep.subr.mxu0 0.0
    %2437 = vmatpush1.msra.mxu0 0.0
    %2438 = vmatprep.subr.mxu0 0.0
    %2439 = vmatpush1.msra.mxu0 0.0
    %2440 = vmatprep.subr.mxu0 0.0
    %2441 = vmatpush1.msra.mxu0 0.0
    %2442 = vmatprep.subr.mxu0 0.0
    %2443 = vmatpush1.msra.mxu0 0.0
    %2444 = vmatprep.subr.mxu0 0.0
    %2445 = vmatpush1.msra.mxu0 0.0
    %2446 = vmatprep.subr.mxu0 0.0
    %2447 = vmatpush1.msra.mxu0 0.0
    %2448 = vmatprep.subr.mxu0 0.0
    %2449 = vmatpush1.msra.mxu0 0.0
    %2450 = vmatprep.subr.mxu0 0.0
    %2451 = vmatpush1.msra.mxu0 0.0
    %2452 = vmatprep.subr.mxu0 0.0
    %2453 = vmatpush1.msra.mxu0 0.0
    %2454 = vmatprep.subr.mxu0 0.0
    %2455 = vmatpush1.msra.mxu0 0.0
    %2456 = vmatprep.mubr.f32.mxu0 0.0
    %v2457 = vand.u32 %v2303, 4294901760
    %2458 = vmatmul.mubr.f32.gmra.mrb[0].mxu0 %v2457
    %v2459 = vpop.f32.mrb[0].mxu0
    %v2460 = vadd.f32 %v2379, %v2459
    %v2461 = vpop.f32.mrb[0].mxu0
    %2462 = vdwg.mxu0
    %2463 = vmatprep.subr.mxu0 0.0
    %v2464 = vand.u32 %v2300, 4294901760
    %v2465 = vsub.f32 %v2300, %v2464
    %2466 = vmatpush1.msra.mxu0 %v2465
    %2467 = vmatprep.subr.mxu0 0.0
    %v2468 = vand.u32 %v2301, 4294901760
    %v2469 = vsub.f32 %v2301, %v2468
    %2470 = vmatpush1.msra.mxu0 %v2469
    %2471 = vmatprep.subr.mxu0 0.0
    %2472 = vmatpush1.msra.mxu0 0.0
    %2473 = vmatprep.subr.mxu0 0.0
    %2474 = vmatpush1.msra.mxu0 0.0
    %2475 = vmatprep.subr.mxu0 0.0
    %2476 = vmatpush1.msra.mxu0 0.0
    %2477 = vmatprep.subr.mxu0 0.0
    %2478 = vmatpush1.msra.mxu0 0.0
    %2479 = vmatprep.subr.mxu0 0.0
    %2480 = vmatpush1.msra.mxu0 0.0
    %2481 = vmatprep.subr.mxu0 0.0
    %2482 = vmatpush1.msra.mxu0 0.0
    %2483 = vmatprep.subr.mxu0 0.0
    %2484 = vmatpush1.msra.mxu0 0.0
    %2485 = vmatprep.subr.mxu0 0.0
    %2486 = vmatpush1.msra.mxu0 0.0
    %2487 = vmatprep.subr.mxu0 0.0
    %2488 = vmatpush1.msra.mxu0 0.0
    %2489 = vmatprep.subr.mxu0 0.0
    %2490 = vmatpush1.msra.mxu0 0.0
    %2491 = vmatprep.subr.mxu0 0.0
    %2492 = vmatpush1.msra.mxu0 0.0
    %2493 = vmatprep.subr.mxu0 0.0
    %2494 = vmatpush1.msra.mxu0 0.0
    %2495 = vmatprep.subr.mxu0 0.0
    %2496 = vmatpush1.msra.mxu0 0.0
    %2497 = vmatprep.subr.mxu0 0.0
    %2498 = vmatpush1.msra.mxu0 0.0
    %2499 = vmatprep.subr.mxu0 0.0
    %2500 = vmatpush1.msra.mxu0 0.0
    %2501 = vmatprep.subr.mxu0 0.0
    %2502 = vmatpush1.msra.mxu0 0.0
    %2503 = vmatprep.subr.mxu0 0.0
    %2504 = vmatpush1.msra.mxu0 0.0
    %2505 = vmatprep.subr.mxu0 0.0
    %2506 = vmatpush1.msra.mxu0 0.0
    %2507 = vmatprep.subr.mxu0 0.0
    %2508 = vmatpush1.msra.mxu0 0.0
    %2509 = vmatprep.subr.mxu0 0.0
    %2510 = vmatpush1.msra.mxu0 0.0
    %2511 = vmatprep.subr.mxu0 0.0
    %2512 = vmatpush1.msra.mxu0 0.0
    %2513 = vmatprep.subr.mxu0 0.0
    %2514 = vmatpush1.msra.mxu0 0.0
    %2515 = vmatprep.subr.mxu0 0.0
    %2516 = vmatpush1.msra.mxu0 0.0
    %2517 = vmatprep.subr.mxu0 0.0
    %2518 = vmatpush1.msra.mxu0 0.0
    %2519 = vmatprep.subr.mxu0 0.0
    %2520 = vmatpush1.msra.mxu0 0.0
    %2521 = vmatprep.subr.mxu0 0.0
    %2522 = vmatpush1.msra.mxu0 0.0
    %2523 = vmatprep.subr.mxu0 0.0
    %2524 = vmatpush1.msra.mxu0 0.0
    %2525 = vmatprep.subr.mxu0 0.0
    %2526 = vmatpush1.msra.mxu0 0.0
    %2527 = vmatprep.subr.mxu0 0.0
    %2528 = vmatpush1.msra.mxu0 0.0
    %2529 = vmatprep.subr.mxu0 0.0
    %2530 = vmatpush1.msra.mxu0 0.0
    %2531 = vmatprep.mubr.f32.mxu0 0.0
    %v2532 = vand.u32 %v2303, 4294901760
    %v2533 = vsub.f32 %v2303, %v2532
    %2534 = vmatmul.mubr.f32.gmra.mrb[0].mxu0 %v2533
    %v2535 = vpop.f32.mrb[0].mxu0
    %v2536 = vadd.f32 %v2460, %v2535
    %v2537 = vpop.f32.mrb[0].mxu0
    %2538 = vdwg.mxu0
    %2539 = vmatprep.subr.mxu0 0.0
    %v2540 = vand.u32 %v2300, 4294901760
    %2541 = vmatpush1.msra.mxu0 %v2540
    %2542 = vmatprep.subr.mxu0 0.0
    %v2543 = vand.u32 %v2301, 4294901760
    %2544 = vmatpush1.msra.mxu0 %v2543
    %2545 = vmatprep.subr.mxu0 0.0
    %2546 = vmatpush1.msra.mxu0 0.0
    %2547 = vmatprep.subr.mxu0 0.0
    %2548 = vmatpush1.msra.mxu0 0.0
    %2549 = vmatprep.subr.mxu0 0.0
    %2550 = vmatpush1.msra.mxu0 0.0
    %2551 = vmatprep.subr.mxu0 0.0
    %2552 = vmatpush1.msra.mxu0 0.0
    %2553 = vmatprep.subr.mxu0 0.0
    %2554 = vmatpush1.msra.mxu0 0.0
    %2555 = vmatprep.subr.mxu0 0.0
    %2556 = vmatpush1.msra.mxu0 0.0
    %2557 = vmatprep.subr.mxu0 0.0
    %2558 = vmatpush1.msra.mxu0 0.0
    %2559 = vmatprep.subr.mxu0 0.0
    %2560 = vmatpush1.msra.mxu0 0.0
    %2561 = vmatprep.subr.mxu0 0.0
    %2562 = vmatpush1.msra.mxu0 0.0
    %2563 = vmatprep.subr.mxu0 0.0
    %2564 = vmatpush1.msra.mxu0 0.0
    %2565 = vmatprep.subr.mxu0 0.0
    %2566 = vmatpush1.msra.mxu0 0.0
    %2567 = vmatprep.subr.mxu0 0.0
    %2568 = vmatpush1.msra.mxu0 0.0
    %2569 = vmatprep.subr.mxu0 0.0
    %2570 = vmatpush1.msra.mxu0 0.0
    %2571 = vmatprep.subr.mxu0 0.0
    %2572 = vmatpush1.msra.mxu0 0.0
    %2573 = vmatprep.subr.mxu0 0.0
    %2574 = vmatpush1.msra.mxu0 0.0
    %2575 = vmatprep.subr.mxu0 0.0
    %2576 = vmatpush1.msra.mxu0 0.0
    %2577 = vmatprep.subr.mxu0 0.0
    %2578 = vmatpush1.msra.mxu0 0.0
    %2579 = vmatprep.subr.mxu0 0.0
    %2580 = vmatpush1.msra.mxu0 0.0
    %2581 = vmatprep.subr.mxu0 0.0
    %2582 = vmatpush1.msra.mxu0 0.0
    %2583 = vmatprep.subr.mxu0 0.0
    %2584 = vmatpush1.msra.mxu0 0.0
    %2585 = vmatprep.subr.mxu0 0.0
    %2586 = vmatpush1.msra.mxu0 0.0
    %2587 = vmatprep.subr.mxu0 0.0
    %2588 = vmatpush1.msra.mxu0 0.0
    %2589 = vmatprep.subr.mxu0 0.0
    %2590 = vmatpush1.msra.mxu0 0.0
    %2591 = vmatprep.subr.mxu0 0.0
    %2592 = vmatpush1.msra.mxu0 0.0
    %2593 = vmatprep.subr.mxu0 0.0
    %2594 = vmatpush1.msra.mxu0 0.0
    %2595 = vmatprep.subr.mxu0 0.0
    %2596 = vmatpush1.msra.mxu0 0.0
    %2597 = vmatprep.subr.mxu0 0.0
    %2598 = vmatpush1.msra.mxu0 0.0
    %2599 = vmatprep.subr.mxu0 0.0
    %2600 = vmatpush1.msra.mxu0 0.0
    %2601 = vmatprep.subr.mxu0 0.0
    %2602 = vmatpush1.msra.mxu0 0.0
    %2603 = vmatprep.subr.mxu0 0.0
    %2604 = vmatpush1.msra.mxu0 0.0
    %2605 = vmatprep.mubr.f32.mxu0 0.0
    %v2606 = vand.u32 %v2303, 4294901760
    %v2607 = vsub.f32 %v2303, %v2606
    %v2608 = vand.u32 %v2607, 4294901760
    %2609 = vmatmul.mubr.f32.gmra.mrb[0].mxu0 %v2608
    %v2610 = vpop.f32.mrb[0].mxu0
    %v2611 = vadd.f32 %v2536, %v2610
    %v2612 = vpop.f32.mrb[0].mxu0
    %2613 = vdwg.mxu0
    %2614 = vmatprep.subr.mxu0 0.0
    %v2615 = vand.u32 %v2300, 4294901760
    %v2616 = vsub.f32 %v2300, %v2615
    %v2617 = vand.u32 %v2616, 4294901760
    %2618 = vmatpush1.msra.mxu0 %v2617
    %2619 = vmatprep.subr.mxu0 0.0
    %v2620 = vand.u32 %v2301, 4294901760
    %v2621 = vsub.f32 %v2301, %v2620
    %v2622 = vand.u32 %v2621, 4294901760
    %2623 = vmatpush1.msra.mxu0 %v2622
    %2624 = vmatprep.subr.mxu0 0.0
    %2625 = vmatpush1.msra.mxu0 0.0
    %2626 = vmatprep.subr.mxu0 0.0
    %2627 = vmatpush1.msra.mxu0 0.0
    %2628 = vmatprep.subr.mxu0 0.0
    %2629 = vmatpush1.msra.mxu0 0.0
    %2630 = vmatprep.subr.mxu0 0.0
    %2631 = vmatpush1.msra.mxu0 0.0
    %2632 = vmatprep.subr.mxu0 0.0
    %2633 = vmatpush1.msra.mxu0 0.0
    %2634 = vmatprep.subr.mxu0 0.0
    %2635 = vmatpush1.msra.mxu0 0.0
    %2636 = vmatprep.subr.mxu0 0.0
    %2637 = vmatpush1.msra.mxu0 0.0
    %2638 = vmatprep.subr.mxu0 0.0
    %2639 = vmatpush1.msra.mxu0 0.0
    %2640 = vmatprep.subr.mxu0 0.0
    %2641 = vmatpush1.msra.mxu0 0.0
    %2642 = vmatprep.subr.mxu0 0.0
    %2643 = vmatpush1.msra.mxu0 0.0
    %2644 = vmatprep.subr.mxu0 0.0
    %2645 = vmatpush1.msra.mxu0 0.0
    %2646 = vmatprep.subr.mxu0 0.0
    %2647 = vmatpush1.msra.mxu0 0.0
    %2648 = vmatprep.subr.mxu0 0.0
    %2649 = vmatpush1.msra.mxu0 0.0
    %2650 = vmatprep.subr.mxu0 0.0
    %2651 = vmatpush1.msra.mxu0 0.0
    %2652 = vmatprep.subr.mxu0 0.0
    %2653 = vmatpush1.msra.mxu0 0.0
    %2654 = vmatprep.subr.mxu0 0.0
    %2655 = vmatpush1.msra.mxu0 0.0
    %2656 = vmatprep.subr.mxu0 0.0
    %2657 = vmatpush1.msra.mxu0 0.0
    %2658 = vmatprep.subr.mxu0 0.0
    %2659 = vmatpush1.msra.mxu0 0.0
    %2660 = vmatprep.subr.mxu0 0.0
    %2661 = vmatpush1.msra.mxu0 0.0
    %2662 = vmatprep.subr.mxu0 0.0
    %2663 = vmatpush1.msra.mxu0 0.0
    %2664 = vmatprep.subr.mxu0 0.0
    %2665 = vmatpush1.msra.mxu0 0.0
    %2666 = vmatprep.subr.mxu0 0.0
    %2667 = vmatpush1.msra.mxu0 0.0
    %2668 = vmatprep.subr.mxu0 0.0
    %2669 = vmatpush1.msra.mxu0 0.0
    %2670 = vmatprep.subr.mxu0 0.0
    %2671 = vmatpush1.msra.mxu0 0.0
    %2672 = vmatprep.subr.mxu0 0.0
    %2673 = vmatpush1.msra.mxu0 0.0
    %2674 = vmatprep.subr.mxu0 0.0
    %2675 = vmatpush1.msra.mxu0 0.0
    %2676 = vmatprep.subr.mxu0 0.0
    %2677 = vmatpush1.msra.mxu0 0.0
    %2678 = vmatprep.subr.mxu0 0.0
    %2679 = vmatpush1.msra.mxu0 0.0
    %2680 = vmatprep.subr.mxu0 0.0
    %2681 = vmatpush1.msra.mxu0 0.0
    %2682 = vmatprep.subr.mxu0 0.0
    %2683 = vmatpush1.msra.mxu0 0.0
    %2684 = vmatprep.mubr.f32.mxu0 0.0
    %v2685 = vand.u32 %v2303, 4294901760
    %2686 = vmatmul.mubr.f32.gmra.mrb[0].mxu0 %v2685
    %v2687 = vpop.f32.mrb[0].mxu0
    %v2688 = vadd.f32 %v2611, %v2687
    %v2689 = vpop.f32.mrb[0].mxu0
    %2690 = vdwg.mxu0
    %2691 = vmatprep.subr.mxu0 0.0
    %v2692 = vand.u32 %v2300, 4294901760
    %2693 = vmatpush1.msra.mxu0 %v2692
    %2694 = vmatprep.subr.mxu0 0.0
    %v2695 = vand.u32 %v2301, 4294901760
    %2696 = vmatpush1.msra.mxu0 %v2695
    %2697 = vmatprep.subr.mxu0 0.0
    %2698 = vmatpush1.msra.mxu0 0.0
    %2699 = vmatprep.subr.mxu0 0.0
    %2700 = vmatpush1.msra.mxu0 0.0
    %2701 = vmatprep.subr.mxu0 0.0
    %2702 = vmatpush1.msra.mxu0 0.0
    %2703 = vmatprep.subr.mxu0 0.0
    %2704 = vmatpush1.msra.mxu0 0.0
    %2705 = vmatprep.subr.mxu0 0.0
    %2706 = vmatpush1.msra.mxu0 0.0
    %2707 = vmatprep.subr.mxu0 0.0
    %2708 = vmatpush1.msra.mxu0 0.0
    %2709 = vmatprep.subr.mxu0 0.0
    %2710 = vmatpush1.msra.mxu0 0.0
    %2711 = vmatprep.subr.mxu0 0.0
    %2712 = vmatpush1.msra.mxu0 0.0
    %2713 = vmatprep.subr.mxu0 0.0
    %2714 = vmatpush1.msra.mxu0 0.0
    %2715 = vmatprep.subr.mxu0 0.0
    %2716 = vmatpush1.msra.mxu0 0.0
    %2717 = vmatprep.subr.mxu0 0.0
    %2718 = vmatpush1.msra.mxu0 0.0
    %2719 = vmatprep.subr.mxu0 0.0
    %2720 = vmatpush1.msra.mxu0 0.0
    %2721 = vmatprep.subr.mxu0 0.0
    %2722 = vmatpush1.msra.mxu0 0.0
    %2723 = vmatprep.subr.mxu0 0.0
    %2724 = vmatpush1.msra.mxu0 0.0
    %2725 = vmatprep.subr.mxu0 0.0
    %2726 = vmatpush1.msra.mxu0 0.0
    %2727 = vmatprep.subr.mxu0 0.0
    %2728 = vmatpush1.msra.mxu0 0.0
    %2729 = vmatprep.subr.mxu0 0.0
    %2730 = vmatpush1.msra.mxu0 0.0
    %2731 = vmatprep.subr.mxu0 0.0
    %2732 = vmatpush1.msra.mxu0 0.0
    %2733 = vmatprep.subr.mxu0 0.0
    %2734 = vmatpush1.msra.mxu0 0.0
    %2735 = vmatprep.subr.mxu0 0.0
    %2736 = vmatpush1.msra.mxu0 0.0
    %2737 = vmatprep.subr.mxu0 0.0
    %2738 = vmatpush1.msra.mxu0 0.0
    %2739 = vmatprep.subr.mxu0 0.0
    %2740 = vmatpush1.msra.mxu0 0.0
    %2741 = vmatprep.subr.mxu0 0.0
    %2742 = vmatpush1.msra.mxu0 0.0
    %2743 = vmatprep.subr.mxu0 0.0
    %2744 = vmatpush1.msra.mxu0 0.0
    %2745 = vmatprep.subr.mxu0 0.0
    %2746 = vmatpush1.msra.mxu0 0.0
    %2747 = vmatprep.subr.mxu0 0.0
    %2748 = vmatpush1.msra.mxu0 0.0
    %2749 = vmatprep.subr.mxu0 0.0
    %2750 = vmatpush1.msra.mxu0 0.0
    %2751 = vmatprep.subr.mxu0 0.0
    %2752 = vmatpush1.msra.mxu0 0.0
    %2753 = vmatprep.subr.mxu0 0.0
    %2754 = vmatpush1.msra.mxu0 0.0
    %2755 = vmatprep.subr.mxu0 0.0
    %2756 = vmatpush1.msra.mxu0 0.0
    %2757 = vmatprep.mubr.f32.mxu0 0.0
    %v2758 = vand.u32 %v2303, 4294901760
    %2759 = vmatmul.mubr.f32.gmra.mrb[0].mxu0 %v2758
    %v2760 = vpop.f32.mrb[0].mxu0
    %v2761 = vadd.f32 %v2688, %v2760
    %v2762 = vpop.f32.mrb[0].mxu0
    %2763 = vdwg.mxu0
    %vm2764 = vcmp.gt.f32.partialorder %v2761, 0.0
    %v2765 = vmin.f32 %v2761, 0.0
    %v2766 = vmul.f32 %v2765, 1.442695
    %v2767 = vpow.pop %v2766
    %v2768 = vsub.f32 %v2767, 1.0
    %v2769 = vsel %vm2764, %v2761, %v2768
    %v2770 = vld [vmem:[%s4] sm:$0xff]
    %vm2771 = vcmask 64512
    %v2773 = vsel %vm2771, %v2769, 0
    %2775 = vmatprep.subr.mxu0 0.0
    %v2776 = vand.u32 %v2770, 4294901760
    %2777 = vmatpush1.msra.mxu0 %v2776
    %2778 = vmatprep.subr.mxu0 0.0
    %2779 = vmatpush1.msra.mxu0 0.0
    %2780 = vmatprep.subr.mxu0 0.0
    %2781 = vmatpush1.msra.mxu0 0.0
    %2782 = vmatprep.subr.mxu0 0.0
    %2783 = vmatpush1.msra.mxu0 0.0
    %2784 = vmatprep.subr.mxu0 0.0
    %2785 = vmatpush1.msra.mxu0 0.0
    %2786 = vmatprep.subr.mxu0 0.0
    %2787 = vmatpush1.msra.mxu0 0.0
    %2788 = vmatprep.subr.mxu0 0.0
    %2789 = vmatpush1.msra.mxu0 0.0
    %2790 = vmatprep.subr.mxu0 0.0
    %2791 = vmatpush1.msra.mxu0 0.0
    %2792 = vmatprep.subr.mxu0 0.0
    %2793 = vmatpush1.msra.mxu0 0.0
    %2794 = vmatprep.subr.mxu0 0.0
    %2795 = vmatpush1.msra.mxu0 0.0
    %2796 = vmatprep.subr.mxu0 0.0
    %2797 = vmatpush1.msra.mxu0 0.0
    %2798 = vmatprep.subr.mxu0 0.0
    %2799 = vmatpush1.msra.mxu0 0.0
    %2800 = vmatprep.subr.mxu0 0.0
    %2801 = vmatpush1.msra.mxu0 0.0
    %2802 = vmatprep.subr.mxu0 0.0
    %2803 = vmatpush1.msra.mxu0 0.0
    %2804 = vmatprep.subr.mxu0 0.0
    %2805 = vmatpush1.msra.mxu0 0.0
    %2806 = vmatprep.subr.mxu0 0.0
    %2807 = vmatpush1.msra.mxu0 0.0
    %2808 = vmatprep.subr.mxu0 0.0
    %2809 = vmatpush1.msra.mxu0 0.0
    %2810 = vmatprep.subr.mxu0 0.0
    %2811 = vmatpush1.msra.mxu0 0.0
    %2812 = vmatprep.subr.mxu0 0.0
    %2813 = vmatpush1.msra.mxu0 0.0
    %2814 = vmatprep.subr.mxu0 0.0
    %2815 = vmatpush1.msra.mxu0 0.0
    %2816 = vmatprep.subr.mxu0 0.0
    %2817 = vmatpush1.msra.mxu0 0.0
    %2818 = vmatprep.subr.mxu0 0.0
    %2819 = vmatpush1.msra.mxu0 0.0
    %2820 = vmatprep.subr.mxu0 0.0
    %2821 = vmatpush1.msra.mxu0 0.0
    %2822 = vmatprep.subr.mxu0 0.0
    %2823 = vmatpush1.msra.mxu0 0.0
    %2824 = vmatprep.subr.mxu0 0.0
    %2825 = vmatpush1.msra.mxu0 0.0
    %2826 = vmatprep.subr.mxu0 0.0
    %2827 = vmatpush1.msra.mxu0 0.0
    %2828 = vmatprep.subr.mxu0 0.0
    %2829 = vmatpush1.msra.mxu0 0.0
    %2830 = vmatprep.subr.mxu0 0.0
    %2831 = vmatpush1.msra.mxu0 0.0
    %2832 = vmatprep.subr.mxu0 0.0
    %2833 = vmatpush1.msra.mxu0 0.0
    %2834 = vmatprep.subr.mxu0 0.0
    %2835 = vmatpush1.msra.mxu0 0.0
    %2836 = vmatprep.subr.mxu0 0.0
    %2837 = vmatpush1.msra.mxu0 0.0
    %2838 = vmatprep.subr.mxu0 0.0
    %2839 = vmatpush1.msra.mxu0 0.0
    %2840 = vmatprep.mubr.f32.mxu0 0.0
    %v2841 = vand.u32 %v2773, 4294901760
    %v2842 = vsub.f32 %v2773, %v2841
    %v2843 = vand.u32 %v2842, 4294901760
    %v2844 = vsub.f32 %v2842, %v2843
    %v2845 = vand.u32 %v2844, 4294901760
    %2846 = vmatmul.mubr.f32.gmra.mrb[0].mxu0 %v2845
    %v2847 = vpop.f32.mrb[0].mxu0
    %v2848 = vadd.f32 0.0, %v2847
    %v2849 = vpop.f32.mrb[0].mxu0
    %2850 = vdwg.mxu0
    %2851 = vmatprep.subr.mxu0 0.0
    %v2852 = vand.u32 %v2770, 4294901760
    %v2853 = vsub.f32 %v2770, %v2852
    %v2854 = vand.u32 %v2853, 4294901760
    %v2855 = vsub.f32 %v2853, %v2854
    %v2856 = vand.u32 %v2855, 4294901760
    %2857 = vmatpush1.msra.mxu0 %v2856
    %2858 = vmatprep.subr.mxu0 0.0
    %2859 = vmatpush1.msra.mxu0 0.0
    %2860 = vmatprep.subr.mxu0 0.0
    %2861 = vmatpush1.msra.mxu0 0.0
    %2862 = vmatprep.subr.mxu0 0.0
    %2863 = vmatpush1.msra.mxu0 0.0
    %2864 = vmatprep.subr.mxu0 0.0
    %2865 = vmatpush1.msra.mxu0 0.0
    %2866 = vmatprep.subr.mxu0 0.0
    %2867 = vmatpush1.msra.mxu0 0.0
    %2868 = vmatprep.subr.mxu0 0.0
    %2869 = vmatpush1.msra.mxu0 0.0
    %2870 = vmatprep.subr.mxu0 0.0
    %2871 = vmatpush1.msra.mxu0 0.0
    %2872 = vmatprep.subr.mxu0 0.0
    %2873 = vmatpush1.msra.mxu0 0.0
    %2874 = vmatprep.subr.mxu0 0.0
    %2875 = vmatpush1.msra.mxu0 0.0
    %2876 = vmatprep.subr.mxu0 0.0
    %2877 = vmatpush1.msra.mxu0 0.0
    %2878 = vmatprep.subr.mxu0 0.0
    %2879 = vmatpush1.msra.mxu0 0.0
    %2880 = vmatprep.subr.mxu0 0.0
    %2881 = vmatpush1.msra.mxu0 0.0
    %2882 = vmatprep.subr.mxu0 0.0
    %2883 = vmatpush1.msra.mxu0 0.0
    %2884 = vmatprep.subr.mxu0 0.0
    %2885 = vmatpush1.msra.mxu0 0.0
    %2886 = vmatprep.subr.mxu0 0.0
    %2887 = vmatpush1.msra.mxu0 0.0
    %2888 = vmatprep.subr.mxu0 0.0
    %2889 = vmatpush1.msra.mxu0 0.0
    %2890 = vmatprep.subr.mxu0 0.0
    %2891 = vmatpush1.msra.mxu0 0.0
    %2892 = vmatprep.subr.mxu0 0.0
    %2893 = vmatpush1.msra.mxu0 0.0
    %2894 = vmatprep.subr.mxu0 0.0
    %2895 = vmatpush1.msra.mxu0 0.0
    %2896 = vmatprep.subr.mxu0 0.0
    %2897 = vmatpush1.msra.mxu0 0.0
    %2898 = vmatprep.subr.mxu0 0.0
    %2899 = vmatpush1.msra.mxu0 0.0
    %2900 = vmatprep.subr.mxu0 0.0
    %2901 = vmatpush1.msra.mxu0 0.0
    %2902 = vmatprep.subr.mxu0 0.0
    %2903 = vmatpush1.msra.mxu0 0.0
    %2904 = vmatprep.subr.mxu0 0.0
    %2905 = vmatpush1.msra.mxu0 0.0
    %2906 = vmatprep.subr.mxu0 0.0
    %2907 = vmatpush1.msra.mxu0 0.0
    %2908 = vmatprep.subr.mxu0 0.0
    %2909 = vmatpush1.msra.mxu0 0.0
    %2910 = vmatprep.subr.mxu0 0.0
    %2911 = vmatpush1.msra.mxu0 0.0
    %2912 = vmatprep.subr.mxu0 0.0
    %2913 = vmatpush1.msra.mxu0 0.0
    %2914 = vmatprep.subr.mxu0 0.0
    %2915 = vmatpush1.msra.mxu0 0.0
    %2916 = vmatprep.subr.mxu0 0.0
    %2917 = vmatpush1.msra.mxu0 0.0
    %2918 = vmatprep.subr.mxu0 0.0
    %2919 = vmatpush1.msra.mxu0 0.0
    %2920 = vmatprep.mubr.f32.mxu0 0.0
    %v2921 = vand.u32 %v2773, 4294901760
    %2922 = vmatmul.mubr.f32.gmra.mrb[0].mxu0 %v2921
    %v2923 = vpop.f32.mrb[0].mxu0
    %v2924 = vadd.f32 %v2848, %v2923
    %v2925 = vpop.f32.mrb[0].mxu0
    %2926 = vdwg.mxu0
    %2927 = vmatprep.subr.mxu0 0.0
    %v2928 = vand.u32 %v2770, 4294901760
    %v2929 = vsub.f32 %v2770, %v2928
    %2930 = vmatpush1.msra.mxu0 %v2929
    %2931 = vmatprep.subr.mxu0 0.0
    %2932 = vmatpush1.msra.mxu0 0.0
    %2933 = vmatprep.subr.mxu0 0.0
    %2934 = vmatpush1.msra.mxu0 0.0
    %2935 = vmatprep.subr.mxu0 0.0
    %2936 = vmatpush1.msra.mxu0 0.0
    %2937 = vmatprep.subr.mxu0 0.0
    %2938 = vmatpush1.msra.mxu0 0.0
    %2939 = vmatprep.subr.mxu0 0.0
    %2940 = vmatpush1.msra.mxu0 0.0
    %2941 = vmatprep.subr.mxu0 0.0
    %2942 = vmatpush1.msra.mxu0 0.0
    %2943 = vmatprep.subr.mxu0 0.0
    %2944 = vmatpush1.msra.mxu0 0.0
    %2945 = vmatprep.subr.mxu0 0.0
    %2946 = vmatpush1.msra.mxu0 0.0
    %2947 = vmatprep.subr.mxu0 0.0
    %2948 = vmatpush1.msra.mxu0 0.0
    %2949 = vmatprep.subr.mxu0 0.0
    %2950 = vmatpush1.msra.mxu0 0.0
    %2951 = vmatprep.subr.mxu0 0.0
    %2952 = vmatpush1.msra.mxu0 0.0
    %2953 = vmatprep.subr.mxu0 0.0
    %2954 = vmatpush1.msra.mxu0 0.0
    %2955 = vmatprep.subr.mxu0 0.0
    %2956 = vmatpush1.msra.mxu0 0.0
    %2957 = vmatprep.subr.mxu0 0.0
    %2958 = vmatpush1.msra.mxu0 0.0
    %2959 = vmatprep.subr.mxu0 0.0
    %2960 = vmatpush1.msra.mxu0 0.0
    %2961 = vmatprep.subr.mxu0 0.0
    %2962 = vmatpush1.msra.mxu0 0.0
    %2963 = vmatprep.subr.mxu0 0.0
    %2964 = vmatpush1.msra.mxu0 0.0
    %2965 = vmatprep.subr.mxu0 0.0
    %2966 = vmatpush1.msra.mxu0 0.0
    %2967 = vmatprep.subr.mxu0 0.0
    %2968 = vmatpush1.msra.mxu0 0.0
    %2969 = vmatprep.subr.mxu0 0.0
    %2970 = vmatpush1.msra.mxu0 0.0
    %2971 = vmatprep.subr.mxu0 0.0
    %2972 = vmatpush1.msra.mxu0 0.0
    %2973 = vmatprep.subr.mxu0 0.0
    %2974 = vmatpush1.msra.mxu0 0.0
    %2975 = vmatprep.subr.mxu0 0.0
    %2976 = vmatpush1.msra.mxu0 0.0
    %2977 = vmatprep.subr.mxu0 0.0
    %2978 = vmatpush1.msra.mxu0 0.0
    %2979 = vmatprep.subr.mxu0 0.0
    %2980 = vmatpush1.msra.mxu0 0.0
    %2981 = vmatprep.subr.mxu0 0.0
    %2982 = vmatpush1.msra.mxu0 0.0
    %2983 = vmatprep.subr.mxu0 0.0
    %2984 = vmatpush1.msra.mxu0 0.0
    %2985 = vmatprep.subr.mxu0 0.0
    %2986 = vmatpush1.msra.mxu0 0.0
    %2987 = vmatprep.subr.mxu0 0.0
    %2988 = vmatpush1.msra.mxu0 0.0
    %2989 = vmatprep.subr.mxu0 0.0
    %2990 = vmatpush1.msra.mxu0 0.0
    %2991 = vmatprep.subr.mxu0 0.0
    %2992 = vmatpush1.msra.mxu0 0.0
    %2993 = vmatprep.mubr.f32.mxu0 0.0
    %v2994 = vand.u32 %v2773, 4294901760
    %v2995 = vsub.f32 %v2773, %v2994
    %2996 = vmatmul.mubr.f32.gmra.mrb[0].mxu0 %v2995
    %v2997 = vpop.f32.mrb[0].mxu0
    %v2998 = vadd.f32 %v2924, %v2997
    %v2999 = vpop.f32.mrb[0].mxu0
    %3000 = vdwg.mxu0
    %3001 = vmatprep.subr.mxu0 0.0
    %v3002 = vand.u32 %v2770, 4294901760
    %3003 = vmatpush1.msra.mxu0 %v3002
    %3004 = vmatprep.subr.mxu0 0.0
    %3005 = vmatpush1.msra.mxu0 0.0
    %3006 = vmatprep.subr.mxu0 0.0
    %3007 = vmatpush1.msra.mxu0 0.0
    %3008 = vmatprep.subr.mxu0 0.0
    %3009 = vmatpush1.msra.mxu0 0.0
    %3010 = vmatprep.subr.mxu0 0.0
    %3011 = vmatpush1.msra.mxu0 0.0
    %3012 = vmatprep.subr.mxu0 0.0
    %3013 = vmatpush1.msra.mxu0 0.0
    %3014 = vmatprep.subr.mxu0 0.0
    %3015 = vmatpush1.msra.mxu0 0.0
    %3016 = vmatprep.subr.mxu0 0.0
    %3017 = vmatpush1.msra.mxu0 0.0
    %3018 = vmatprep.subr.mxu0 0.0
    %3019 = vmatpush1.msra.mxu0 0.0
    %3020 = vmatprep.subr.mxu0 0.0
    %3021 = vmatpush1.msra.mxu0 0.0
    %3022 = vmatprep.subr.mxu0 0.0
    %3023 = vmatpush1.msra.mxu0 0.0
    %3024 = vmatprep.subr.mxu0 0.0
    %3025 = vmatpush1.msra.mxu0 0.0
    %3026 = vmatprep.subr.mxu0 0.0
    %3027 = vmatpush1.msra.mxu0 0.0
    %3028 = vmatprep.subr.mxu0 0.0
    %3029 = vmatpush1.msra.mxu0 0.0
    %3030 = vmatprep.subr.mxu0 0.0
    %3031 = vmatpush1.msra.mxu0 0.0
    %3032 = vmatprep.subr.mxu0 0.0
    %3033 = vmatpush1.msra.mxu0 0.0
    %3034 = vmatprep.subr.mxu0 0.0
    %3035 = vmatpush1.msra.mxu0 0.0
    %3036 = vmatprep.subr.mxu0 0.0
    %3037 = vmatpush1.msra.mxu0 0.0
    %3038 = vmatprep.subr.mxu0 0.0
    %3039 = vmatpush1.msra.mxu0 0.0
    %3040 = vmatprep.subr.mxu0 0.0
    %3041 = vmatpush1.msra.mxu0 0.0
    %3042 = vmatprep.subr.mxu0 0.0
    %3043 = vmatpush1.msra.mxu0 0.0
    %3044 = vmatprep.subr.mxu0 0.0
    %3045 = vmatpush1.msra.mxu0 0.0
    %3046 = vmatprep.subr.mxu0 0.0
    %3047 = vmatpush1.msra.mxu0 0.0
    %3048 = vmatprep.subr.mxu0 0.0
    %3049 = vmatpush1.msra.mxu0 0.0
    %3050 = vmatprep.subr.mxu0 0.0
    %3051 = vmatpush1.msra.mxu0 0.0
    %3052 = vmatprep.subr.mxu0 0.0
    %3053 = vmatpush1.msra.mxu0 0.0
    %3054 = vmatprep.subr.mxu0 0.0
    %3055 = vmatpush1.msra.mxu0 0.0
    %3056 = vmatprep.subr.mxu0 0.0
    %3057 = vmatpush1.msra.mxu0 0.0
    %3058 = vmatprep.subr.mxu0 0.0
    %3059 = vmatpush1.msra.mxu0 0.0
    %3060 = vmatprep.subr.mxu0 0.0
    %3061 = vmatpush1.msra.mxu0 0.0
    %3062 = vmatprep.subr.mxu0 0.0
    %3063 = vmatpush1.msra.mxu0 0.0
    %3064 = vmatprep.subr.mxu0 0.0
    %3065 = vmatpush1.msra.mxu0 0.0
    %3066 = vmatprep.mubr.f32.mxu0 0.0
    %v3067 = vand.u32 %v2773, 4294901760
    %v3068 = vsub.f32 %v2773, %v3067
    %v3069 = vand.u32 %v3068, 4294901760
    %3070 = vmatmul.mubr.f32.gmra.mrb[0].mxu0 %v3069
    %v3071 = vpop.f32.mrb[0].mxu0
    %v3072 = vadd.f32 %v2998, %v3071
    %v3073 = vpop.f32.mrb[0].mxu0
    %3074 = vdwg.mxu0
    %3075 = vmatprep.subr.mxu0 0.0
    %v3076 = vand.u32 %v2770, 4294901760
    %v3077 = vsub.f32 %v2770, %v3076
    %v3078 = vand.u32 %v3077, 4294901760
    %3079 = vmatpush1.msra.mxu0 %v3078
    %3080 = vmatprep.subr.mxu0 0.0
    %3081 = vmatpush1.msra.mxu0 0.0
    %3082 = vmatprep.subr.mxu0 0.0
    %3083 = vmatpush1.msra.mxu0 0.0
    %3084 = vmatprep.subr.mxu0 0.0
    %3085 = vmatpush1.msra.mxu0 0.0
    %3086 = vmatprep.subr.mxu0 0.0
    %3087 = vmatpush1.msra.mxu0 0.0
    %3088 = vmatprep.subr.mxu0 0.0
    %3089 = vmatpush1.msra.mxu0 0.0
    %3090 = vmatprep.subr.mxu0 0.0
    %3091 = vmatpush1.msra.mxu0 0.0
    %3092 = vmatprep.subr.mxu0 0.0
    %3093 = vmatpush1.msra.mxu0 0.0
    %3094 = vmatprep.subr.mxu0 0.0
    %3095 = vmatpush1.msra.mxu0 0.0
    %3096 = vmatprep.subr.mxu0 0.0
    %3097 = vmatpush1.msra.mxu0 0.0
    %3098 = vmatprep.subr.mxu0 0.0
    %3099 = vmatpush1.msra.mxu0 0.0
    %3100 = vmatprep.subr.mxu0 0.0
    %3101 = vmatpush1.msra.mxu0 0.0
    %3102 = vmatprep.subr.mxu0 0.0
    %3103 = vmatpush1.msra.mxu0 0.0
    %3104 = vmatprep.subr.mxu0 0.0
    %3105 = vmatpush1.msra.mxu0 0.0
    %3106 = vmatprep.subr.mxu0 0.0
    %3107 = vmatpush1.msra.mxu0 0.0
    %3108 = vmatprep.subr.mxu0 0.0
    %3109 = vmatpush1.msra.mxu0 0.0
    %3110 = vmatprep.subr.mxu0 0.0
    %3111 = vmatpush1.msra.mxu0 0.0
    %3112 = vmatprep.subr.mxu0 0.0
    %3113 = vmatpush1.msra.mxu0 0.0
    %3114 = vmatprep.subr.mxu0 0.0
    %3115 = vmatpush1.msra.mxu0 0.0
    %3116 = vmatprep.subr.mxu0 0.0
    %3117 = vmatpush1.msra.mxu0 0.0
    %3118 = vmatprep.subr.mxu0 0.0
    %3119 = vmatpush1.msra.mxu0 0.0
    %3120 = vmatprep.subr.mxu0 0.0
    %3121 = vmatpush1.msra.mxu0 0.0
    %3122 = vmatprep.subr.mxu0 0.0
    %3123 = vmatpush1.msra.mxu0 0.0
    %3124 = vmatprep.subr.mxu0 0.0
    %3125 = vmatpush1.msra.mxu0 0.0
    %3126 = vmatprep.subr.mxu0 0.0
    %3127 = vmatpush1.msra.mxu0 0.0
    %3128 = vmatprep.subr.mxu0 0.0
    %3129 = vmatpush1.msra.mxu0 0.0
    %3130 = vmatprep.subr.mxu0 0.0
    %3131 = vmatpush1.msra.mxu0 0.0
    %3132 = vmatprep.subr.mxu0 0.0
    %3133 = vmatpush1.msra.mxu0 0.0
    %3134 = vmatprep.subr.mxu0 0.0
    %3135 = vmatpush1.msra.mxu0 0.0
    %3136 = vmatprep.subr.mxu0 0.0
    %3137 = vmatpush1.msra.mxu0 0.0
    %3138 = vmatprep.subr.mxu0 0.0
    %3139 = vmatpush1.msra.mxu0 0.0
    %3140 = vmatprep.subr.mxu0 0.0
    %3141 = vmatpush1.msra.mxu0 0.0
    %3142 = vmatprep.mubr.f32.mxu0 0.0
    %v3143 = vand.u32 %v2773, 4294901760
    %3144 = vmatmul.mubr.f32.gmra.mrb[0].mxu0 %v3143
    %v3145 = vpop.f32.mrb[0].mxu0
    %v3146 = vadd.f32 %v3072, %v3145
    %v3147 = vpop.f32.mrb[0].mxu0
    %3148 = vdwg.mxu0
    %3149 = vmatprep.subr.mxu0 0.0
    %v3150 = vand.u32 %v2770, 4294901760
    %3151 = vmatpush1.msra.mxu0 %v3150
    %3152 = vmatprep.subr.mxu0 0.0
    %3153 = vmatpush1.msra.mxu0 0.0
    %3154 = vmatprep.subr.mxu0 0.0
    %3155 = vmatpush1.msra.mxu0 0.0
    %3156 = vmatprep.subr.mxu0 0.0
    %3157 = vmatpush1.msra.mxu0 0.0
    %3158 = vmatprep.subr.mxu0 0.0
    %3159 = vmatpush1.msra.mxu0 0.0
    %3160 = vmatprep.subr.mxu0 0.0
    %3161 = vmatpush1.msra.mxu0 0.0
    %3162 = vmatprep.subr.mxu0 0.0
    %3163 = vmatpush1.msra.mxu0 0.0
    %3164 = vmatprep.subr.mxu0 0.0
    %3165 = vmatpush1.msra.mxu0 0.0
    %3166 = vmatprep.subr.mxu0 0.0
    %3167 = vmatpush1.msra.mxu0 0.0
    %3168 = vmatprep.subr.mxu0 0.0
    %3169 = vmatpush1.msra.mxu0 0.0
    %3170 = vmatprep.subr.mxu0 0.0
    %3171 = vmatpush1.msra.mxu0 0.0
    %3172 = vmatprep.subr.mxu0 0.0
    %3173 = vmatpush1.msra.mxu0 0.0
    %3174 = vmatprep.subr.mxu0 0.0
    %3175 = vmatpush1.msra.mxu0 0.0
    %3176 = vmatprep.subr.mxu0 0.0
    %3177 = vmatpush1.msra.mxu0 0.0
    %3178 = vmatprep.subr.mxu0 0.0
    %3179 = vmatpush1.msra.mxu0 0.0
    %3180 = vmatprep.subr.mxu0 0.0
    %3181 = vmatpush1.msra.mxu0 0.0
    %3182 = vmatprep.subr.mxu0 0.0
    %3183 = vmatpush1.msra.mxu0 0.0
    %3184 = vmatprep.subr.mxu0 0.0
    %3185 = vmatpush1.msra.mxu0 0.0
    %3186 = vmatprep.subr.mxu0 0.0
    %3187 = vmatpush1.msra.mxu0 0.0
    %3188 = vmatprep.subr.mxu0 0.0
    %3189 = vmatpush1.msra.mxu0 0.0
    %3190 = vmatprep.subr.mxu0 0.0
    %3191 = vmatpush1.msra.mxu0 0.0
    %3192 = vmatprep.subr.mxu0 0.0
    %3193 = vmatpush1.msra.mxu0 0.0
    %3194 = vmatprep.subr.mxu0 0.0
    %3195 = vmatpush1.msra.mxu0 0.0
    %3196 = vmatprep.subr.mxu0 0.0
    %3197 = vmatpush1.msra.mxu0 0.0
    %3198 = vmatprep.subr.mxu0 0.0
    %3199 = vmatpush1.msra.mxu0 0.0
    %3200 = vmatprep.subr.mxu0 0.0
    %3201 = vmatpush1.msra.mxu0 0.0
    %3202 = vmatprep.subr.mxu0 0.0
    %3203 = vmatpush1.msra.mxu0 0.0
    %3204 = vmatprep.subr.mxu0 0.0
    %3205 = vmatpush1.msra.mxu0 0.0
    %3206 = vmatprep.subr.mxu0 0.0
    %3207 = vmatpush1.msra.mxu0 0.0
    %3208 = vmatprep.subr.mxu0 0.0
    %3209 = vmatpush1.msra.mxu0 0.0
    %3210 = vmatprep.subr.mxu0 0.0
    %3211 = vmatpush1.msra.mxu0 0.0
    %3212 = vmatprep.subr.mxu0 0.0
    %3213 = vmatpush1.msra.mxu0 0.0
    %3214 = vmatprep.mubr.f32.mxu0 0.0
    %v3215 = vand.u32 %v2773, 4294901760
    %3216 = vmatmul.mubr.f32.gmra.mrb[0].mxu0 %v3215
    %v3217 = vpop.f32.mrb[0].mxu0
    %v3218 = vadd.f32 %v3146, %v3217
    %v3219 = vpop.f32.mrb[0].mxu0
    %3220 = vdwg.mxu0
    %v3221 = vxor.u32 %v3218, 2147483648
    %v3222 = vmul.f32 %v3221, 1.442695
    %v3223 = vpow.pop %v3222
    %v3224 = vadd.f32 %v3223, 1.0
    %v3225 = vrcp.pop %v3224
    %v3226 = vmul.f32 1.0, %v3225
    %3227 = vst.msk [vmem:[#allocation4] sm:$0xff] %vm925, %v3226
    %v3228 = vld [vmem:[%s2] sm:$0xff]
    %v3229 = vld [vmem:[%s2 + $0x8] sm:$0xff]
    %v3230 = vld [vmem:[%s2 + $0x10] sm:$0xff]
    %v3231 = vld [vmem:[%s2 + $0x18] sm:$0xff]
    %v3233 = vsel %vm925, %v3226, 0
    %v3235 = vand.u32 %v3229, 4294901760
    %3236 = vmatprep.subr.mxu0 %v3235
    %v3237 = vand.u32 %v3228, 4294901760
    %3238 = vmatpush1.msra.mxu0 %v3237
    %v3239 = vand.u32 %v3231, 4294901760
    %3240 = vmatprep.subr.mxu0 %v3239
    %v3241 = vand.u32 %v3230, 4294901760
    %3242 = vmatpush1.msra.mxu0 %v3241
    %3243 = vmatprep.subr.mxu0 0.0
    %3244 = vmatpush1.msra.mxu0 0.0
    %3245 = vmatprep.subr.mxu0 0.0
    %3246 = vmatpush1.msra.mxu0 0.0
    %3247 = vmatprep.subr.mxu0 0.0
    %3248 = vmatpush1.msra.mxu0 0.0
    %3249 = vmatprep.subr.mxu0 0.0
    %3250 = vmatpush1.msra.mxu0 0.0
    %3251 = vmatprep.subr.mxu0 0.0
    %3252 = vmatpush1.msra.mxu0 0.0
    %3253 = vmatprep.subr.mxu0 0.0
    %3254 = vmatpush1.msra.mxu0 0.0
    %3255 = vmatprep.subr.mxu0 0.0
    %3256 = vmatpush1.msra.mxu0 0.0
    %3257 = vmatprep.subr.mxu0 0.0
    %3258 = vmatpush1.msra.mxu0 0.0
    %3259 = vmatprep.subr.mxu0 0.0
    %3260 = vmatpush1.msra.mxu0 0.0
    %3261 = vmatprep.subr.mxu0 0.0
    %3262 = vmatpush1.msra.mxu0 0.0
    %3263 = vmatprep.subr.mxu0 0.0
    %3264 = vmatpush1.msra.mxu0 0.0
    %3265 = vmatprep.subr.mxu0 0.0
    %3266 = vmatpush1.msra.mxu0 0.0
    %3267 = vmatprep.subr.mxu0 0.0
    %3268 = vmatpush1.msra.mxu0 0.0
    %3269 = vmatprep.subr.mxu0 0.0
    %3270 = vmatpush1.msra.mxu0 0.0
    %3271 = vmatprep.subr.mxu0 0.0
    %3272 = vmatpush1.msra.mxu0 0.0
    %3273 = vmatprep.subr.mxu0 0.0
    %3274 = vmatpush1.msra.mxu0 0.0
    %3275 = vmatprep.subr.mxu0 0.0
    %3276 = vmatpush1.msra.mxu0 0.0
    %3277 = vmatprep.subr.mxu0 0.0
    %3278 = vmatpush1.msra.mxu0 0.0
    %3279 = vmatprep.subr.mxu0 0.0
    %3280 = vmatpush1.msra.mxu0 0.0
    %3281 = vmatprep.subr.mxu0 0.0
    %3282 = vmatpush1.msra.mxu0 0.0
    %3283 = vmatprep.subr.mxu0 0.0
    %3284 = vmatpush1.msra.mxu0 0.0
    %3285 = vmatprep.subr.mxu0 0.0
    %3286 = vmatpush1.msra.mxu0 0.0
    %3287 = vmatprep.subr.mxu0 0.0
    %3288 = vmatpush1.msra.mxu0 0.0
    %3289 = vmatprep.subr.mxu0 0.0
    %3290 = vmatpush1.msra.mxu0 0.0
    %3291 = vmatprep.subr.mxu0 0.0
    %3292 = vmatpush1.msra.mxu0 0.0
    %3293 = vmatprep.subr.mxu0 0.0
    %3294 = vmatpush1.msra.mxu0 0.0
    %3295 = vmatprep.subr.mxu0 0.0
    %3296 = vmatpush1.msra.mxu0 0.0
    %3297 = vmatprep.subr.mxu0 0.0
    %3298 = vmatpush1.msra.mxu0 0.0
    %3299 = vmatprep.subr.mxu0 0.0
    %3300 = vmatpush1.msra.mxu0 0.0
    %3301 = vmatprep.subr.mxu0 0.0
    %3302 = vmatpush1.msra.mxu0 0.0
    %3303 = vmatprep.mubr.f32.mxu0 0.0
    %v3304 = vand.u32 %v3233, 4294901760
    %v3305 = vsub.f32 %v3233, %v3304
    %v3306 = vand.u32 %v3305, 4294901760
    %v3307 = vsub.f32 %v3305, %v3306
    %v3308 = vand.u32 %v3307, 4294901760
    %3309 = vmatmul.mubr.f32.gmra.mrb[0].mxu0 %v3308
    %v3310 = vpop.f32.mrb[0].mxu0
    %v3311 = vadd.f32 0.0, %v3310
    %v3312 = vpop.f32.mrb[0].mxu0
    %v3313 = vadd.f32 0.0, %v3312
    %3314 = vdwg.mxu0
    %v3315 = vand.u32 %v3229, 4294901760
    %v3316 = vsub.f32 %v3229, %v3315
    %v3317 = vand.u32 %v3316, 4294901760
    %v3318 = vsub.f32 %v3316, %v3317
    %v3319 = vand.u32 %v3318, 4294901760
    %3320 = vmatprep.subr.mxu0 %v3319
    %v3321 = vand.u32 %v3228, 4294901760
    %v3322 = vsub.f32 %v3228, %v3321
    %v3323 = vand.u32 %v3322, 4294901760
    %v3324 = vsub.f32 %v3322, %v3323
    %v3325 = vand.u32 %v3324, 4294901760
    %3326 = vmatpush1.msra.mxu0 %v3325
    %v3327 = vand.u32 %v3231, 4294901760
    %v3328 = vsub.f32 %v3231, %v3327
    %v3329 = vand.u32 %v3328, 4294901760
    %v3330 = vsub.f32 %v3328, %v3329
    %v3331 = vand.u32 %v3330, 4294901760
    %3332 = vmatprep.subr.mxu0 %v3331
    %v3333 = vand.u32 %v3230, 4294901760
    %v3334 = vsub.f32 %v3230, %v3333
    %v3335 = vand.u32 %v3334, 4294901760
    %v3336 = vsub.f32 %v3334, %v3335
    %v3337 = vand.u32 %v3336, 4294901760
    %3338 = vmatpush1.msra.mxu0 %v3337
    %3339 = vmatprep.subr.mxu0 0.0
    %3340 = vmatpush1.msra.mxu0 0.0
    %3341 = vmatprep.subr.mxu0 0.0
    %3342 = vmatpush1.msra.mxu0 0.0
    %3343 = vmatprep.subr.mxu0 0.0
    %3344 = vmatpush1.msra.mxu0 0.0
    %3345 = vmatprep.subr.mxu0 0.0
    %3346 = vmatpush1.msra.mxu0 0.0
    %3347 = vmatprep.subr.mxu0 0.0
    %3348 = vmatpush1.msra.mxu0 0.0
    %3349 = vmatprep.subr.mxu0 0.0
    %3350 = vmatpush1.msra.mxu0 0.0
    %3351 = vmatprep.subr.mxu0 0.0
    %3352 = vmatpush1.msra.mxu0 0.0
    %3353 = vmatprep.subr.mxu0 0.0
    %3354 = vmatpush1.msra.mxu0 0.0
    %3355 = vmatprep.subr.mxu0 0.0
    %3356 = vmatpush1.msra.mxu0 0.0
    %3357 = vmatprep.subr.mxu0 0.0
    %3358 = vmatpush1.msra.mxu0 0.0
    %3359 = vmatprep.subr.mxu0 0.0
    %3360 = vmatpush1.msra.mxu0 0.0
    %3361 = vmatprep.subr.mxu0 0.0
    %3362 = vmatpush1.msra.mxu0 0.0
    %3363 = vmatprep.subr.mxu0 0.0
    %3364 = vmatpush1.msra.mxu0 0.0
    %3365 = vmatprep.subr.mxu0 0.0
    %3366 = vmatpush1.msra.mxu0 0.0
    %3367 = vmatprep.subr.mxu0 0.0
    %3368 = vmatpush1.msra.mxu0 0.0
    %3369 = vmatprep.subr.mxu0 0.0
    %3370 = vmatpush1.msra.mxu0 0.0
    %3371 = vmatprep.subr.mxu0 0.0
    %3372 = vmatpush1.msra.mxu0 0.0
    %3373 = vmatprep.subr.mxu0 0.0
    %3374 = vmatpush1.msra.mxu0 0.0
    %3375 = vmatprep.subr.mxu0 0.0
    %3376 = vmatpush1.msra.mxu0 0.0
    %3377 = vmatprep.subr.mxu0 0.0
    %3378 = vmatpush1.msra.mxu0 0.0
    %3379 = vmatprep.subr.mxu0 0.0
    %3380 = vmatpush1.msra.mxu0 0.0
    %3381 = vmatprep.subr.mxu0 0.0
    %3382 = vmatpush1.msra.mxu0 0.0
    %3383 = vmatprep.subr.mxu0 0.0
    %3384 = vmatpush1.msra.mxu0 0.0
    %3385 = vmatprep.subr.mxu0 0.0
    %3386 = vmatpush1.msra.mxu0 0.0
    %3387 = vmatprep.subr.mxu0 0.0
    %3388 = vmatpush1.msra.mxu0 0.0
    %3389 = vmatprep.subr.mxu0 0.0
    %3390 = vmatpush1.msra.mxu0 0.0
    %3391 = vmatprep.subr.mxu0 0.0
    %3392 = vmatpush1.msra.mxu0 0.0
    %3393 = vmatprep.subr.mxu0 0.0
    %3394 = vmatpush1.msra.mxu0 0.0
    %3395 = vmatprep.subr.mxu0 0.0
    %3396 = vmatpush1.msra.mxu0 0.0
    %3397 = vmatprep.subr.mxu0 0.0
    %3398 = vmatpush1.msra.mxu0 0.0
    %3399 = vmatprep.mubr.f32.mxu0 0.0
    %v3400 = vand.u32 %v3233, 4294901760
    %3401 = vmatmul.mubr.f32.gmra.mrb[0].mxu0 %v3400
    %v3402 = vpop.f32.mrb[0].mxu0
    %v3403 = vadd.f32 %v3311, %v3402
    %v3404 = vpop.f32.mrb[0].mxu0
    %v3405 = vadd.f32 %v3313, %v3404
    %3406 = vdwg.mxu0
    %v3407 = vand.u32 %v3229, 4294901760
    %v3408 = vsub.f32 %v3229, %v3407
    %3409 = vmatprep.subr.mxu0 %v3408
    %v3410 = vand.u32 %v3228, 4294901760
    %v3411 = vsub.f32 %v3228, %v3410
    %3412 = vmatpush1.msra.mxu0 %v3411
    %v3413 = vand.u32 %v3231, 4294901760
    %v3414 = vsub.f32 %v3231, %v3413
    %3415 = vmatprep.subr.mxu0 %v3414
    %v3416 = vand.u32 %v3230, 4294901760
    %v3417 = vsub.f32 %v3230, %v3416
    %3418 = vmatpush1.msra.mxu0 %v3417
    %3419 = vmatprep.subr.mxu0 0.0
    %3420 = vmatpush1.msra.mxu0 0.0
    %3421 = vmatprep.subr.mxu0 0.0
    %3422 = vmatpush1.msra.mxu0 0.0
    %3423 = vmatprep.subr.mxu0 0.0
    %3424 = vmatpush1.msra.mxu0 0.0
    %3425 = vmatprep.subr.mxu0 0.0
    %3426 = vmatpush1.msra.mxu0 0.0
    %3427 = vmatprep.subr.mxu0 0.0
    %3428 = vmatpush1.msra.mxu0 0.0
    %3429 = vmatprep.subr.mxu0 0.0
    %3430 = vmatpush1.msra.mxu0 0.0
    %3431 = vmatprep.subr.mxu0 0.0
    %3432 = vmatpush1.msra.mxu0 0.0
    %3433 = vmatprep.subr.mxu0 0.0
    %3434 = vmatpush1.msra.mxu0 0.0
    %3435 = vmatprep.subr.mxu0 0.0
    %3436 = vmatpush1.msra.mxu0 0.0
    %3437 = vmatprep.subr.mxu0 0.0
    %3438 = vmatpush1.msra.mxu0 0.0
    %3439 = vmatprep.subr.mxu0 0.0
    %3440 = vmatpush1.msra.mxu0 0.0
    %3441 = vmatprep.subr.mxu0 0.0
    %3442 = vmatpush1.msra.mxu0 0.0
    %3443 = vmatprep.subr.mxu0 0.0
    %3444 = vmatpush1.msra.mxu0 0.0
    %3445 = vmatprep.subr.mxu0 0.0
    %3446 = vmatpush1.msra.mxu0 0.0
    %3447 = vmatprep.subr.mxu0 0.0
    %3448 = vmatpush1.msra.mxu0 0.0
    %3449 = vmatprep.subr.mxu0 0.0
    %3450 = vmatpush1.msra.mxu0 0.0
    %3451 = vmatprep.subr.mxu0 0.0
    %3452 = vmatpush1.msra.mxu0 0.0
    %3453 = vmatprep.subr.mxu0 0.0
    %3454 = vmatpush1.msra.mxu0 0.0
    %3455 = vmatprep.subr.mxu0 0.0
    %3456 = vmatpush1.msra.mxu0 0.0
    %3457 = vmatprep.subr.mxu0 0.0
    %3458 = vmatpush1.msra.mxu0 0.0
    %3459 = vmatprep.subr.mxu0 0.0
    %3460 = vmatpush1.msra.mxu0 0.0
    %3461 = vmatprep.subr.mxu0 0.0
    %3462 = vmatpush1.msra.mxu0 0.0
    %3463 = vmatprep.subr.mxu0 0.0
    %3464 = vmatpush1.msra.mxu0 0.0
    %3465 = vmatprep.subr.mxu0 0.0
    %3466 = vmatpush1.msra.mxu0 0.0
    %3467 = vmatprep.subr.mxu0 0.0
    %3468 = vmatpush1.msra.mxu0 0.0
    %3469 = vmatprep.subr.mxu0 0.0
    %3470 = vmatpush1.msra.mxu0 0.0
    %3471 = vmatprep.subr.mxu0 0.0
    %3472 = vmatpush1.msra.mxu0 0.0
    %3473 = vmatprep.subr.mxu0 0.0
    %3474 = vmatpush1.msra.mxu0 0.0
    %3475 = vmatprep.subr.mxu0 0.0
    %3476 = vmatpush1.msra.mxu0 0.0
    %3477 = vmatprep.subr.mxu0 0.0
    %3478 = vmatpush1.msra.mxu0 0.0
    %3479 = vmatprep.mubr.f32.mxu0 0.0
    %v3480 = vand.u32 %v3233, 4294901760
    %v3481 = vsub.f32 %v3233, %v3480
    %3482 = vmatmul.mubr.f32.gmra.mrb[0].mxu0 %v3481
    %v3483 = vpop.f32.mrb[0].mxu0
    %v3484 = vadd.f32 %v3403, %v3483
    %v3485 = vpop.f32.mrb[0].mxu0
    %v3486 = vadd.f32 %v3405, %v3485
    %3487 = vdwg.mxu0
    %v3488 = vand.u32 %v3229, 4294901760
    %3489 = vmatprep.subr.mxu0 %v3488
    %v3490 = vand.u32 %v3228, 4294901760
    %3491 = vmatpush1.msra.mxu0 %v3490
    %v3492 = vand.u32 %v3231, 4294901760
    %3493 = vmatprep.subr.mxu0 %v3492
    %v3494 = vand.u32 %v3230, 4294901760
    %3495 = vmatpush1.msra.mxu0 %v3494
    %3496 = vmatprep.subr.mxu0 0.0
    %3497 = vmatpush1.msra.mxu0 0.0
    %3498 = vmatprep.subr.mxu0 0.0
    %3499 = vmatpush1.msra.mxu0 0.0
    %3500 = vmatprep.subr.mxu0 0.0
    %3501 = vmatpush1.msra.mxu0 0.0
    %3502 = vmatprep.subr.mxu0 0.0
    %3503 = vmatpush1.msra.mxu0 0.0
    %3504 = vmatprep.subr.mxu0 0.0
    %3505 = vmatpush1.msra.mxu0 0.0
    %3506 = vmatprep.subr.mxu0 0.0
    %3507 = vmatpush1.msra.mxu0 0.0
    %3508 = vmatprep.subr.mxu0 0.0
    %3509 = vmatpush1.msra.mxu0 0.0
    %3510 = vmatprep.subr.mxu0 0.0
    %3511 = vmatpush1.msra.mxu0 0.0
    %3512 = vmatprep.subr.mxu0 0.0
    %3513 = vmatpush1.msra.mxu0 0.0
    %3514 = vmatprep.subr.mxu0 0.0
    %3515 = vmatpush1.msra.mxu0 0.0
    %3516 = vmatprep.subr.mxu0 0.0
    %3517 = vmatpush1.msra.mxu0 0.0
    %3518 = vmatprep.subr.mxu0 0.0
    %3519 = vmatpush1.msra.mxu0 0.0
    %3520 = vmatprep.subr.mxu0 0.0
    %3521 = vmatpush1.msra.mxu0 0.0
    %3522 = vmatprep.subr.mxu0 0.0
    %3523 = vmatpush1.msra.mxu0 0.0
    %3524 = vmatprep.subr.mxu0 0.0
    %3525 = vmatpush1.msra.mxu0 0.0
    %3526 = vmatprep.subr.mxu0 0.0
    %3527 = vmatpush1.msra.mxu0 0.0
    %3528 = vmatprep.subr.mxu0 0.0
    %3529 = vmatpush1.msra.mxu0 0.0
    %3530 = vmatprep.subr.mxu0 0.0
    %3531 = vmatpush1.msra.mxu0 0.0
    %3532 = vmatprep.subr.mxu0 0.0
    %3533 = vmatpush1.msra.mxu0 0.0
    %3534 = vmatprep.subr.mxu0 0.0
    %3535 = vmatpush1.msra.mxu0 0.0
    %3536 = vmatprep.subr.mxu0 0.0
    %3537 = vmatpush1.msra.mxu0 0.0
    %3538 = vmatprep.subr.mxu0 0.0
    %3539 = vmatpush1.msra.mxu0 0.0
    %3540 = vmatprep.subr.mxu0 0.0
    %3541 = vmatpush1.msra.mxu0 0.0
    %3542 = vmatprep.subr.mxu0 0.0
    %3543 = vmatpush1.msra.mxu0 0.0
    %3544 = vmatprep.subr.mxu0 0.0
    %3545 = vmatpush1.msra.mxu0 0.0
    %3546 = vmatprep.subr.mxu0 0.0
    %3547 = vmatpush1.msra.mxu0 0.0
    %3548 = vmatprep.subr.mxu0 0.0
    %3549 = vmatpush1.msra.mxu0 0.0
    %3550 = vmatprep.subr.mxu0 0.0
    %3551 = vmatpush1.msra.mxu0 0.0
    %3552 = vmatprep.subr.mxu0 0.0
    %3553 = vmatpush1.msra.mxu0 0.0
    %3554 = vmatprep.subr.mxu0 0.0
    %3555 = vmatpush1.msra.mxu0 0.0
    %3556 = vmatprep.mubr.f32.mxu0 0.0
    %v3557 = vand.u32 %v3233, 4294901760
    %v3558 = vsub.f32 %v3233, %v3557
    %v3559 = vand.u32 %v3558, 4294901760
    %3560 = vmatmul.mubr.f32.gmra.mrb[0].mxu0 %v3559
    %v3561 = vpop.f32.mrb[0].mxu0
    %v3562 = vadd.f32 %v3484, %v3561
    %v3563 = vpop.f32.mrb[0].mxu0
    %v3564 = vadd.f32 %v3486, %v3563
    %3565 = vdwg.mxu0
    %v3566 = vand.u32 %v3229, 4294901760
    %v3567 = vsub.f32 %v3229, %v3566
    %v3568 = vand.u32 %v3567, 4294901760
    %3569 = vmatprep.subr.mxu0 %v3568
    %v3570 = vand.u32 %v3228, 4294901760
    %v3571 = vsub.f32 %v3228, %v3570
    %v3572 = vand.u32 %v3571, 4294901760
    %3573 = vmatpush1.msra.mxu0 %v3572
    %v3574 = vand.u32 %v3231, 4294901760
    %v3575 = vsub.f32 %v3231, %v3574
    %v3576 = vand.u32 %v3575, 4294901760
    %3577 = vmatprep.subr.mxu0 %v3576
    %v3578 = vand.u32 %v3230, 4294901760
    %v3579 = vsub.f32 %v3230, %v3578
    %v3580 = vand.u32 %v3579, 4294901760
    %3581 = vmatpush1.msra.mxu0 %v3580
    %3582 = vmatprep.subr.mxu0 0.0
    %3583 = vmatpush1.msra.mxu0 0.0
    %3584 = vmatprep.subr.mxu0 0.0
    %3585 = vmatpush1.msra.mxu0 0.0
    %3586 = vmatprep.subr.mxu0 0.0
    %3587 = vmatpush1.msra.mxu0 0.0
    %3588 = vmatprep.subr.mxu0 0.0
    %3589 = vmatpush1.msra.mxu0 0.0
    %3590 = vmatprep.subr.mxu0 0.0
    %3591 = vmatpush1.msra.mxu0 0.0
    %3592 = vmatprep.subr.mxu0 0.0
    %3593 = vmatpush1.msra.mxu0 0.0
    %3594 = vmatprep.subr.mxu0 0.0
    %3595 = vmatpush1.msra.mxu0 0.0
    %3596 = vmatprep.subr.mxu0 0.0
    %3597 = vmatpush1.msra.mxu0 0.0
    %3598 = vmatprep.subr.mxu0 0.0
    %3599 = vmatpush1.msra.mxu0 0.0
    %3600 = vmatprep.subr.mxu0 0.0
    %3601 = vmatpush1.msra.mxu0 0.0
    %3602 = vmatprep.subr.mxu0 0.0
    %3603 = vmatpush1.msra.mxu0 0.0
    %3604 = vmatprep.subr.mxu0 0.0
    %3605 = vmatpush1.msra.mxu0 0.0
    %3606 = vmatprep.subr.mxu0 0.0
    %3607 = vmatpush1.msra.mxu0 0.0
    %3608 = vmatprep.subr.mxu0 0.0
    %3609 = vmatpush1.msra.mxu0 0.0
    %3610 = vmatprep.subr.mxu0 0.0
    %3611 = vmatpush1.msra.mxu0 0.0
    %3612 = vmatprep.subr.mxu0 0.0
    %3613 = vmatpush1.msra.mxu0 0.0
    %3614 = vmatprep.subr.mxu0 0.0
    %3615 = vmatpush1.msra.mxu0 0.0
    %3616 = vmatprep.subr.mxu0 0.0
    %3617 = vmatpush1.msra.mxu0 0.0
    %3618 = vmatprep.subr.mxu0 0.0
    %3619 = vmatpush1.msra.mxu0 0.0
    %3620 = vmatprep.subr.mxu0 0.0
    %3621 = vmatpush1.msra.mxu0 0.0
    %3622 = vmatprep.subr.mxu0 0.0
    %3623 = vmatpush1.msra.mxu0 0.0
    %3624 = vmatprep.subr.mxu0 0.0
    %3625 = vmatpush1.msra.mxu0 0.0
    %3626 = vmatprep.subr.mxu0 0.0
    %3627 = vmatpush1.msra.mxu0 0.0
    %3628 = vmatprep.subr.mxu0 0.0
    %3629 = vmatpush1.msra.mxu0 0.0
    %3630 = vmatprep.subr.mxu0 0.0
    %3631 = vmatpush1.msra.mxu0 0.0
    %3632 = vmatprep.subr.mxu0 0.0
    %3633 = vmatpush1.msra.mxu0 0.0
    %3634 = vmatprep.subr.mxu0 0.0
    %3635 = vmatpush1.msra.mxu0 0.0
    %3636 = vmatprep.subr.mxu0 0.0
    %3637 = vmatpush1.msra.mxu0 0.0
    %3638 = vmatprep.subr.mxu0 0.0
    %3639 = vmatpush1.msra.mxu0 0.0
    %3640 = vmatprep.subr.mxu0 0.0
    %3641 = vmatpush1.msra.mxu0 0.0
    %3642 = vmatprep.mubr.f32.mxu0 0.0
    %v3643 = vand.u32 %v3233, 4294901760
    %3644 = vmatmul.mubr.f32.gmra.mrb[0].mxu0 %v3643
    %v3645 = vpop.f32.mrb[0].mxu0
    %v3646 = vadd.f32 %v3562, %v3645
    %v3647 = vpop.f32.mrb[0].mxu0
    %v3648 = vadd.f32 %v3564, %v3647
    %3649 = vdwg.mxu0
    %v3650 = vand.u32 %v3229, 4294901760
    %3651 = vmatprep.subr.mxu0 %v3650
    %v3652 = vand.u32 %v3228, 4294901760
    %3653 = vmatpush1.msra.mxu0 %v3652
    %v3654 = vand.u32 %v3231, 4294901760
    %3655 = vmatprep.subr.mxu0 %v3654
    %v3656 = vand.u32 %v3230, 4294901760
    %3657 = vmatpush1.msra.mxu0 %v3656
    %3658 = vmatprep.subr.mxu0 0.0
    %3659 = vmatpush1.msra.mxu0 0.0
    %3660 = vmatprep.subr.mxu0 0.0
    %3661 = vmatpush1.msra.mxu0 0.0
    %3662 = vmatprep.subr.mxu0 0.0
    %3663 = vmatpush1.msra.mxu0 0.0
    %3664 = vmatprep.subr.mxu0 0.0
    %3665 = vmatpush1.msra.mxu0 0.0
    %3666 = vmatprep.subr.mxu0 0.0
    %3667 = vmatpush1.msra.mxu0 0.0
    %3668 = vmatprep.subr.mxu0 0.0
    %3669 = vmatpush1.msra.mxu0 0.0
    %3670 = vmatprep.subr.mxu0 0.0
    %3671 = vmatpush1.msra.mxu0 0.0
    %3672 = vmatprep.subr.mxu0 0.0
    %3673 = vmatpush1.msra.mxu0 0.0
    %3674 = vmatprep.subr.mxu0 0.0
    %3675 = vmatpush1.msra.mxu0 0.0
    %3676 = vmatprep.subr.mxu0 0.0
    %3677 = vmatpush1.msra.mxu0 0.0
    %3678 = vmatprep.subr.mxu0 0.0
    %3679 = vmatpush1.msra.mxu0 0.0
    %3680 = vmatprep.subr.mxu0 0.0
    %3681 = vmatpush1.msra.mxu0 0.0
    %3682 = vmatprep.subr.mxu0 0.0
    %3683 = vmatpush1.msra.mxu0 0.0
    %3684 = vmatprep.subr.mxu0 0.0
    %3685 = vmatpush1.msra.mxu0 0.0
    %3686 = vmatprep.subr.mxu0 0.0
    %3687 = vmatpush1.msra.mxu0 0.0
    %3688 = vmatprep.subr.mxu0 0.0
    %3689 = vmatpush1.msra.mxu0 0.0
    %3690 = vmatprep.subr.mxu0 0.0
    %3691 = vmatpush1.msra.mxu0 0.0
    %3692 = vmatprep.subr.mxu0 0.0
    %3693 = vmatpush1.msra.mxu0 0.0
    %3694 = vmatprep.subr.mxu0 0.0
    %3695 = vmatpush1.msra.mxu0 0.0
    %3696 = vmatprep.subr.mxu0 0.0
    %3697 = vmatpush1.msra.mxu0 0.0
    %3698 = vmatprep.subr.mxu0 0.0
    %3699 = vmatpush1.msra.mxu0 0.0
    %3700 = vmatprep.subr.mxu0 0.0
    %3701 = vmatpush1.msra.mxu0 0.0
    %3702 = vmatprep.subr.mxu0 0.0
    %3703 = vmatpush1.msra.mxu0 0.0
    %3704 = vmatprep.subr.mxu0 0.0
    %3705 = vmatpush1.msra.mxu0 0.0
    %3706 = vmatprep.subr.mxu0 0.0
    %3707 = vmatpush1.msra.mxu0 0.0
    %3708 = vmatprep.subr.mxu0 0.0
    %3709 = vmatpush1.msra.mxu0 0.0
    %3710 = vmatprep.subr.mxu0 0.0
    %3711 = vmatpush1.msra.mxu0 0.0
    %3712 = vmatprep.subr.mxu0 0.0
    %3713 = vmatpush1.msra.mxu0 0.0
    %3714 = vmatprep.subr.mxu0 0.0
    %3715 = vmatpush1.msra.mxu0 0.0
    %3716 = vmatprep.subr.mxu0 0.0
    %3717 = vmatpush1.msra.mxu0 0.0
    %3718 = vmatprep.mubr.f32.mxu0 0.0
    %v3719 = vand.u32 %v3233, 4294901760
    %3720 = vmatmul.mubr.f32.gmra.mrb[0].mxu0 %v3719
    %v3721 = vpop.f32.mrb[0].mxu0
    %v3722 = vadd.f32 %v3646, %v3721
    %v3723 = vpop.f32.mrb[0].mxu0
    %v3724 = vadd.f32 %v3648, %v3723
    %3725 = vdwg.mxu0
    %v3726 = vld [vmem:[%s0] sm:$0xff]
    %v3727 = vld [vmem:[%s0 + $0x8] sm:$0xff]
    %v3728 = vmul.f32 %v3726, %v3722
    %v3729 = vmul.f32 %v3727, %v3724
    %3730 = vst [vmem:[#allocation2] sm:$0xff] %v3728
    %3731 = vst [vmem:[#allocation2 + $0x8] sm:$0xff] %v3729
    // Predicated region
    $region22: #{tpu_custom_call.1} parent=1 // pred_check
      _
    $region23: #{tpu_custom_call.1} parent=1 // pred_check_branch
      %3733 = sbr.rel (0) target = $region25
    $region24: #{tpu_custom_call.1} parent=1 // pred_region
      %s3735 = ssub.s32 256, 256
      %3736 = vsyncadd [#allocation3], %s3735
      %s3738 = sshll.u32 [#allocation2], 4
      %s3739 = int_to_ptr.vmem [resolvable:$true] %s3738
      %3741 = dma.vmem_to_hbm [thread:$0]  %s3739, 256, %s5, [#allocation3]
    $region25: #{tpu_custom_call.1} parent=1 // pred_fallthru
      _
    // Predicated region
    $region26: #{tpu_custom_call.1} parent=1 // pred_check
      _
    $region27: #{tpu_custom_call.1} parent=1 // pred_check_branch
      %3743 = sbr.rel (0) target = $region29
    $region28: #{tpu_custom_call.1} parent=1 // pred_region
      %s3745 = ssub.s32 128, 128
      %3746 = vsyncadd [#allocation5], %s3745
      %s3748 = sshll.u32 [#allocation4], 4
      %s3749 = int_to_ptr.vmem [resolvable:$true] %s3748
      %3751 = dma.vmem_to_hbm [thread:$0]  %s3749, 128, %s6, [#allocation5]
    $region29: #{tpu_custom_call.1} parent=1 // pred_fallthru
      _
    // Predicated region
    $region30: #{tpu_custom_call.1} parent=1 // pred_check
      _
    $region31: #{tpu_custom_call.1} parent=1 // pred_check_branch
      %3753 = sbr.rel (0) target = $region33
    $region32: #{tpu_custom_call.1} parent=1 // pred_region
      %3754 = dma.done [#allocation3], 256
    $region33: #{tpu_custom_call.1} parent=1 // pred_fallthru
      _
    // Predicated region
    $region34: #{tpu_custom_call.1} parent=1 // pred_check
      _
    $region35: #{tpu_custom_call.1} parent=1 // pred_check_branch
      %3756 = sbr.rel (0) target = $region37
    $region36: #{tpu_custom_call.1} parent=1 // pred_region
      %3757 = dma.done [#allocation5], 128
    $region37: #{tpu_custom_call.1} parent=1 // pred_fallthru
      _
    %3758 = vsyncpa [#allocation3], 1
    %3759 = vsyncpa [#allocation5], 1

</llo_original>
